<compile_context>
chip_gen: v7x
topology: tpu7x:2x2x1
jax: 0.10.0
libtpu: 0.0.40
codegen_flags: <defaults>
</compile_context>

<pallas_src>
import math
from functools import partial

import jax
import jax.numpy as jnp
from jax.experimental import pallas as pl
from jax.experimental.pallas import tpu as pltpu

# ---------------- config (small, consistent with the module) ----------------
BATCH = 2
SEQ = 8
VOCAB = 64
HIDDEN = 32
NUM_HEADS = 4
HEAD_DIM = HIDDEN // NUM_HEADS
NUM_LAYERS = 2
INTER = 64
MAX_POS = 16
TYPE_VOCAB = 2
NUM_LABELS = 3
LN_EPS = 1e-12            # BERT LayerNorm eps
LANE_PAD = 128            # lane-dense logits slab; labels live in [:, :NUM_LABELS]
SUBLANE_PAD = 8           # sublane-dense logits slab (one (8,128) tile per batch)


# ---------------- in-kernel helpers ----------------
def _layer_norm(x, g, b):
    u = jnp.mean(x, axis=-1, keepdims=True)
    s = jnp.mean((x - u) * (x - u), axis=-1, keepdims=True)
    return (x - u) * jax.lax.rsqrt(s + LN_EPS) * g + b


def _gelu(x):
    # TODO(synk): BERT uses the exact erf-based GELU; tanh approximation is
    # used here (difference < 1e-3) to avoid relying on Mosaic erf lowering.
    c = math.sqrt(2.0 / math.pi)
    return 0.5 * x * (1.0 + jnp.tanh(c * (x + 0.044715 * x * x * x)))


# ---------------- the fused kernel (one grid step = one (batch, layer)) -----
def bert_fwd_kernel(emb_ref, kbias_ref,
                    wq_ref, bq_ref, wk_ref, bk_ref, wv_ref, bv_ref,
                    wo_ref, bo_ref, g1_ref, b1_ref,
                    wi_ref, bi_ref, wo2_ref, bo2_ref, g2_ref, b2_ref,
                    eg_ref, eb_ref, pw_ref, pb_ref, fw_ref, fb_ref,
                    out_ref, x_ref, *, num_heads):
    l = pl.program_id(1)
    last_layer = pl.num_programs(1) - 1

    # Layer 0 of each sequence: embedding LayerNorm initializes the hidden
    # state carried in VMEM scratch across the (arbitrary) layer axis.
    @pl.when(l == 0)
    def _():
        x_ref[...] = _layer_norm(emb_ref[...], eg_ref[...], eb_ref[...])

    x = x_ref[...]                              # (S, H) f32
    xb = x.astype(jnp.bfloat16)
    kbias = kbias_ref[0]                        # (1, S) additive key bias (padding)

    wq = wq_ref[0]; bq = bq_ref[0]              # (nH, H, hd) bf16 / (nH, 1, hd) f32
    wk = wk_ref[0]; bk = bk_ref[0]
    wv = wv_ref[0]; bv = bv_ref[0]
    wo = wo_ref[0]                              # (nH, hd, H) bf16

    # True per-head attention: every matmul contracts over head_dim only.
    # (num_heads is tiny; static unroll keeps all indices static.)
    attn = jnp.zeros(x.shape, jnp.float32)
    for n in range(num_heads):
        q = jnp.dot(xb, wq[n], preferred_element_type=jnp.float32) + bq[n]   # (S, hd)
        k = jnp.dot(xb, wk[n], preferred_element_type=jnp.float32) + bk[n]   # (S, hd)
        v = jnp.dot(xb, wv[n], preferred_element_type=jnp.float32) + bv[n]   # (S, hd)

        s = jnp.einsum('qd,kd->qk', q.astype(jnp.bfloat16), k.astype(jnp.bfloat16),
                       preferred_element_type=jnp.float32)                    # (S, S)
        s = s + kbias
        s = s - jnp.max(s, axis=-1, keepdims=True)
        p = jnp.exp(s)
        p = p * pl.reciprocal(jnp.sum(p, axis=-1, keepdims=True), approx=True)

        ctx = jnp.dot(p.astype(jnp.bfloat16), v.astype(jnp.bfloat16),
                      preferred_element_type=jnp.float32)                     # (S, hd)
        # Projecting each head and summing == projecting the concatenated heads.
        attn = attn + jnp.dot(ctx.astype(jnp.bfloat16), wo[n],
                              preferred_element_type=jnp.float32)             # (S, H)

    attn = attn + bo_ref[0]
    h1 = _layer_norm(attn + x, g1_ref[0], b1_ref[0])

    inter = _gelu(jnp.dot(h1.astype(jnp.bfloat16), wi_ref[0],
                          preferred_element_type=jnp.float32) + bi_ref[0])
    ffn = jnp.dot(inter.astype(jnp.bfloat16), wo2_ref[0],
                  preferred_element_type=jnp.float32) + bo2_ref[0]
    x_new = _layer_norm(ffn + h1, g2_ref[0], b2_ref[0])
    x_ref[...] = x_new

    # Last layer of this sequence: pooler ([CLS] row -> tanh(Linear)) and the
    # classifier, written as one lane-dense (8, 128) tile for this batch.
    @pl.when(l == last_layer)
    def _():
        cls = x_new[0:1, :]                                                   # (1, H)
        pooled = jnp.tanh(jnp.dot(cls.astype(jnp.bfloat16), pw_ref[...],
                                  preferred_element_type=jnp.float32) + pb_ref[...])
        logits = jnp.dot(pooled.astype(jnp.bfloat16), fw_ref[...],
                         preferred_element_type=jnp.float32) + fb_ref[...]    # (1, 128)
        out_ref[0] = jnp.broadcast_to(logits, (out_ref.shape[1], out_ref.shape[2]))


# ---------------- pallas_call wrapper ----------------
def bert_forward_fused(emb2d, key_bias, kp):
    kernel = partial(bert_fwd_kernel, num_heads=NUM_HEADS)

    # Per-layer weights: blocked over the layer grid axis (streamed / double-buffered).
    def layer4(d2, d3):
        return pl.BlockSpec((1, NUM_HEADS, d2, d3), lambda b, l: (l, 0, 0, 0))

    def layer3(d1, d2):
        return pl.BlockSpec((1, d1, d2), lambda b, l: (l, 0, 0))

    # Small global params: whole array, never re-fetched.
    def const2(shape):
        return pl.BlockSpec(shape, lambda b, l: (0, 0))

    in_specs = [
        pl.BlockSpec((SEQ, HIDDEN), lambda b, l: (b, 0)),      # embeddings of batch b
        pl.BlockSpec((1, 1, SEQ), lambda b, l: (b, 0, 0)),     # key bias of batch b
        layer4(HIDDEN, HEAD_DIM),   # wq
        layer4(1, HEAD_DIM),        # bq
        layer4(HIDDEN, HEAD_DIM),   # wk
        layer4(1, HEAD_DIM),        # bk
        layer4(HIDDEN, HEAD_DIM),   # wv
        layer4(1, HEAD_DIM),        # bv
        layer4(HEAD_DIM, HIDDEN),   # wo
        layer3(1, HIDDEN),          # bo
        layer3(1, HIDDEN),          # g1
        layer3(1, HIDDEN),          # b1
        layer3(HIDDEN, INTER),      # wi
        layer3(1, INTER),           # bi
        layer3(INTER, HIDDEN),      # wo2
        layer3(1, HIDDEN),          # bo2
        layer3(1, HIDDEN),          # g2
        layer3(1, HIDDEN),          # b2
        const2((1, HIDDEN)),        # emb LN gamma
        const2((1, HIDDEN)),        # emb LN beta
        const2((HIDDEN, HIDDEN)),   # pooler W
        const2((1, HIDDEN)),        # pooler b
        const2((HIDDEN, LANE_PAD)), # classifier W (lane-padded)
        const2((1, LANE_PAD)),      # classifier b (lane-padded)
    ]
    args = (emb2d, key_bias,
            kp["wq"], kp["bq"], kp["wk"], kp["bk"], kp["wv"], kp["bv"],
            kp["wo"], kp["bo"], kp["g1"], kp["b1"],
            kp["wi"], kp["bi"], kp["wo2"], kp["bo2"], kp["g2"], kp["b2"],
            kp["emb_ln_g"], kp["emb_ln_b"],
            kp["pool_w"], kp["pool_b"], kp["fc_w_pad"], kp["fc_b_pad"])

    return pl.pallas_call(
        kernel,
        out_shape=jax.ShapeDtypeStruct((BATCH, SUBLANE_PAD, LANE_PAD), jnp.float32),
        grid_spec=pltpu.PrefetchScalarGridSpec(
            num_scalar_prefetch=0,
            grid=(BATCH, NUM_LAYERS),
            in_specs=in_specs,
            out_specs=pl.BlockSpec((1, SUBLANE_PAD, LANE_PAD), lambda b, l: (b, 0, 0)),
            scratch_shapes=[pltpu.VMEM((SEQ, HIDDEN), jnp.float32)]),
        compiler_params=pltpu.CompilerParams(
            dimension_semantics=("parallel", "arbitrary")),
    )(*args)


# ---------------- model forward (mirrors Model.forward) ----------------
@jax.jit
def model_forward(kp, context, token_type_ids, attention_mask):
    B, S = context.shape
    # Embedding gathers are plain-JAX glue; everything after runs in the kernel.
    emb = (jnp.take(kp["word_emb"], context, axis=0)
           + kp["pos_emb"][:S][None, :, :]
           + jnp.take(kp["type_emb"], token_type_ids, axis=0))
    emb2d = emb.reshape(B * S, HIDDEN).astype(jnp.float32)

    # BERT extended attention mask: additive -10000 on padded keys, per batch.
    key_bias = ((1.0 - attention_mask.astype(jnp.float32)) * -10000.0).reshape(B, 1, S)

    out = bert_forward_fused(emb2d, key_bias, kp)       # (B, 8, 128)
    return out[:, 0, :NUM_LABELS]


# ---------------- deterministic parameter init (synthetic, no checkpoint) ---
def init_params(key):
    keys = iter(jax.random.split(key, 64))

    def w(shape):
        return (0.02 * jax.random.normal(next(keys), shape)).astype(jnp.float32)

    zeros = lambda s: jnp.zeros(s, jnp.float32)
    ones = lambda s: jnp.ones(s, jnp.float32)
    L, H, I = NUM_LAYERS, HIDDEN, INTER

    return {
        "word_emb": w((VOCAB, H)),
        "pos_emb": w((MAX_POS, H)),
        "type_emb": w((TYPE_VOCAB, H)),
        "emb_ln_g": ones((1, H)), "emb_ln_b": zeros((1, H)),
        # encoder layer weights stacked along a leading layer axis
        "wq": w((L, H, H)), "bq": zeros((L, 1, H)),
        "wk": w((L, H, H)), "bk": zeros((L, 1, H)),
        "wv": w((L, H, H)), "bv": zeros((L, 1, H)),
        "wo": w((L, H, H)), "bo": zeros((L, 1, H)),
        "g1": ones((L, 1, H)), "b1": zeros((L, 1, H)),
        "wi": w((L, H, I)), "bi": zeros((L, 1, I)),
        "wo2": w((L, I, H)), "bo2": zeros((L, 1, H)),
        "g2": ones((L, 1, H)), "b2": zeros((L, 1, H)),
        "pool_w": w((H, H)), "pool_b": zeros((1, H)),
        "fc_w": w((H, NUM_LABELS)), "fc_b": zeros((1, NUM_LABELS)),
    }


def prepare_params(p):
    """One-time kernel-facing parameter prep: per-head weight layouts, attention
    scale folded into Wq/bq, bf16 MXU weights, lane-padded classifier."""
    kp = dict(p)
    L, H, nH, hd = NUM_LAYERS, HIDDEN, NUM_HEADS, HEAD_DIM
    scale = 1.0 / math.sqrt(hd)

    def split_heads_w(w):   # (L, H, H) -> (L, nH, H, hd)
        return w.reshape(L, H, nH, hd).transpose(0, 2, 1, 3).astype(jnp.bfloat16)

    def split_heads_b(b):   # (L, 1, H) -> (L, nH, 1, hd), stays f32
        return b.reshape(L, nH, 1, hd)

    kp["wq"] = split_heads_w(p["wq"] * scale)
    kp["bq"] = split_heads_b(p["bq"] * scale)
    kp["wk"] = split_heads_w(p["wk"]); kp["bk"] = split_heads_b(p["bk"])
    kp["wv"] = split_heads_w(p["wv"]); kp["bv"] = split_heads_b(p["bv"])
    # Output projection stored per-head: (L, nH, hd, H).
    kp["wo"] = p["wo"].reshape(L, nH, hd, H).astype(jnp.bfloat16)
    kp["wi"] = p["wi"].astype(jnp.bfloat16)
    kp["wo2"] = p["wo2"].astype(jnp.bfloat16)
    kp["pool_w"] = p["pool_w"].astype(jnp.bfloat16)
    # Lane-dense classifier weights (padded to 128 output lanes).
    kp["fc_w_pad"] = jnp.zeros((H, LANE_PAD), jnp.bfloat16).at[:, :NUM_LABELS].set(
        p["fc_w"].astype(jnp.bfloat16))
    kp["fc_b_pad"] = jnp.zeros((1, LANE_PAD), jnp.float32).at[:, :NUM_LABELS].set(p["fc_b"])
    return kp


if __name__ == "__main__":
    key = jax.random.PRNGKey(0)
    pkey, ikey = jax.random.split(key)
    params = prepare_params(init_params(pkey))

    context = jax.random.randint(ikey, (BATCH, SEQ), 0, VOCAB, dtype=jnp.int32)
    token_type_ids = jnp.zeros((BATCH, SEQ), jnp.int32)
    # last two positions padded, to exercise the attention mask
    attention_mask = jnp.concatenate(
        [jnp.ones((BATCH, SEQ - 2), jnp.int32), jnp.zeros((BATCH, 2), jnp.int32)],
        axis=1)

    x = (context, token_type_ids, attention_mask)   # mirrors forward(x): x[0], x[2]
    logits = model_forward(params, x[0], x[1], x[2])
    jax.block_until_ready(logits)
    assert logits.shape == (BATCH, NUM_LABELS) and logits.dtype == jnp.float32
    print("KERNEL_OK")
</pallas_src>

<mosaic_0001>
module attributes {stable_mosaic.version = 11 : i64} {
  func.func @bert_fwd_kernel(%arg0: i32, %arg1: i32, %arg2: memref<8x32xf32, #tpu.memory_space<vmem>>, %arg3: memref<1x1x8xf32, #tpu.memory_space<vmem>>, %arg4: memref<1x4x32x8xbf16, #tpu.memory_space<vmem>>, %arg5: memref<1x4x1x8xf32, #tpu.memory_space<vmem>>, %arg6: memref<1x4x32x8xbf16, #tpu.memory_space<vmem>>, %arg7: memref<1x4x1x8xf32, #tpu.memory_space<vmem>>, %arg8: memref<1x4x32x8xbf16, #tpu.memory_space<vmem>>, %arg9: memref<1x4x1x8xf32, #tpu.memory_space<vmem>>, %arg10: memref<1x4x8x32xbf16, #tpu.memory_space<vmem>>, %arg11: memref<1x1x32xf32, #tpu.memory_space<vmem>>, %arg12: memref<1x1x32xf32, #tpu.memory_space<vmem>>, %arg13: memref<1x1x32xf32, #tpu.memory_space<vmem>>, %arg14: memref<1x32x64xbf16, #tpu.memory_space<vmem>>, %arg15: memref<1x1x64xf32, #tpu.memory_space<vmem>>, %arg16: memref<1x64x32xbf16, #tpu.memory_space<vmem>>, %arg17: memref<1x1x32xf32, #tpu.memory_space<vmem>>, %arg18: memref<1x1x32xf32, #tpu.memory_space<vmem>>, %arg19: memref<1x1x32xf32, #tpu.memory_space<vmem>>, %arg20: memref<1x32xf32, #tpu.memory_space<vmem>>, %arg21: memref<1x32xf32, #tpu.memory_space<vmem>>, %arg22: memref<32x32xbf16, #tpu.memory_space<vmem>>, %arg23: memref<1x32xf32, #tpu.memory_space<vmem>>, %arg24: memref<32x128xbf16, #tpu.memory_space<vmem>>, %arg25: memref<1x128xf32, #tpu.memory_space<vmem>>, %arg26: memref<1x8x128xf32, #tpu.memory_space<vmem>>, %arg27: memref<8x32xf32, #tpu.memory_space<vmem>>) attributes {dimension_semantics = [#tpu.dimension_semantics<parallel>, #tpu.dimension_semantics<arbitrary>], iteration_bounds = array<i64: 2, 2>, scalar_prefetch = 0 : i64, scratch_operands = 1 : i64, tpu.core_type = #tpu.core_type<tc>, window_params = [{transform_indices = @transform_0, window_bounds = array<i64: 8, 32>}, {transform_indices = @transform_1, window_bounds = array<i64: 1, 1, 8>}, {transform_indices = @transform_2, window_bounds = array<i64: 1, 4, 32, 8>}, {transform_indices = @transform_3, window_bounds = array<i64: 1, 4, 1, 8>}, {transform_indices = @transform_4, window_bounds = array<i64: 1, 4, 32, 8>}, {transform_indices = @transform_5, window_bounds = array<i64: 1, 4, 1, 8>}, {transform_indices = @transform_6, window_bounds = array<i64: 1, 4, 32, 8>}, {transform_indices = @transform_7, window_bounds = array<i64: 1, 4, 1, 8>}, {transform_indices = @transform_8, window_bounds = array<i64: 1, 4, 8, 32>}, {transform_indices = @transform_9, window_bounds = array<i64: 1, 1, 32>}, {transform_indices = @transform_10, window_bounds = array<i64: 1, 1, 32>}, {transform_indices = @transform_11, window_bounds = array<i64: 1, 1, 32>}, {transform_indices = @transform_12, window_bounds = array<i64: 1, 32, 64>}, {transform_indices = @transform_13, window_bounds = array<i64: 1, 1, 64>}, {transform_indices = @transform_14, window_bounds = array<i64: 1, 64, 32>}, {transform_indices = @transform_15, window_bounds = array<i64: 1, 1, 32>}, {transform_indices = @transform_16, window_bounds = array<i64: 1, 1, 32>}, {transform_indices = @transform_17, window_bounds = array<i64: 1, 1, 32>}, {pipeline_mode = #tpu.pipeline_mode<synchronous>, transform_indices = @transform_18, window_bounds = array<i64: 1, 32>}, {pipeline_mode = #tpu.pipeline_mode<synchronous>, transform_indices = @transform_19, window_bounds = array<i64: 1, 32>}, {pipeline_mode = #tpu.pipeline_mode<synchronous>, transform_indices = @transform_20, window_bounds = array<i64: 32, 32>}, {pipeline_mode = #tpu.pipeline_mode<synchronous>, transform_indices = @transform_21, window_bounds = array<i64: 1, 32>}, {pipeline_mode = #tpu.pipeline_mode<synchronous>, transform_indices = @transform_22, window_bounds = array<i64: 32, 128>}, {pipeline_mode = #tpu.pipeline_mode<synchronous>, transform_indices = @transform_23, window_bounds = array<i64: 1, 128>}, {transform_indices = @transform_24, window_bounds = array<i64: 1, 8, 128>}]} {
    %c0_i32 = arith.constant 0 : i32
    %0 = arith.cmpi eq, %arg1, %c0_i32 : i32
    %1 = arith.extui %0 : i1 to i32
    %c0_i32_0 = arith.constant 0 : i32
    %2 = arith.cmpi ne, %1, %c0_i32_0 : i32
    scf.if %2 {
      %c0_111 = arith.constant 0 : index
      %c0_112 = arith.constant 0 : index
      %293 = vector.load %arg2[%c0_111, %c0_112] : memref<8x32xf32, #tpu.memory_space<vmem>>, vector<8x32xf32>
      %c0_113 = arith.constant 0 : index
      %c0_114 = arith.constant 0 : index
      %294 = vector.load %arg20[%c0_113, %c0_114] : memref<1x32xf32, #tpu.memory_space<vmem>>, vector<1x32xf32>
      %c0_115 = arith.constant 0 : index
      %c0_116 = arith.constant 0 : index
      %295 = vector.load %arg21[%c0_115, %c0_116] : memref<1x32xf32, #tpu.memory_space<vmem>>, vector<1x32xf32>
      %cst_117 = arith.constant dense<0.000000e+00> : vector<8xf32>
      %296 = vector.multi_reduction <add>, %293, %cst_117 [1] : vector<8x32xf32> to vector<8xf32>
      %297 = vector.shape_cast %296 : vector<8xf32> to vector<8x1xf32>
      %cst_118 = arith.constant 3.200000e+01 : f32
      %298 = vector.broadcast %cst_118 : f32 to vector<8x1xf32>
      %299 = arith.divf %297, %298 : vector<8x1xf32>
      %300 = vector.broadcast %299 : vector<8x1xf32> to vector<8x32xf32>
      %301 = arith.subf %293, %300 : vector<8x32xf32>
      %302 = vector.broadcast %299 : vector<8x1xf32> to vector<8x32xf32>
      %303 = arith.subf %293, %302 : vector<8x32xf32>
      %304 = arith.mulf %301, %303 : vector<8x32xf32>
      %cst_119 = arith.constant dense<0.000000e+00> : vector<8xf32>
      %305 = vector.multi_reduction <add>, %304, %cst_119 [1] : vector<8x32xf32> to vector<8xf32>
      %306 = vector.shape_cast %305 : vector<8xf32> to vector<8x1xf32>
      %cst_120 = arith.constant 3.200000e+01 : f32
      %307 = vector.broadcast %cst_120 : f32 to vector<8x1xf32>
      %308 = arith.divf %306, %307 : vector<8x1xf32>
      %309 = vector.broadcast %299 : vector<8x1xf32> to vector<8x32xf32>
      %310 = arith.subf %293, %309 : vector<8x32xf32>
      %cst_121 = arith.constant 9.99999996E-13 : f32
      %311 = vector.broadcast %cst_121 : f32 to vector<8x1xf32>
      %312 = arith.addf %308, %311 : vector<8x1xf32>
      %313 = math.rsqrt %312 : vector<8x1xf32>
      %314 = vector.broadcast %313 : vector<8x1xf32> to vector<8x32xf32>
      %315 = arith.mulf %310, %314 : vector<8x32xf32>
      %316 = vector.broadcast %294 : vector<1x32xf32> to vector<8x32xf32>
      %317 = arith.mulf %315, %316 : vector<8x32xf32>
      %318 = vector.broadcast %295 : vector<1x32xf32> to vector<8x32xf32>
      %319 = arith.addf %317, %318 : vector<8x32xf32>
      %c0_122 = arith.constant 0 : index
      %c0_123 = arith.constant 0 : index
      %320 = vector.load %arg27[%c0_122, %c0_123] : memref<8x32xf32, #tpu.memory_space<vmem>>, vector<8x32xf32>
      tpu.vector_store %arg27[%c0_122, %c0_123], %319 {strides = array<i32>} : memref<8x32xf32, #tpu.memory_space<vmem>>, vector<8x32xf32>,
    } else {
    }
    %c0 = arith.constant 0 : index
    %c0_1 = arith.constant 0 : index
    %3 = vector.load %arg27[%c0, %c0_1] : memref<8x32xf32, #tpu.memory_space<vmem>>, vector<8x32xf32>
    %4 = arith.truncf %3 : vector<8x32xf32> to vector<8x32xbf16>
    %c0_2 = arith.constant 0 : index
    %c0_3 = arith.constant 0 : index
    %c0_4 = arith.constant 0 : index
    %5 = vector.load %arg3[%c0_2, %c0_3, %c0_4] : memref<1x1x8xf32, #tpu.memory_space<vmem>>, vector<1x1x8xf32>
    %6 = vector.shape_cast %5 : vector<1x1x8xf32> to vector<1x8xf32>
    %c0_5 = arith.constant 0 : index
    %c0_6 = arith.constant 0 : index
    %c0_7 = arith.constant 0 : index
    %c0_8 = arith.constant 0 : index
    %7 = vector.load %arg4[%c0_5, %c0_6, %c0_7, %c0_8] : memref<1x4x32x8xbf16, #tpu.memory_space<vmem>>, vector<1x4x32x8xbf16>
    %8 = vector.shape_cast %7 : vector<1x4x32x8xbf16> to vector<4x32x8xbf16>
    %c0_9 = arith.constant 0 : index
    %c0_10 = arith.constant 0 : index
    %c0_11 = arith.constant 0 : index
    %c0_12 = arith.constant 0 : index
    %9 = vector.load %arg5[%c0_9, %c0_10, %c0_11, %c0_12] : memref<1x4x1x8xf32, #tpu.memory_space<vmem>>, vector<1x4x1x8xf32>
    %10 = vector.shape_cast %9 : vector<1x4x1x8xf32> to vector<4x1x8xf32>
    %c0_13 = arith.constant 0 : index
    %c0_14 = arith.constant 0 : index
    %c0_15 = arith.constant 0 : index
    %c0_16 = arith.constant 0 : index
    %11 = vector.load %arg6[%c0_13, %c0_14, %c0_15, %c0_16] : memref<1x4x32x8xbf16, #tpu.memory_space<vmem>>, vector<1x4x32x8xbf16>
    %12 = vector.shape_cast %11 : vector<1x4x32x8xbf16> to vector<4x32x8xbf16>
    %c0_17 = arith.constant 0 : index
    %c0_18 = arith.constant 0 : index
    %c0_19 = arith.constant 0 : index
    %c0_20 = arith.constant 0 : index
    %13 = vector.load %arg7[%c0_17, %c0_18, %c0_19, %c0_20] : memref<1x4x1x8xf32, #tpu.memory_space<vmem>>, vector<1x4x1x8xf32>
    %14 = vector.shape_cast %13 : vector<1x4x1x8xf32> to vector<4x1x8xf32>
    %c0_21 = arith.constant 0 : index
    %c0_22 = arith.constant 0 : index
    %c0_23 = arith.constant 0 : index
    %c0_24 = arith.constant 0 : index
    %15 = vector.load %arg8[%c0_21, %c0_22, %c0_23, %c0_24] : memref<1x4x32x8xbf16, #tpu.memory_space<vmem>>, vector<1x4x32x8xbf16>
    %16 = vector.shape_cast %15 : vector<1x4x32x8xbf16> to vector<4x32x8xbf16>
    %c0_25 = arith.constant 0 : index
    %c0_26 = arith.constant 0 : index
    %c0_27 = arith.constant 0 : index
    %c0_28 = arith.constant 0 : index
    %17 = vector.load %arg9[%c0_25, %c0_26, %c0_27, %c0_28] : memref<1x4x1x8xf32, #tpu.memory_space<vmem>>, vector<1x4x1x8xf32>
    %18 = vector.shape_cast %17 : vector<1x4x1x8xf32> to vector<4x1x8xf32>
    %c0_29 = arith.constant 0 : index
    %c0_30 = arith.constant 0 : index
    %c0_31 = arith.constant 0 : index
    %c0_32 = arith.constant 0 : index
    %19 = vector.load %arg10[%c0_29, %c0_30, %c0_31, %c0_32] : memref<1x4x8x32xbf16, #tpu.memory_space<vmem>>, vector<1x4x8x32xbf16>
    %20 = vector.shape_cast %19 : vector<1x4x8x32xbf16> to vector<4x8x32xbf16>
    %cst = arith.constant 0.000000e+00 : f32
    %21 = vector.broadcast %cst : f32 to vector<8x32xf32>
    %22 = vector.extract_strided_slice %8 {offsets = [0, 0, 0], sizes = [1, 32, 8], strides = [1, 1, 1]} : vector<4x32x8xbf16> to vector<1x32x8xbf16>
    %23 = vector.shape_cast %22 : vector<1x32x8xbf16> to vector<32x8xbf16>
    %cst_33 = arith.constant dense<0.000000e+00> : vector<8x8xf32>
    %24 = tpu.matmul %4, %23, %cst_33 {dimension_numbers = #tpu.dot_dimension_numbers<[1], [0], [0], [1], [0, 0, 1, 1], [], []>} : vector<8x32xbf16>, vector<32x8xbf16>, vector<8x8xf32> -> vector<8x8xf32>
    %25 = vector.extract_strided_slice %10 {offsets = [0, 0, 0], sizes = [1, 1, 8], strides = [1, 1, 1]} : vector<4x1x8xf32> to vector<1x1x8xf32>
    %26 = vector.shape_cast %25 : vector<1x1x8xf32> to vector<1x8xf32>
    %27 = vector.broadcast %26 : vector<1x8xf32> to vector<8x8xf32>
    %28 = arith.addf %24, %27 : vector<8x8xf32>
    %29 = vector.extract_strided_slice %12 {offsets = [0, 0, 0], sizes = [1, 32, 8], strides = [1, 1, 1]} : vector<4x32x8xbf16> to vector<1x32x8xbf16>
    %30 = vector.shape_cast %29 : vector<1x32x8xbf16> to vector<32x8xbf16>
    %cst_34 = arith.constant dense<0.000000e+00> : vector<8x8xf32>
    %31 = tpu.matmul %4, %30, %cst_34 {dimension_numbers = #tpu.dot_dimension_numbers<[1], [0], [0], [1], [0, 0, 1, 1], [], []>} : vector<8x32xbf16>, vector<32x8xbf16>, vector<8x8xf32> -> vector<8x8xf32>
    %32 = vector.extract_strided_slice %14 {offsets = [0, 0, 0], sizes = [1, 1, 8], strides = [1, 1, 1]} : vector<4x1x8xf32> to vector<1x1x8xf32>
    %33 = vector.shape_cast %32 : vector<1x1x8xf32> to vector<1x8xf32>
    %34 = vector.broadcast %33 : vector<1x8xf32> to vector<8x8xf32>
    %35 = arith.addf %31, %34 : vector<8x8xf32>
    %36 = vector.extract_strided_slice %16 {offsets = [0, 0, 0], sizes = [1, 32, 8], strides = [1, 1, 1]} : vector<4x32x8xbf16> to vector<1x32x8xbf16>
    %37 = vector.shape_cast %36 : vector<1x32x8xbf16> to vector<32x8xbf16>
    %cst_35 = arith.constant dense<0.000000e+00> : vector<8x8xf32>
    %38 = tpu.matmul %4, %37, %cst_35 {dimension_numbers = #tpu.dot_dimension_numbers<[1], [0], [0], [1], [0, 0, 1, 1], [], []>} : vector<8x32xbf16>, vector<32x8xbf16>, vector<8x8xf32> -> vector<8x8xf32>
    %39 = vector.extract_strided_slice %18 {offsets = [0, 0, 0], sizes = [1, 1, 8], strides = [1, 1, 1]} : vector<4x1x8xf32> to vector<1x1x8xf32>
    %40 = vector.shape_cast %39 : vector<1x1x8xf32> to vector<1x8xf32>
    %41 = vector.broadcast %40 : vector<1x8xf32> to vector<8x8xf32>
    %42 = arith.addf %38, %41 : vector<8x8xf32>
    %43 = arith.truncf %28 : vector<8x8xf32> to vector<8x8xbf16>
    %44 = arith.truncf %35 : vector<8x8xf32> to vector<8x8xbf16>
    "tpu.trace_start"() <{level = 10 : i32, message = "qd,kd->qk"}> : () -> ()
    %cst_36 = arith.constant dense<0.000000e+00> : vector<8x8xf32>
    %45 = tpu.matmul %43, %44, %cst_36 {dimension_numbers = #tpu.dot_dimension_numbers<[1], [1], [0], [0], [0, 0, 1, 0], [], []>} : vector<8x8xbf16>, vector<8x8xbf16>, vector<8x8xf32> -> vector<8x8xf32>
    "tpu.trace_stop"() : () -> ()
    %46 = vector.broadcast %6 : vector<1x8xf32> to vector<8x8xf32>
    %47 = arith.addf %45, %46 : vector<8x8xf32>
    %cst_37 = arith.constant dense<0xFF800000> : vector<8xf32>
    %48 = vector.multi_reduction <maximumf>, %47, %cst_37 [1] : vector<8x8xf32> to vector<8xf32>
    %49 = vector.shape_cast %48 : vector<8xf32> to vector<8x1xf32>
    %50 = vector.broadcast %49 : vector<8x1xf32> to vector<8x8xf32>
    %51 = arith.subf %47, %50 : vector<8x8xf32>
    %52 = math.exp %51 : vector<8x8xf32>
    %cst_38 = arith.constant dense<0.000000e+00> : vector<8xf32>
    %53 = vector.multi_reduction <add>, %52, %cst_38 [1] : vector<8x8xf32> to vector<8xf32>
    %54 = vector.shape_cast %53 : vector<8xf32> to vector<8x1xf32>
    %55 = tpu.reciprocal %54 {approx = true} : vector<8x1xf32> -> vector<8x1xf32>
    %56 = vector.broadcast %55 : vector<8x1xf32> to vector<8x8xf32>
    %57 = arith.mulf %52, %56 : vector<8x8xf32>
    %58 = arith.truncf %57 : vector<8x8xf32> to vector<8x8xbf16>
    %59 = arith.truncf %42 : vector<8x8xf32> to vector<8x8xbf16>
    %cst_39 = arith.constant dense<0.000000e+00> : vector<8x8xf32>
    %60 = tpu.matmul %58, %59, %cst_39 {dimension_numbers = #tpu.dot_dimension_numbers<[1], [0], [0], [1], [0, 0, 1, 1], [], []>} : vector<8x8xbf16>, vector<8x8xbf16>, vector<8x8xf32> -> vector<8x8xf32>
    %61 = arith.truncf %60 : vector<8x8xf32> to vector<8x8xbf16>
    %62 = vector.extract_strided_slice %20 {offsets = [0, 0, 0], sizes = [1, 8, 32], strides = [1, 1, 1]} : vector<4x8x32xbf16> to vector<1x8x32xbf16>
    %63 = vector.shape_cast %62 : vector<1x8x32xbf16> to vector<8x32xbf16>
    %cst_40 = arith.constant dense<0.000000e+00> : vector<8x32xf32>
    %64 = tpu.matmul %61, %63, %cst_40 {dimension_numbers = #tpu.dot_dimension_numbers<[1], [0], [0], [1], [0, 0, 1, 1], [], []>} : vector<8x8xbf16>, vector<8x32xbf16>, vector<8x32xf32> -> vector<8x32xf32>
    %65 = arith.addf %21, %64 : vector<8x32xf32>
    %66 = vector.extract_strided_slice %8 {offsets = [1, 0, 0], sizes = [1, 32, 8], strides = [1, 1, 1]} : vector<4x32x8xbf16> to vector<1x32x8xbf16>
    %67 = vector.shape_cast %66 : vector<1x32x8xbf16> to vector<32x8xbf16>
    %cst_41 = arith.constant dense<0.000000e+00> : vector<8x8xf32>
    %68 = tpu.matmul %4, %67, %cst_41 {dimension_numbers = #tpu.dot_dimension_numbers<[1], [0], [0], [1], [0, 0, 1, 1], [], []>} : vector<8x32xbf16>, vector<32x8xbf16>, vector<8x8xf32> -> vector<8x8xf32>
    %69 = vector.extract_strided_slice %10 {offsets = [1, 0, 0], sizes = [1, 1, 8], strides = [1, 1, 1]} : vector<4x1x8xf32> to vector<1x1x8xf32>
    %70 = vector.shape_cast %69 : vector<1x1x8xf32> to vector<1x8xf32>
    %71 = vector.broadcast %70 : vector<1x8xf32> to vector<8x8xf32>
    %72 = arith.addf %68, %71 : vector<8x8xf32>
    %73 = vector.extract_strided_slice %12 {offsets = [1, 0, 0], sizes = [1, 32, 8], strides = [1, 1, 1]} : vector<4x32x8xbf16> to vector<1x32x8xbf16>
    %74 = vector.shape_cast %73 : vector<1x32x8xbf16> to vector<32x8xbf16>
    %cst_42 = arith.constant dense<0.000000e+00> : vector<8x8xf32>
    %75 = tpu.matmul %4, %74, %cst_42 {dimension_numbers = #tpu.dot_dimension_numbers<[1], [0], [0], [1], [0, 0, 1, 1], [], []>} : vector<8x32xbf16>, vector<32x8xbf16>, vector<8x8xf32> -> vector<8x8xf32>
    %76 = vector.extract_strided_slice %14 {offsets = [1, 0, 0], sizes = [1, 1, 8], strides = [1, 1, 1]} : vector<4x1x8xf32> to vector<1x1x8xf32>
    %77 = vector.shape_cast %76 : vector<1x1x8xf32> to vector<1x8xf32>
    %78 = vector.broadcast %77 : vector<1x8xf32> to vector<8x8xf32>
    %79 = arith.addf %75, %78 : vector<8x8xf32>
    %80 = vector.extract_strided_slice %16 {offsets = [1, 0, 0], sizes = [1, 32, 8], strides = [1, 1, 1]} : vector<4x32x8xbf16> to vector<1x32x8xbf16>
    %81 = vector.shape_cast %80 : vector<1x32x8xbf16> to vector<32x8xbf16>
    %cst_43 = arith.constant dense<0.000000e+00> : vector<8x8xf32>
    %82 = tpu.matmul %4, %81, %cst_43 {dimension_numbers = #tpu.dot_dimension_numbers<[1], [0], [0], [1], [0, 0, 1, 1], [], []>} : vector<8x32xbf16>, vector<32x8xbf16>, vector<8x8xf32> -> vector<8x8xf32>
    %83 = vector.extract_strided_slice %18 {offsets = [1, 0, 0], sizes = [1, 1, 8], strides = [1, 1, 1]} : vector<4x1x8xf32> to vector<1x1x8xf32>
    %84 = vector.shape_cast %83 : vector<1x1x8xf32> to vector<1x8xf32>
    %85 = vector.broadcast %84 : vector<1x8xf32> to vector<8x8xf32>
    %86 = arith.addf %82, %85 : vector<8x8xf32>
    %87 = arith.truncf %72 : vector<8x8xf32> to vector<8x8xbf16>
    %88 = arith.truncf %79 : vector<8x8xf32> to vector<8x8xbf16>
    "tpu.trace_start"() <{level = 10 : i32, message = "qd,kd->qk"}> : () -> ()
    %cst_44 = arith.constant dense<0.000000e+00> : vector<8x8xf32>
    %89 = tpu.matmul %87, %88, %cst_44 {dimension_numbers = #tpu.dot_dimension_numbers<[1], [1], [0], [0], [0, 0, 1, 0], [], []>} : vector<8x8xbf16>, vector<8x8xbf16>, vector<8x8xf32> -> vector<8x8xf32>
    "tpu.trace_stop"() : () -> ()
    %90 = vector.broadcast %6 : vector<1x8xf32> to vector<8x8xf32>
    %91 = arith.addf %89, %90 : vector<8x8xf32>
    %cst_45 = arith.constant dense<0xFF800000> : vector<8xf32>
    %92 = vector.multi_reduction <maximumf>, %91, %cst_45 [1] : vector<8x8xf32> to vector<8xf32>
    %93 = vector.shape_cast %92 : vector<8xf32> to vector<8x1xf32>
    %94 = vector.broadcast %93 : vector<8x1xf32> to vector<8x8xf32>
    %95 = arith.subf %91, %94 : vector<8x8xf32>
    %96 = math.exp %95 : vector<8x8xf32>
    %cst_46 = arith.constant dense<0.000000e+00> : vector<8xf32>
    %97 = vector.multi_reduction <add>, %96, %cst_46 [1] : vector<8x8xf32> to vector<8xf32>
    %98 = vector.shape_cast %97 : vector<8xf32> to vector<8x1xf32>
    %99 = tpu.reciprocal %98 {approx = true} : vector<8x1xf32> -> vector<8x1xf32>
    %100 = vector.broadcast %99 : vector<8x1xf32> to vector<8x8xf32>
    %101 = arith.mulf %96, %100 : vector<8x8xf32>
    %102 = arith.truncf %101 : vector<8x8xf32> to vector<8x8xbf16>
    %103 = arith.truncf %86 : vector<8x8xf32> to vector<8x8xbf16>
    %cst_47 = arith.constant dense<0.000000e+00> : vector<8x8xf32>
    %104 = tpu.matmul %102, %103, %cst_47 {dimension_numbers = #tpu.dot_dimension_numbers<[1], [0], [0], [1], [0, 0, 1, 1], [], []>} : vector<8x8xbf16>, vector<8x8xbf16>, vector<8x8xf32> -> vector<8x8xf32>
    %105 = arith.truncf %104 : vector<8x8xf32> to vector<8x8xbf16>
    %106 = vector.extract_strided_slice %20 {offsets = [1, 0, 0], sizes = [1, 8, 32], strides = [1, 1, 1]} : vector<4x8x32xbf16> to vector<1x8x32xbf16>
    %107 = vector.shape_cast %106 : vector<1x8x32xbf16> to vector<8x32xbf16>
    %cst_48 = arith.constant dense<0.000000e+00> : vector<8x32xf32>
    %108 = tpu.matmul %105, %107, %cst_48 {dimension_numbers = #tpu.dot_dimension_numbers<[1], [0], [0], [1], [0, 0, 1, 1], [], []>} : vector<8x8xbf16>, vector<8x32xbf16>, vector<8x32xf32> -> vector<8x32xf32>
    %109 = arith.addf %65, %108 : vector<8x32xf32>
    %110 = vector.extract_strided_slice %8 {offsets = [2, 0, 0], sizes = [1, 32, 8], strides = [1, 1, 1]} : vector<4x32x8xbf16> to vector<1x32x8xbf16>
    %111 = vector.shape_cast %110 : vector<1x32x8xbf16> to vector<32x8xbf16>
    %cst_49 = arith.constant dense<0.000000e+00> : vector<8x8xf32>
    %112 = tpu.matmul %4, %111, %cst_49 {dimension_numbers = #tpu.dot_dimension_numbers<[1], [0], [0], [1], [0, 0, 1, 1], [], []>} : vector<8x32xbf16>, vector<32x8xbf16>, vector<8x8xf32> -> vector<8x8xf32>
    %113 = vector.extract_strided_slice %10 {offsets = [2, 0, 0], sizes = [1, 1, 8], strides = [1, 1, 1]} : vector<4x1x8xf32> to vector<1x1x8xf32>
    %114 = vector.shape_cast %113 : vector<1x1x8xf32> to vector<1x8xf32>
    %115 = vector.broadcast %114 : vector<1x8xf32> to vector<8x8xf32>
    %116 = arith.addf %112, %115 : vector<8x8xf32>
    %117 = vector.extract_strided_slice %12 {offsets = [2, 0, 0], sizes = [1, 32, 8], strides = [1, 1, 1]} : vector<4x32x8xbf16> to vector<1x32x8xbf16>
    %118 = vector.shape_cast %117 : vector<1x32x8xbf16> to vector<32x8xbf16>
    %cst_50 = arith.constant dense<0.000000e+00> : vector<8x8xf32>
    %119 = tpu.matmul %4, %118, %cst_50 {dimension_numbers = #tpu.dot_dimension_numbers<[1], [0], [0], [1], [0, 0, 1, 1], [], []>} : vector<8x32xbf16>, vector<32x8xbf16>, vector<8x8xf32> -> vector<8x8xf32>
    %120 = vector.extract_strided_slice %14 {offsets = [2, 0, 0], sizes = [1, 1, 8], strides = [1, 1, 1]} : vector<4x1x8xf32> to vector<1x1x8xf32>
    %121 = vector.shape_cast %120 : vector<1x1x8xf32> to vector<1x8xf32>
    %122 = vector.broadcast %121 : vector<1x8xf32> to vector<8x8xf32>
    %123 = arith.addf %119, %122 : vector<8x8xf32>
    %124 = vector.extract_strided_slice %16 {offsets = [2, 0, 0], sizes = [1, 32, 8], strides = [1, 1, 1]} : vector<4x32x8xbf16> to vector<1x32x8xbf16>
    %125 = vector.shape_cast %124 : vector<1x32x8xbf16> to vector<32x8xbf16>
    %cst_51 = arith.constant dense<0.000000e+00> : vector<8x8xf32>
    %126 = tpu.matmul %4, %125, %cst_51 {dimension_numbers = #tpu.dot_dimension_numbers<[1], [0], [0], [1], [0, 0, 1, 1], [], []>} : vector<8x32xbf16>, vector<32x8xbf16>, vector<8x8xf32> -> vector<8x8xf32>
    %127 = vector.extract_strided_slice %18 {offsets = [2, 0, 0], sizes = [1, 1, 8], strides = [1, 1, 1]} : vector<4x1x8xf32> to vector<1x1x8xf32>
    %128 = vector.shape_cast %127 : vector<1x1x8xf32> to vector<1x8xf32>
    %129 = vector.broadcast %128 : vector<1x8xf32> to vector<8x8xf32>
    %130 = arith.addf %126, %129 : vector<8x8xf32>
    %131 = arith.truncf %116 : vector<8x8xf32> to vector<8x8xbf16>
    %132 = arith.truncf %123 : vector<8x8xf32> to vector<8x8xbf16>
    "tpu.trace_start"() <{level = 10 : i32, message = "qd,kd->qk"}> : () -> ()
    %cst_52 = arith.constant dense<0.000000e+00> : vector<8x8xf32>
    %133 = tpu.matmul %131, %132, %cst_52 {dimension_numbers = #tpu.dot_dimension_numbers<[1], [1], [0], [0], [0, 0, 1, 0], [], []>} : vector<8x8xbf16>, vector<8x8xbf16>, vector<8x8xf32> -> vector<8x8xf32>
    "tpu.trace_stop"() : () -> ()
    %134 = vector.broadcast %6 : vector<1x8xf32> to vector<8x8xf32>
    %135 = arith.addf %133, %134 : vector<8x8xf32>
    %cst_53 = arith.constant dense<0xFF800000> : vector<8xf32>
    %136 = vector.multi_reduction <maximumf>, %135, %cst_53 [1] : vector<8x8xf32> to vector<8xf32>
    %137 = vector.shape_cast %136 : vector<8xf32> to vector<8x1xf32>
    %138 = vector.broadcast %137 : vector<8x1xf32> to vector<8x8xf32>
    %139 = arith.subf %135, %138 : vector<8x8xf32>
    %140 = math.exp %139 : vector<8x8xf32>
    %cst_54 = arith.constant dense<0.000000e+00> : vector<8xf32>
    %141 = vector.multi_reduction <add>, %140, %cst_54 [1] : vector<8x8xf32> to vector<8xf32>
    %142 = vector.shape_cast %141 : vector<8xf32> to vector<8x1xf32>
    %143 = tpu.reciprocal %142 {approx = true} : vector<8x1xf32> -> vector<8x1xf32>
    %144 = vector.broadcast %143 : vector<8x1xf32> to vector<8x8xf32>
    %145 = arith.mulf %140, %144 : vector<8x8xf32>
    %146 = arith.truncf %145 : vector<8x8xf32> to vector<8x8xbf16>
    %147 = arith.truncf %130 : vector<8x8xf32> to vector<8x8xbf16>
    %cst_55 = arith.constant dense<0.000000e+00> : vector<8x8xf32>
    %148 = tpu.matmul %146, %147, %cst_55 {dimension_numbers = #tpu.dot_dimension_numbers<[1], [0], [0], [1], [0, 0, 1, 1], [], []>} : vector<8x8xbf16>, vector<8x8xbf16>, vector<8x8xf32> -> vector<8x8xf32>
    %149 = arith.truncf %148 : vector<8x8xf32> to vector<8x8xbf16>
    %150 = vector.extract_strided_slice %20 {offsets = [2, 0, 0], sizes = [1, 8, 32], strides = [1, 1, 1]} : vector<4x8x32xbf16> to vector<1x8x32xbf16>
    %151 = vector.shape_cast %150 : vector<1x8x32xbf16> to vector<8x32xbf16>
    %cst_56 = arith.constant dense<0.000000e+00> : vector<8x32xf32>
    %152 = tpu.matmul %149, %151, %cst_56 {dimension_numbers = #tpu.dot_dimension_numbers<[1], [0], [0], [1], [0, 0, 1, 1], [], []>} : vector<8x8xbf16>, vector<8x32xbf16>, vector<8x32xf32> -> vector<8x32xf32>
    %153 = arith.addf %109, %152 : vector<8x32xf32>
    %154 = vector.extract_strided_slice %8 {offsets = [3, 0, 0], sizes = [1, 32, 8], strides = [1, 1, 1]} : vector<4x32x8xbf16> to vector<1x32x8xbf16>
    %155 = vector.shape_cast %154 : vector<1x32x8xbf16> to vector<32x8xbf16>
    %cst_57 = arith.constant dense<0.000000e+00> : vector<8x8xf32>
    %156 = tpu.matmul %4, %155, %cst_57 {dimension_numbers = #tpu.dot_dimension_numbers<[1], [0], [0], [1], [0, 0, 1, 1], [], []>} : vector<8x32xbf16>, vector<32x8xbf16>, vector<8x8xf32> -> vector<8x8xf32>
    %157 = vector.extract_strided_slice %10 {offsets = [3, 0, 0], sizes = [1, 1, 8], strides = [1, 1, 1]} : vector<4x1x8xf32> to vector<1x1x8xf32>
    %158 = vector.shape_cast %157 : vector<1x1x8xf32> to vector<1x8xf32>
    %159 = vector.broadcast %158 : vector<1x8xf32> to vector<8x8xf32>
    %160 = arith.addf %156, %159 : vector<8x8xf32>
    %161 = vector.extract_strided_slice %12 {offsets = [3, 0, 0], sizes = [1, 32, 8], strides = [1, 1, 1]} : vector<4x32x8xbf16> to vector<1x32x8xbf16>
    %162 = vector.shape_cast %161 : vector<1x32x8xbf16> to vector<32x8xbf16>
    %cst_58 = arith.constant dense<0.000000e+00> : vector<8x8xf32>
    %163 = tpu.matmul %4, %162, %cst_58 {dimension_numbers = #tpu.dot_dimension_numbers<[1], [0], [0], [1], [0, 0, 1, 1], [], []>} : vector<8x32xbf16>, vector<32x8xbf16>, vector<8x8xf32> -> vector<8x8xf32>
    %164 = vector.extract_strided_slice %14 {offsets = [3, 0, 0], sizes = [1, 1, 8], strides = [1, 1, 1]} : vector<4x1x8xf32> to vector<1x1x8xf32>
    %165 = vector.shape_cast %164 : vector<1x1x8xf32> to vector<1x8xf32>
    %166 = vector.broadcast %165 : vector<1x8xf32> to vector<8x8xf32>
    %167 = arith.addf %163, %166 : vector<8x8xf32>
    %168 = vector.extract_strided_slice %16 {offsets = [3, 0, 0], sizes = [1, 32, 8], strides = [1, 1, 1]} : vector<4x32x8xbf16> to vector<1x32x8xbf16>
    %169 = vector.shape_cast %168 : vector<1x32x8xbf16> to vector<32x8xbf16>
    %cst_59 = arith.constant dense<0.000000e+00> : vector<8x8xf32>
    %170 = tpu.matmul %4, %169, %cst_59 {dimension_numbers = #tpu.dot_dimension_numbers<[1], [0], [0], [1], [0, 0, 1, 1], [], []>} : vector<8x32xbf16>, vector<32x8xbf16>, vector<8x8xf32> -> vector<8x8xf32>
    %171 = vector.extract_strided_slice %18 {offsets = [3, 0, 0], sizes = [1, 1, 8], strides = [1, 1, 1]} : vector<4x1x8xf32> to vector<1x1x8xf32>
    %172 = vector.shape_cast %171 : vector<1x1x8xf32> to vector<1x8xf32>
    %173 = vector.broadcast %172 : vector<1x8xf32> to vector<8x8xf32>
    %174 = arith.addf %170, %173 : vector<8x8xf32>
    %175 = arith.truncf %160 : vector<8x8xf32> to vector<8x8xbf16>
    %176 = arith.truncf %167 : vector<8x8xf32> to vector<8x8xbf16>
    "tpu.trace_start"() <{level = 10 : i32, message = "qd,kd->qk"}> : () -> ()
    %cst_60 = arith.constant dense<0.000000e+00> : vector<8x8xf32>
    %177 = tpu.matmul %175, %176, %cst_60 {dimension_numbers = #tpu.dot_dimension_numbers<[1], [1], [0], [0], [0, 0, 1, 0], [], []>} : vector<8x8xbf16>, vector<8x8xbf16>, vector<8x8xf32> -> vector<8x8xf32>
    "tpu.trace_stop"() : () -> ()
    %178 = vector.broadcast %6 : vector<1x8xf32> to vector<8x8xf32>
    %179 = arith.addf %177, %178 : vector<8x8xf32>
    %cst_61 = arith.constant dense<0xFF800000> : vector<8xf32>
    %180 = vector.multi_reduction <maximumf>, %179, %cst_61 [1] : vector<8x8xf32> to vector<8xf32>
    %181 = vector.shape_cast %180 : vector<8xf32> to vector<8x1xf32>
    %182 = vector.broadcast %181 : vector<8x1xf32> to vector<8x8xf32>
    %183 = arith.subf %179, %182 : vector<8x8xf32>
    %184 = math.exp %183 : vector<8x8xf32>
    %cst_62 = arith.constant dense<0.000000e+00> : vector<8xf32>
    %185 = vector.multi_reduction <add>, %184, %cst_62 [1] : vector<8x8xf32> to vector<8xf32>
    %186 = vector.shape_cast %185 : vector<8xf32> to vector<8x1xf32>
    %187 = tpu.reciprocal %186 {approx = true} : vector<8x1xf32> -> vector<8x1xf32>
    %188 = vector.broadcast %187 : vector<8x1xf32> to vector<8x8xf32>
    %189 = arith.mulf %184, %188 : vector<8x8xf32>
    %190 = arith.truncf %189 : vector<8x8xf32> to vector<8x8xbf16>
    %191 = arith.truncf %174 : vector<8x8xf32> to vector<8x8xbf16>
    %cst_63 = arith.constant dense<0.000000e+00> : vector<8x8xf32>
    %192 = tpu.matmul %190, %191, %cst_63 {dimension_numbers = #tpu.dot_dimension_numbers<[1], [0], [0], [1], [0, 0, 1, 1], [], []>} : vector<8x8xbf16>, vector<8x8xbf16>, vector<8x8xf32> -> vector<8x8xf32>
    %193 = arith.truncf %192 : vector<8x8xf32> to vector<8x8xbf16>
    %194 = vector.extract_strided_slice %20 {offsets = [3, 0, 0], sizes = [1, 8, 32], strides = [1, 1, 1]} : vector<4x8x32xbf16> to vector<1x8x32xbf16>
    %195 = vector.shape_cast %194 : vector<1x8x32xbf16> to vector<8x32xbf16>
    %cst_64 = arith.constant dense<0.000000e+00> : vector<8x32xf32>
    %196 = tpu.matmul %193, %195, %cst_64 {dimension_numbers = #tpu.dot_dimension_numbers<[1], [0], [0], [1], [0, 0, 1, 1], [], []>} : vector<8x8xbf16>, vector<8x32xbf16>, vector<8x32xf32> -> vector<8x32xf32>
    %197 = arith.addf %153, %196 : vector<8x32xf32>
    %c0_65 = arith.constant 0 : index
    %c0_66 = arith.constant 0 : index
    %c0_67 = arith.constant 0 : index
    %198 = vector.load %arg11[%c0_65, %c0_66, %c0_67] : memref<1x1x32xf32, #tpu.memory_space<vmem>>, vector<1x1x32xf32>
    %199 = vector.shape_cast %198 : vector<1x1x32xf32> to vector<1x32xf32>
    %200 = vector.broadcast %199 : vector<1x32xf32> to vector<8x32xf32>
    %201 = arith.addf %197, %200 : vector<8x32xf32>
    %202 = arith.addf %201, %3 : vector<8x32xf32>
    %c0_68 = arith.constant 0 : index
    %c0_69 = arith.constant 0 : index
    %c0_70 = arith.constant 0 : index
    %203 = vector.load %arg12[%c0_68, %c0_69, %c0_70] : memref<1x1x32xf32, #tpu.memory_space<vmem>>, vector<1x1x32xf32>
    %204 = vector.shape_cast %203 : vector<1x1x32xf32> to vector<1x32xf32>
    %c0_71 = arith.constant 0 : index
    %c0_72 = arith.constant 0 : index
    %c0_73 = arith.constant 0 : index
    %205 = vector.load %arg13[%c0_71, %c0_72, %c0_73] : memref<1x1x32xf32, #tpu.memory_space<vmem>>, vector<1x1x32xf32>
    %206 = vector.shape_cast %205 : vector<1x1x32xf32> to vector<1x32xf32>
    %cst_74 = arith.constant dense<0.000000e+00> : vector<8xf32>
    %207 = vector.multi_reduction <add>, %202, %cst_74 [1] : vector<8x32xf32> to vector<8xf32>
    %208 = vector.shape_cast %207 : vector<8xf32> to vector<8x1xf32>
    %cst_75 = arith.constant 3.200000e+01 : f32
    %209 = vector.broadcast %cst_75 : f32 to vector<8x1xf32>
    %210 = arith.divf %208, %209 : vector<8x1xf32>
    %211 = vector.broadcast %210 : vector<8x1xf32> to vector<8x32xf32>
    %212 = arith.subf %202, %211 : vector<8x32xf32>
    %213 = vector.broadcast %210 : vector<8x1xf32> to vector<8x32xf32>
    %214 = arith.subf %202, %213 : vector<8x32xf32>
    %215 = arith.mulf %212, %214 : vector<8x32xf32>
    %cst_76 = arith.constant dense<0.000000e+00> : vector<8xf32>
    %216 = vector.multi_reduction <add>, %215, %cst_76 [1] : vector<8x32xf32> to vector<8xf32>
    %217 = vector.shape_cast %216 : vector<8xf32> to vector<8x1xf32>
    %cst_77 = arith.constant 3.200000e+01 : f32
    %218 = vector.broadcast %cst_77 : f32 to vector<8x1xf32>
    %219 = arith.divf %217, %218 : vector<8x1xf32>
    %220 = vector.broadcast %210 : vector<8x1xf32> to vector<8x32xf32>
    %221 = arith.subf %202, %220 : vector<8x32xf32>
    %cst_78 = arith.constant 9.99999996E-13 : f32
    %222 = vector.broadcast %cst_78 : f32 to vector<8x1xf32>
    %223 = arith.addf %219, %222 : vector<8x1xf32>
    %224 = math.rsqrt %223 : vector<8x1xf32>
    %225 = vector.broadcast %224 : vector<8x1xf32> to vector<8x32xf32>
    %226 = arith.mulf %221, %225 : vector<8x32xf32>
    %227 = vector.broadcast %204 : vector<1x32xf32> to vector<8x32xf32>
    %228 = arith.mulf %226, %227 : vector<8x32xf32>
    %229 = vector.broadcast %206 : vector<1x32xf32> to vector<8x32xf32>
    %230 = arith.addf %228, %229 : vector<8x32xf32>
    %231 = arith.truncf %230 : vector<8x32xf32> to vector<8x32xbf16>
    %c0_79 = arith.constant 0 : index
    %c0_80 = arith.constant 0 : index
    %c0_81 = arith.constant 0 : index
    %232 = vector.load %arg14[%c0_79, %c0_80, %c0_81] : memref<1x32x64xbf16, #tpu.memory_space<vmem>>, vector<1x32x64xbf16>
    %233 = vector.shape_cast %232 : vector<1x32x64xbf16> to vector<32x64xbf16>
    %cst_82 = arith.constant dense<0.000000e+00> : vector<8x64xf32>
    %234 = tpu.matmul %231, %233, %cst_82 {dimension_numbers = #tpu.dot_dimension_numbers<[1], [0], [0], [1], [0, 0, 1, 1], [], []>} : vector<8x32xbf16>, vector<32x64xbf16>, vector<8x64xf32> -> vector<8x64xf32>
    %c0_83 = arith.constant 0 : index
    %c0_84 = arith.constant 0 : index
    %c0_85 = arith.constant 0 : index
    %235 = vector.load %arg15[%c0_83, %c0_84, %c0_85] : memref<1x1x64xf32, #tpu.memory_space<vmem>>, vector<1x1x64xf32>
    %236 = vector.shape_cast %235 : vector<1x1x64xf32> to vector<1x64xf32>
    %237 = vector.broadcast %236 : vector<1x64xf32> to vector<8x64xf32>
    %238 = arith.addf %234, %237 : vector<8x64xf32>
    %cst_86 = arith.constant 5.000000e-01 : f32
    %239 = vector.broadcast %cst_86 : f32 to vector<8x64xf32>
    %240 = arith.mulf %239, %238 : vector<8x64xf32>
    %cst_87 = arith.constant 4.471500e-02 : f32
    %241 = vector.broadcast %cst_87 : f32 to vector<8x64xf32>
    %242 = arith.mulf %241, %238 : vector<8x64xf32>
    %243 = arith.mulf %242, %238 : vector<8x64xf32>
    %244 = arith.mulf %243, %238 : vector<8x64xf32>
    %245 = arith.addf %238, %244 : vector<8x64xf32>
    %cst_88 = arith.constant 0.797884583 : f32
    %246 = vector.broadcast %cst_88 : f32 to vector<8x64xf32>
    %247 = arith.mulf %246, %245 : vector<8x64xf32>
    %248 = math.tanh %247 : vector<8x64xf32>
    %cst_89 = arith.constant 1.000000e+00 : f32
    %249 = vector.broadcast %cst_89 : f32 to vector<8x64xf32>
    %250 = arith.addf %249, %248 : vector<8x64xf32>
    %251 = arith.mulf %240, %250 : vector<8x64xf32>
    %252 = arith.truncf %251 : vector<8x64xf32> to vector<8x64xbf16>
    %c0_90 = arith.constant 0 : index
    %c0_91 = arith.constant 0 : index
    %c0_92 = arith.constant 0 : index
    %253 = vector.load %arg16[%c0_90, %c0_91, %c0_92] : memref<1x64x32xbf16, #tpu.memory_space<vmem>>, vector<1x64x32xbf16>
    %254 = vector.shape_cast %253 : vector<1x64x32xbf16> to vector<64x32xbf16>
    %cst_93 = arith.constant dense<0.000000e+00> : vector<8x32xf32>
    %255 = tpu.matmul %252, %254, %cst_93 {dimension_numbers = #tpu.dot_dimension_numbers<[1], [0], [0], [1], [0, 0, 1, 1], [], []>} : vector<8x64xbf16>, vector<64x32xbf16>, vector<8x32xf32> -> vector<8x32xf32>
    %c0_94 = arith.constant 0 : index
    %c0_95 = arith.constant 0 : index
    %c0_96 = arith.constant 0 : index
    %256 = vector.load %arg17[%c0_94, %c0_95, %c0_96] : memref<1x1x32xf32, #tpu.memory_space<vmem>>, vector<1x1x32xf32>
    %257 = vector.shape_cast %256 : vector<1x1x32xf32> to vector<1x32xf32>
    %258 = vector.broadcast %257 : vector<1x32xf32> to vector<8x32xf32>
    %259 = arith.addf %255, %258 : vector<8x32xf32>
    %260 = arith.addf %259, %230 : vector<8x32xf32>
    %c0_97 = arith.constant 0 : index
    %c0_98 = arith.constant 0 : index
    %c0_99 = arith.constant 0 : index
    %261 = vector.load %arg18[%c0_97, %c0_98, %c0_99] : memref<1x1x32xf32, #tpu.memory_space<vmem>>, vector<1x1x32xf32>
    %262 = vector.shape_cast %261 : vector<1x1x32xf32> to vector<1x32xf32>
    %c0_100 = arith.constant 0 : index
    %c0_101 = arith.constant 0 : index
    %c0_102 = arith.constant 0 : index
    %263 = vector.load %arg19[%c0_100, %c0_101, %c0_102] : memref<1x1x32xf32, #tpu.memory_space<vmem>>, vector<1x1x32xf32>
    %264 = vector.shape_cast %263 : vector<1x1x32xf32> to vector<1x32xf32>
    %cst_103 = arith.constant dense<0.000000e+00> : vector<8xf32>
    %265 = vector.multi_reduction <add>, %260, %cst_103 [1] : vector<8x32xf32> to vector<8xf32>
    %266 = vector.shape_cast %265 : vector<8xf32> to vector<8x1xf32>
    %cst_104 = arith.constant 3.200000e+01 : f32
    %267 = vector.broadcast %cst_104 : f32 to vector<8x1xf32>
    %268 = arith.divf %266, %267 : vector<8x1xf32>
    %269 = vector.broadcast %268 : vector<8x1xf32> to vector<8x32xf32>
    %270 = arith.subf %260, %269 : vector<8x32xf32>
    %271 = vector.broadcast %268 : vector<8x1xf32> to vector<8x32xf32>
    %272 = arith.subf %260, %271 : vector<8x32xf32>
    %273 = arith.mulf %270, %272 : vector<8x32xf32>
    %cst_105 = arith.constant dense<0.000000e+00> : vector<8xf32>
    %274 = vector.multi_reduction <add>, %273, %cst_105 [1] : vector<8x32xf32> to vector<8xf32>
    %275 = vector.shape_cast %274 : vector<8xf32> to vector<8x1xf32>
    %cst_106 = arith.constant 3.200000e+01 : f32
    %276 = vector.broadcast %cst_106 : f32 to vector<8x1xf32>
    %277 = arith.divf %275, %276 : vector<8x1xf32>
    %278 = vector.broadcast %268 : vector<8x1xf32> to vector<8x32xf32>
    %279 = arith.subf %260, %278 : vector<8x32xf32>
    %cst_107 = arith.constant 9.99999996E-13 : f32
    %280 = vector.broadcast %cst_107 : f32 to vector<8x1xf32>
    %281 = arith.addf %277, %280 : vector<8x1xf32>
    %282 = math.rsqrt %281 : vector<8x1xf32>
    %283 = vector.broadcast %282 : vector<8x1xf32> to vector<8x32xf32>
    %284 = arith.mulf %279, %283 : vector<8x32xf32>
    %285 = vector.broadcast %262 : vector<1x32xf32> to vector<8x32xf32>
    %286 = arith.mulf %284, %285 : vector<8x32xf32>
    %287 = vector.broadcast %264 : vector<1x32xf32> to vector<8x32xf32>
    %288 = arith.addf %286, %287 : vector<8x32xf32>
    %c0_108 = arith.constant 0 : index
    %c0_109 = arith.constant 0 : index
    %289 = vector.load %arg27[%c0_108, %c0_109] : memref<8x32xf32, #tpu.memory_space<vmem>>, vector<8x32xf32>
    tpu.vector_store %arg27[%c0_108, %c0_109], %288 {strides = array<i32>} : memref<8x32xf32, #tpu.memory_space<vmem>>, vector<8x32xf32>,
    %c1_i32 = arith.constant 1 : i32
    %290 = arith.cmpi eq, %arg1, %c1_i32 : i32
    %291 = arith.extui %290 : i1 to i32
    %c0_i32_110 = arith.constant 0 : i32
    %292 = arith.cmpi ne, %291, %c0_i32_110 : i32
    scf.if %292 {
      %293 = vector.extract_strided_slice %288 {offsets = [0, 0], sizes = [1, 32], strides = [1, 1]} : vector<8x32xf32> to vector<1x32xf32>
      %294 = arith.truncf %293 : vector<1x32xf32> to vector<1x32xbf16>
      %c0_111 = arith.constant 0 : index
      %c0_112 = arith.constant 0 : index
      %295 = vector.load %arg22[%c0_111, %c0_112] : memref<32x32xbf16, #tpu.memory_space<vmem>>, vector<32x32xbf16>
      %cst_113 = arith.constant dense<0.000000e+00> : vector<1x32xf32>
      %296 = tpu.matmul %294, %295, %cst_113 {dimension_numbers = #tpu.dot_dimension_numbers<[1], [0], [0], [1], [0, 0, 1, 1], [], []>} : vector<1x32xbf16>, vector<32x32xbf16>, vector<1x32xf32> -> vector<1x32xf32>
      %c0_114 = arith.constant 0 : index
      %c0_115 = arith.constant 0 : index
      %297 = vector.load %arg23[%c0_114, %c0_115] : memref<1x32xf32, #tpu.memory_space<vmem>>, vector<1x32xf32>
      %298 = arith.addf %296, %297 : vector<1x32xf32>
      %299 = math.tanh %298 : vector<1x32xf32>
      %300 = arith.truncf %299 : vector<1x32xf32> to vector<1x32xbf16>
      %c0_116 = arith.constant 0 : index
      %c0_117 = arith.constant 0 : index
      %301 = vector.load %arg24[%c0_116, %c0_117] : memref<32x128xbf16, #tpu.memory_space<vmem>>, vector<32x128xbf16>
      %cst_118 = arith.constant dense<0.000000e+00> : vector<1x128xf32>
      %302 = tpu.matmul %300, %301, %cst_118 {dimension_numbers = #tpu.dot_dimension_numbers<[1], [0], [0], [1], [0, 0, 1, 1], [], []>} : vector<1x32xbf16>, vector<32x128xbf16>, vector<1x128xf32> -> vector<1x128xf32>
      %c0_119 = arith.constant 0 : index
      %c0_120 = arith.constant 0 : index
      %303 = vector.load %arg25[%c0_119, %c0_120] : memref<1x128xf32, #tpu.memory_space<vmem>>, vector<1x128xf32>
      %304 = arith.addf %302, %303 : vector<1x128xf32>
      %305 = vector.shape_cast %304 : vector<1x128xf32> to vector<1x128xf32>
      %306 = vector.broadcast %305 : vector<1x128xf32> to vector<8x128xf32>
      %c0_121 = arith.constant 0 : index
      %c0_122 = arith.constant 0 : index
      %c0_123 = arith.constant 0 : index
      %307 = vector.load %arg26[%c0_121, %c0_122, %c0_123] : memref<1x8x128xf32, #tpu.memory_space<vmem>>, vector<1x8x128xf32>
      %308 = vector.shape_cast %307 : vector<1x8x128xf32> to vector<8x128xf32>
      %309 = vector.shape_cast %306 : vector<8x128xf32> to vector<1x8x128xf32>
      tpu.vector_store %arg26[%c0_121, %c0_122, %c0_123], %309 {strides = array<i32>} : memref<1x8x128xf32, #tpu.memory_space<vmem>>, vector<1x8x128xf32>,
    } else {
    }
    return
  }
  func.func @transform_0(%arg0: i32, %arg1: i32) -> (i32, i32) {
    %c0_i32 = arith.constant 0 : i32
    %c0_i32_0 = arith.constant 0 : i32
    return %arg0, %c0_i32 : i32, i32
  }
  func.func @transform_1(%arg0: i32, %arg1: i32) -> (i32, i32, i32) {
    %c0_i32 = arith.constant 0 : i32
    %c0_i32_0 = arith.constant 0 : i32
    %c0_i32_1 = arith.constant 0 : i32
    return %arg0, %c0_i32, %c0_i32_0 : i32, i32, i32
  }
  func.func @transform_2(%arg0: i32, %arg1: i32) -> (i32, i32, i32, i32) {
    %c0_i32 = arith.constant 0 : i32
    %c0_i32_0 = arith.constant 0 : i32
    %c0_i32_1 = arith.constant 0 : i32
    %c0_i32_2 = arith.constant 0 : i32
    return %arg1, %c0_i32, %c0_i32_0, %c0_i32_1 : i32, i32, i32, i32
  }
  func.func @transform_3(%arg0: i32, %arg1: i32) -> (i32, i32, i32, i32) {
    %c0_i32 = arith.constant 0 : i32
    %c0_i32_0 = arith.constant 0 : i32
    %c0_i32_1 = arith.constant 0 : i32
    %c0_i32_2 = arith.constant 0 : i32
    return %arg1, %c0_i32, %c0_i32_0, %c0_i32_1 : i32, i32, i32, i32
  }
  func.func @transform_4(%arg0: i32, %arg1: i32) -> (i32, i32, i32, i32) {
    %c0_i32 = arith.constant 0 : i32
    %c0_i32_0 = arith.constant 0 : i32
    %c0_i32_1 = arith.constant 0 : i32
    %c0_i32_2 = arith.constant 0 : i32
    return %arg1, %c0_i32, %c0_i32_0, %c0_i32_1 : i32, i32, i32, i32
  }
  func.func @transform_5(%arg0: i32, %arg1: i32) -> (i32, i32, i32, i32) {
    %c0_i32 = arith.constant 0 : i32
    %c0_i32_0 = arith.constant 0 : i32
    %c0_i32_1 = arith.constant 0 : i32
    %c0_i32_2 = arith.constant 0 : i32
    return %arg1, %c0_i32, %c0_i32_0, %c0_i32_1 : i32, i32, i32, i32
  }
  func.func @transform_6(%arg0: i32, %arg1: i32) -> (i32, i32, i32, i32) {
    %c0_i32 = arith.constant 0 : i32
    %c0_i32_0 = arith.constant 0 : i32
    %c0_i32_1 = arith.constant 0 : i32
    %c0_i32_2 = arith.constant 0 : i32
    return %arg1, %c0_i32, %c0_i32_0, %c0_i32_1 : i32, i32, i32, i32
  }
  func.func @transform_7(%arg0: i32, %arg1: i32) -> (i32, i32, i32, i32) {
    %c0_i32 = arith.constant 0 : i32
    %c0_i32_0 = arith.constant 0 : i32
    %c0_i32_1 = arith.constant 0 : i32
    %c0_i32_2 = arith.constant 0 : i32
    return %arg1, %c0_i32, %c0_i32_0, %c0_i32_1 : i32, i32, i32, i32
  }
  func.func @transform_8(%arg0: i32, %arg1: i32) -> (i32, i32, i32, i32) {
    %c0_i32 = arith.constant 0 : i32
    %c0_i32_0 = arith.constant 0 : i32
    %c0_i32_1 = arith.constant 0 : i32
    %c0_i32_2 = arith.constant 0 : i32
    return %arg1, %c0_i32, %c0_i32_0, %c0_i32_1 : i32, i32, i32, i32
  }
  func.func @transform_9(%arg0: i32, %arg1: i32) -> (i32, i32, i32) {
    %c0_i32 = arith.constant 0 : i32
    %c0_i32_0 = arith.constant 0 : i32
    %c0_i32_1 = arith.constant 0 : i32
    return %arg1, %c0_i32, %c0_i32_0 : i32, i32, i32
  }
  func.func @transform_10(%arg0: i32, %arg1: i32) -> (i32, i32, i32) {
    %c0_i32 = arith.constant 0 : i32
    %c0_i32_0 = arith.constant 0 : i32
    %c0_i32_1 = arith.constant 0 : i32
    return %arg1, %c0_i32, %c0_i32_0 : i32, i32, i32
  }
  func.func @transform_11(%arg0: i32, %arg1: i32) -> (i32, i32, i32) {
    %c0_i32 = arith.constant 0 : i32
    %c0_i32_0 = arith.constant 0 : i32
    %c0_i32_1 = arith.constant 0 : i32
    return %arg1, %c0_i32, %c0_i32_0 : i32, i32, i32
  }
  func.func @transform_12(%arg0: i32, %arg1: i32) -> (i32, i32, i32) {
    %c0_i32 = arith.constant 0 : i32
    %c0_i32_0 = arith.constant 0 : i32
    %c0_i32_1 = arith.constant 0 : i32
    return %arg1, %c0_i32, %c0_i32_0 : i32, i32, i32
  }
  func.func @transform_13(%arg0: i32, %arg1: i32) -> (i32, i32, i32) {
    %c0_i32 = arith.constant 0 : i32
    %c0_i32_0 = arith.constant 0 : i32
    %c0_i32_1 = arith.constant 0 : i32
    return %arg1, %c0_i32, %c0_i32_0 : i32, i32, i32
  }
  func.func @transform_14(%arg0: i32, %arg1: i32) -> (i32, i32, i32) {
    %c0_i32 = arith.constant 0 : i32
    %c0_i32_0 = arith.constant 0 : i32
    %c0_i32_1 = arith.constant 0 : i32
    return %arg1, %c0_i32, %c0_i32_0 : i32, i32, i32
  }
  func.func @transform_15(%arg0: i32, %arg1: i32) -> (i32, i32, i32) {
    %c0_i32 = arith.constant 0 : i32
    %c0_i32_0 = arith.constant 0 : i32
    %c0_i32_1 = arith.constant 0 : i32
    return %arg1, %c0_i32, %c0_i32_0 : i32, i32, i32
  }
  func.func @transform_16(%arg0: i32, %arg1: i32) -> (i32, i32, i32) {
    %c0_i32 = arith.constant 0 : i32
    %c0_i32_0 = arith.constant 0 : i32
    %c0_i32_1 = arith.constant 0 : i32
    return %arg1, %c0_i32, %c0_i32_0 : i32, i32, i32
  }
  func.func @transform_17(%arg0: i32, %arg1: i32) -> (i32, i32, i32) {
    %c0_i32 = arith.constant 0 : i32
    %c0_i32_0 = arith.constant 0 : i32
    %c0_i32_1 = arith.constant 0 : i32
    return %arg1, %c0_i32, %c0_i32_0 : i32, i32, i32
  }
  func.func @transform_18(%arg0: i32, %arg1: i32) -> (i32, i32) {
    %c0_i32 = arith.constant 0 : i32
    %c0_i32_0 = arith.constant 0 : i32
    %c0_i32_1 = arith.constant 0 : i32
    return %c0_i32, %c0_i32_0 : i32, i32
  }
  func.func @transform_19(%arg0: i32, %arg1: i32) -> (i32, i32) {
    %c0_i32 = arith.constant 0 : i32
    %c0_i32_0 = arith.constant 0 : i32
    %c0_i32_1 = arith.constant 0 : i32
    return %c0_i32, %c0_i32_0 : i32, i32
  }
  func.func @transform_20(%arg0: i32, %arg1: i32) -> (i32, i32) {
    %c0_i32 = arith.constant 0 : i32
    %c0_i32_0 = arith.constant 0 : i32
    %c0_i32_1 = arith.constant 0 : i32
    return %c0_i32, %c0_i32_0 : i32, i32
  }
  func.func @transform_21(%arg0: i32, %arg1: i32) -> (i32, i32) {
    %c0_i32 = arith.constant 0 : i32
    %c0_i32_0 = arith.constant 0 : i32
    %c0_i32_1 = arith.constant 0 : i32
    return %c0_i32, %c0_i32_0 : i32, i32
  }
  func.func @transform_22(%arg0: i32, %arg1: i32) -> (i32, i32) {
    %c0_i32 = arith.constant 0 : i32
    %c0_i32_0 = arith.constant 0 : i32
    %c0_i32_1 = arith.constant 0 : i32
    return %c0_i32, %c0_i32_0 : i32, i32
  }
  func.func @transform_23(%arg0: i32, %arg1: i32) -> (i32, i32) {
    %c0_i32 = arith.constant 0 : i32
    %c0_i32_0 = arith.constant 0 : i32
    %c0_i32_1 = arith.constant 0 : i32
    return %c0_i32, %c0_i32_0 : i32, i32
  }
  func.func @transform_24(%arg0: i32, %arg1: i32) -> (i32, i32, i32) {
    %c0_i32 = arith.constant 0 : i32
    %c0_i32_0 = arith.constant 0 : i32
    %c0_i32_1 = arith.constant 0 : i32
    return %arg0, %c0_i32, %c0_i32_0 : i32, i32, i32
  }
}

</mosaic_0001>

<llo_original>
// kernel: model_forward.1
$region0: #{model_forward.1}
  #allocation0 [shape = 'u32[]', space=smem, size = 0x4, offset = 0x4, fixed_abs, tag = 'smem constant byte address 0x4 - core index']
  #allocation1 [shape = 'u32[144,128]{1,0:T(1,128)}', space=vmem, size = 0x12000, scoped, tag = 'internal scratch']
  #allocation2 [shape = 'f32[8,32]{1,0:T(8,128)}', space=vmem, size = 0x1000, scoped, tag = 'scratch operand']
  %s0 = inlined_call_operand.vmem [shape: f32[16,32], index: 0, kind: input, shape index: {}]
  %s1 = inlined_call_operand.vmem [shape: f32[2,1,8], index: 1, kind: input, shape index: {}]
  %s2 = inlined_call_operand.vmem [shape: bf16[2,4,32,8], index: 2, kind: input, shape index: {}]
  %s3 = inlined_call_operand.vmem [shape: f32[2,4,1,8], index: 3, kind: input, shape index: {}]
  %s4 = inlined_call_operand.vmem [shape: bf16[2,4,32,8], index: 4, kind: input, shape index: {}]
  %s5 = inlined_call_operand.vmem [shape: f32[2,4,1,8], index: 5, kind: input, shape index: {}]
  %s6 = inlined_call_operand.vmem [shape: bf16[2,4,32,8], index: 6, kind: input, shape index: {}]
  %s7 = inlined_call_operand.vmem [shape: f32[2,4,1,8], index: 7, kind: input, shape index: {}]
  %s8 = inlined_call_operand.vmem [shape: bf16[2,4,8,32], index: 8, kind: input, shape index: {}]
  %s9 = inlined_call_operand.vmem [shape: f32[2,1,32], index: 9, kind: input, shape index: {}]
  %s10 = inlined_call_operand.vmem [shape: f32[2,1,32], index: 10, kind: input, shape index: {}]
  %s11 = inlined_call_operand.vmem [shape: f32[2,1,32], index: 11, kind: input, shape index: {}]
  %s12 = inlined_call_operand.vmem [shape: bf16[2,32,64], index: 12, kind: input, shape index: {}]
  %s13 = inlined_call_operand.vmem [shape: f32[2,1,64], index: 13, kind: input, shape index: {}]
  %s14 = inlined_call_operand.vmem [shape: bf16[2,64,32], index: 14, kind: input, shape index: {}]
  %s15 = inlined_call_operand.vmem [shape: f32[2,1,32], index: 15, kind: input, shape index: {}]
  %s16 = inlined_call_operand.vmem [shape: f32[2,1,32], index: 16, kind: input, shape index: {}]
  %s17 = inlined_call_operand.vmem [shape: f32[2,1,32], index: 17, kind: input, shape index: {}]
  %s18 = inlined_call_operand.vmem [shape: f32[1,32], index: 18, kind: input, shape index: {}]
  %s19 = inlined_call_operand.vmem [shape: f32[1,32], index: 19, kind: input, shape index: {}]
  %s20 = inlined_call_operand.vmem [shape: bf16[32,32], index: 20, kind: input, shape index: {}]
  %s21 = inlined_call_operand.vmem [shape: f32[1,32], index: 21, kind: input, shape index: {}]
  %s22 = inlined_call_operand.vmem [shape: bf16[32,128], index: 22, kind: input, shape index: {}]
  %s23 = inlined_call_operand.vmem [shape: f32[1,128], index: 23, kind: input, shape index: {}]
  %s24 = inlined_call_operand.vmem [shape: f32[2,8,128], index: 24, kind: output, shape index: {}]
  %s25 = sld [smem:[#allocation0]]
  $region137: #{model_forward.1} parent=0
    _
  %s27 = ssub.s32 1, %s25
  %s28 = scalar_select 0, %s27, %s25
  loop: start=0, step=1, limit=6
  $region2: #{model_forward.1} parent=0 // loop_pre_header
    _
  $region3: #{model_forward.1} parent=0 // loop_header
    %s30 = sphi 0, %s34
    %p31 = scmp.ge.s32.totalorder %s30, 6
    %s37 = sphi 0, %s49
    %s38 = sphi 0, %s45
    %s39 = sphi 0, %s37
    %s40 = sphi 0, %s38
    %s41 = sphi 0, %s39
    %s42 = sphi 0, %s40
    %s52 = sphi 0, %s54
    %s55 = sphi 0, %s52
    %s56 = sphi 0, %s55
    %s72 = sphi 0, %s56
    %s78 = sphi 0, %s80
    %s81 = sphi 0, %s78
    %s82 = sphi 0, %s81
    %s98 = sphi 0, %s82
    %s104 = sphi 0, %s106
    %s107 = sphi 0, %s104
    %s108 = sphi 0, %s107
    %s124 = sphi 0, %s108
    %s130 = sphi 0, %s132
    %s133 = sphi 0, %s130
    %s134 = sphi 0, %s133
    %s150 = sphi 0, %s134
    %s156 = sphi 0, %s158
    %s159 = sphi 0, %s156
    %s160 = sphi 0, %s159
    %s176 = sphi 0, %s160
    %s182 = sphi 0, %s184
    %s185 = sphi 0, %s182
    %s186 = sphi 0, %s185
    %s202 = sphi 0, %s186
    %s208 = sphi 0, %s210
    %s211 = sphi 0, %s208
    %s212 = sphi 0, %s211
    %s228 = sphi 0, %s212
    %s234 = sphi 0, %s236
    %s237 = sphi 0, %s234
    %s238 = sphi 0, %s237
    %s254 = sphi 0, %s238
    %s260 = sphi 0, %s262
    %s263 = sphi 0, %s260
    %s264 = sphi 0, %s263
    %s280 = sphi 0, %s264
    %s286 = sphi 0, %s288
    %s289 = sphi 0, %s286
    %s290 = sphi 0, %s289
    %s306 = sphi 0, %s290
    %s312 = sphi 0, %s314
    %s315 = sphi 0, %s312
    %s316 = sphi 0, %s315
    %s332 = sphi 0, %s316
    %s338 = sphi 0, %s340
    %s341 = sphi 0, %s338
    %s342 = sphi 0, %s341
    %s358 = sphi 0, %s342
    %s364 = sphi 0, %s366
    %s367 = sphi 0, %s364
    %s368 = sphi 0, %s367
    %s384 = sphi 0, %s368
    %s390 = sphi 0, %s392
    %s393 = sphi 0, %s390
    %s394 = sphi 0, %s393
    %s410 = sphi 0, %s394
    %s416 = sphi 0, %s418
    %s419 = sphi 0, %s416
    %s420 = sphi 0, %s419
    %s436 = sphi 0, %s420
    %s442 = sphi 0, %s444
    %s445 = sphi 0, %s442
    %s446 = sphi 0, %s445
    %s462 = sphi 0, %s446
    %s468 = sphi 0, %s470
    %s471 = sphi 0, %s468
    %s472 = sphi 0, %s471
    %s488 = sphi 0, %s472
    %s494 = sphi 0, %s496
    %s497 = sphi 0, %s494
    %s498 = sphi 0, %s497
    %s514 = sphi 0, %s498
    %s518 = sphi 0, %s518
    %s520 = sphi 0, %s518
    %s521 = sphi 0, %s520
    %s535 = sphi 0, %s521
    %s539 = sphi 0, %s539
    %s541 = sphi 0, %s539
    %s542 = sphi 0, %s541
    %s556 = sphi 0, %s542
    %s560 = sphi 0, %s560
    %s562 = sphi 0, %s560
    %s563 = sphi 0, %s562
    %s577 = sphi 0, %s563
    %s581 = sphi 0, %s581
    %s583 = sphi 0, %s581
    %s584 = sphi 0, %s583
    %s598 = sphi 0, %s584
    %s602 = sphi 0, %s602
    %s604 = sphi 0, %s602
    %s605 = sphi 0, %s604
    %s619 = sphi 0, %s605
    %s623 = sphi 0, %s623
    %s625 = sphi 0, %s623
    %s626 = sphi 0, %s625
    %s640 = sphi 0, %s626
    %s646 = sphi 0, %s648
    %s649 = sphi 0, %s646
    %s650 = sphi 0, %s649
    %s666 = sphi 0, %s650
  $region4: #{model_forward.1} parent=0 // loop_header_branch
    %33 = sbr.rel (%p31) target = $region8
  $region5: #{model_forward.1} parent=0 // loop_body
    %s35 = ssub.s32 %s30, 1
    %s36 = ssub.s32 %s30, 2
    %s43 = sadd.s32 1, %s38
    %p44 = scmp.ge.s32.totalorder %s43, 2
    %s45 = scalar_select %p44, 0, %s43
    %s46 = sadd.s32 1, %s37
    %s47 = scalar_select %p44, %s46, %s37
    %p48 = scmp.ge.s32.totalorder %s47, 2
    %s49 = scalar_select %p48, 0, %s47
    %s50 = ssub.s32 %s37, %s49
    %p51 = scmp.eq.s32.totalorder %s50, 0
    %s53 = sadd.s32 %s52, 1
    %s54 = scalar_select %p51, %s52, %s53
    %p57 = pneg %p51
    %p58 = scmp.eq.s32.totalorder %s30, 3
    %p59 = por %p57, %p58
    %p60 = scmp.ne.s32.totalorder %s52, %s55
    %p61 = scmp.eq.s32.totalorder %s30, 0
    %p62 = por %p60, %p61
    %p63 = scmp.ne.s32.totalorder %s52, %s55
    %p64 = scmp.eq.s32.totalorder %s35, 3
    %p65 = por %p63, %p64
    %p66 = scmp.ne.s32.totalorder %s55, %s56
    %p67 = scmp.eq.s32.totalorder %s35, 0
    %p68 = por %p66, %p67
    %p69 = scmp.ne.s32.totalorder %s55, %s56
    %p70 = scmp.eq.s32.totalorder %s36, 3
    %p71 = por %p69, %p70
    %p73 = scmp.ne.s32.totalorder %s56, %s72
    %p74 = scmp.eq.s32.totalorder %s36, 0
    %p75 = por %p73, %p74
    %s76 = ssub.s32 %s37, %s49
    %p77 = scmp.eq.s32.totalorder %s76, 0
    %s79 = sadd.s32 %s78, 1
    %s80 = scalar_select %p77, %s78, %s79
    %p83 = pneg %p77
    %p84 = scmp.eq.s32.totalorder %s30, 3
    %p85 = por %p83, %p84
    %p86 = scmp.ne.s32.totalorder %s78, %s81
    %p87 = scmp.eq.s32.totalorder %s30, 0
    %p88 = por %p86, %p87
    %p89 = scmp.ne.s32.totalorder %s78, %s81
    %p90 = scmp.eq.s32.totalorder %s35, 3
    %p91 = por %p89, %p90
    %p92 = scmp.ne.s32.totalorder %s81, %s82
    %p93 = scmp.eq.s32.totalorder %s35, 0
    %p94 = por %p92, %p93
    %p95 = scmp.ne.s32.totalorder %s81, %s82
    %p96 = scmp.eq.s32.totalorder %s36, 3
    %p97 = por %p95, %p96
    %p99 = scmp.ne.s32.totalorder %s82, %s98
    %p100 = scmp.eq.s32.totalorder %s36, 0
    %p101 = por %p99, %p100
    %s102 = ssub.s32 %s38, %s45
    %p103 = scmp.eq.s32.totalorder %s102, 0
    %s105 = sadd.s32 %s104, 1
    %s106 = scalar_select %p103, %s104, %s105
    %p109 = pneg %p103
    %p110 = scmp.eq.s32.totalorder %s30, 3
    %p111 = por %p109, %p110
    %p112 = scmp.ne.s32.totalorder %s104, %s107
    %p113 = scmp.eq.s32.totalorder %s30, 0
    %p114 = por %p112, %p113
    %p115 = scmp.ne.s32.totalorder %s104, %s107
    %p116 = scmp.eq.s32.totalorder %s35, 3
    %p117 = por %p115, %p116
    %p118 = scmp.ne.s32.totalorder %s107, %s108
    %p119 = scmp.eq.s32.totalorder %s35, 0
    %p120 = por %p118, %p119
    %p121 = scmp.ne.s32.totalorder %s107, %s108
    %p122 = scmp.eq.s32.totalorder %s36, 3
    %p123 = por %p121, %p122
    %p125 = scmp.ne.s32.totalorder %s108, %s124
    %p126 = scmp.eq.s32.totalorder %s36, 0
    %p127 = por %p125, %p126
    %s128 = ssub.s32 %s38, %s45
    %p129 = scmp.eq.s32.totalorder %s128, 0
    %s131 = sadd.s32 %s130, 1
    %s132 = scalar_select %p129, %s130, %s131
    %p135 = pneg %p129
    %p136 = scmp.eq.s32.totalorder %s30, 3
    %p137 = por %p135, %p136
    %p138 = scmp.ne.s32.totalorder %s130, %s133
    %p139 = scmp.eq.s32.totalorder %s30, 0
    %p140 = por %p138, %p139
    %p141 = scmp.ne.s32.totalorder %s130, %s133
    %p142 = scmp.eq.s32.totalorder %s35, 3
    %p143 = por %p141, %p142
    %p144 = scmp.ne.s32.totalorder %s133, %s134
    %p145 = scmp.eq.s32.totalorder %s35, 0
    %p146 = por %p144, %p145
    %p147 = scmp.ne.s32.totalorder %s133, %s134
    %p148 = scmp.eq.s32.totalorder %s36, 3
    %p149 = por %p147, %p148
    %p151 = scmp.ne.s32.totalorder %s134, %s150
    %p152 = scmp.eq.s32.totalorder %s36, 0
    %p153 = por %p151, %p152
    %s154 = ssub.s32 %s38, %s45
    %p155 = scmp.eq.s32.totalorder %s154, 0
    %s157 = sadd.s32 %s156, 1
    %s158 = scalar_select %p155, %s156, %s157
    %p161 = pneg %p155
    %p162 = scmp.eq.s32.totalorder %s30, 3
    %p163 = por %p161, %p162
    %p164 = scmp.ne.s32.totalorder %s156, %s159
    %p165 = scmp.eq.s32.totalorder %s30, 0
    %p166 = por %p164, %p165
    %p167 = scmp.ne.s32.totalorder %s156, %s159
    %p168 = scmp.eq.s32.totalorder %s35, 3
    %p169 = por %p167, %p168
    %p170 = scmp.ne.s32.totalorder %s159, %s160
    %p171 = scmp.eq.s32.totalorder %s35, 0
    %p172 = por %p170, %p171
    %p173 = scmp.ne.s32.totalorder %s159, %s160
    %p174 = scmp.eq.s32.totalorder %s36, 3
    %p175 = por %p173, %p174
    %p177 = scmp.ne.s32.totalorder %s160, %s176
    %p178 = scmp.eq.s32.totalorder %s36, 0
    %p179 = por %p177, %p178
    %s180 = ssub.s32 %s38, %s45
    %p181 = scmp.eq.s32.totalorder %s180, 0
    %s183 = sadd.s32 %s182, 1
    %s184 = scalar_select %p181, %s182, %s183
    %p187 = pneg %p181
    %p188 = scmp.eq.s32.totalorder %s30, 3
    %p189 = por %p187, %p188
    %p190 = scmp.ne.s32.totalorder %s182, %s185
    %p191 = scmp.eq.s32.totalorder %s30, 0
    %p192 = por %p190, %p191
    %p193 = scmp.ne.s32.totalorder %s182, %s185
    %p194 = scmp.eq.s32.totalorder %s35, 3
    %p195 = por %p193, %p194
    %p196 = scmp.ne.s32.totalorder %s185, %s186
    %p197 = scmp.eq.s32.totalorder %s35, 0
    %p198 = por %p196, %p197
    %p199 = scmp.ne.s32.totalorder %s185, %s186
    %p200 = scmp.eq.s32.totalorder %s36, 3
    %p201 = por %p199, %p200
    %p203 = scmp.ne.s32.totalorder %s186, %s202
    %p204 = scmp.eq.s32.totalorder %s36, 0
    %p205 = por %p203, %p204
    %s206 = ssub.s32 %s38, %s45
    %p207 = scmp.eq.s32.totalorder %s206, 0
    %s209 = sadd.s32 %s208, 1
    %s210 = scalar_select %p207, %s208, %s209
    %p213 = pneg %p207
    %p214 = scmp.eq.s32.totalorder %s30, 3
    %p215 = por %p213, %p214
    %p216 = scmp.ne.s32.totalorder %s208, %s211
    %p217 = scmp.eq.s32.totalorder %s30, 0
    %p218 = por %p216, %p217
    %p219 = scmp.ne.s32.totalorder %s208, %s211
    %p220 = scmp.eq.s32.totalorder %s35, 3
    %p221 = por %p219, %p220
    %p222 = scmp.ne.s32.totalorder %s211, %s212
    %p223 = scmp.eq.s32.totalorder %s35, 0
    %p224 = por %p222, %p223
    %p225 = scmp.ne.s32.totalorder %s211, %s212
    %p226 = scmp.eq.s32.totalorder %s36, 3
    %p227 = por %p225, %p226
    %p229 = scmp.ne.s32.totalorder %s212, %s228
    %p230 = scmp.eq.s32.totalorder %s36, 0
    %p231 = por %p229, %p230
    %s232 = ssub.s32 %s38, %s45
    %p233 = scmp.eq.s32.totalorder %s232, 0
    %s235 = sadd.s32 %s234, 1
    %s236 = scalar_select %p233, %s234, %s235
    %p239 = pneg %p233
    %p240 = scmp.eq.s32.totalorder %s30, 3
    %p241 = por %p239, %p240
    %p242 = scmp.ne.s32.totalorder %s234, %s237
    %p243 = scmp.eq.s32.totalorder %s30, 0
    %p244 = por %p242, %p243
    %p245 = scmp.ne.s32.totalorder %s234, %s237
    %p246 = scmp.eq.s32.totalorder %s35, 3
    %p247 = por %p245, %p246
    %p248 = scmp.ne.s32.totalorder %s237, %s238
    %p249 = scmp.eq.s32.totalorder %s35, 0
    %p250 = por %p248, %p249
    %p251 = scmp.ne.s32.totalorder %s237, %s238
    %p252 = scmp.eq.s32.totalorder %s36, 3
    %p253 = por %p251, %p252
    %p255 = scmp.ne.s32.totalorder %s238, %s254
    %p256 = scmp.eq.s32.totalorder %s36, 0
    %p257 = por %p255, %p256
    %s258 = ssub.s32 %s38, %s45
    %p259 = scmp.eq.s32.totalorder %s258, 0
    %s261 = sadd.s32 %s260, 1
    %s262 = scalar_select %p259, %s260, %s261
    %p265 = pneg %p259
    %p266 = scmp.eq.s32.totalorder %s30, 3
    %p267 = por %p265, %p266
    %p268 = scmp.ne.s32.totalorder %s260, %s263
    %p269 = scmp.eq.s32.totalorder %s30, 0
    %p270 = por %p268, %p269
    %p271 = scmp.ne.s32.totalorder %s260, %s263
    %p272 = scmp.eq.s32.totalorder %s35, 3
    %p273 = por %p271, %p272
    %p274 = scmp.ne.s32.totalorder %s263, %s264
    %p275 = scmp.eq.s32.totalorder %s35, 0
    %p276 = por %p274, %p275
    %p277 = scmp.ne.s32.totalorder %s263, %s264
    %p278 = scmp.eq.s32.totalorder %s36, 3
    %p279 = por %p277, %p278
    %p281 = scmp.ne.s32.totalorder %s264, %s280
    %p282 = scmp.eq.s32.totalorder %s36, 0
    %p283 = por %p281, %p282
    %s284 = ssub.s32 %s38, %s45
    %p285 = scmp.eq.s32.totalorder %s284, 0
    %s287 = sadd.s32 %s286, 1
    %s288 = scalar_select %p285, %s286, %s287
    %p291 = pneg %p285
    %p292 = scmp.eq.s32.totalorder %s30, 3
    %p293 = por %p291, %p292
    %p294 = scmp.ne.s32.totalorder %s286, %s289
    %p295 = scmp.eq.s32.totalorder %s30, 0
    %p296 = por %p294, %p295
    %p297 = scmp.ne.s32.totalorder %s286, %s289
    %p298 = scmp.eq.s32.totalorder %s35, 3
    %p299 = por %p297, %p298
    %p300 = scmp.ne.s32.totalorder %s289, %s290
    %p301 = scmp.eq.s32.totalorder %s35, 0
    %p302 = por %p300, %p301
    %p303 = scmp.ne.s32.totalorder %s289, %s290
    %p304 = scmp.eq.s32.totalorder %s36, 3
    %p305 = por %p303, %p304
    %p307 = scmp.ne.s32.totalorder %s290, %s306
    %p308 = scmp.eq.s32.totalorder %s36, 0
    %p309 = por %p307, %p308
    %s310 = ssub.s32 %s38, %s45
    %p311 = scmp.eq.s32.totalorder %s310, 0
    %s313 = sadd.s32 %s312, 1
    %s314 = scalar_select %p311, %s312, %s313
    %p317 = pneg %p311
    %p318 = scmp.eq.s32.totalorder %s30, 3
    %p319 = por %p317, %p318
    %p320 = scmp.ne.s32.totalorder %s312, %s315
    %p321 = scmp.eq.s32.totalorder %s30, 0
    %p322 = por %p320, %p321
    %p323 = scmp.ne.s32.totalorder %s312, %s315
    %p324 = scmp.eq.s32.totalorder %s35, 3
    %p325 = por %p323, %p324
    %p326 = scmp.ne.s32.totalorder %s315, %s316
    %p327 = scmp.eq.s32.totalorder %s35, 0
    %p328 = por %p326, %p327
    %p329 = scmp.ne.s32.totalorder %s315, %s316
    %p330 = scmp.eq.s32.totalorder %s36, 3
    %p331 = por %p329, %p330
    %p333 = scmp.ne.s32.totalorder %s316, %s332
    %p334 = scmp.eq.s32.totalorder %s36, 0
    %p335 = por %p333, %p334
    %s336 = ssub.s32 %s38, %s45
    %p337 = scmp.eq.s32.totalorder %s336, 0
    %s339 = sadd.s32 %s338, 1
    %s340 = scalar_select %p337, %s338, %s339
    %p343 = pneg %p337
    %p344 = scmp.eq.s32.totalorder %s30, 3
    %p345 = por %p343, %p344
    %p346 = scmp.ne.s32.totalorder %s338, %s341
    %p347 = scmp.eq.s32.totalorder %s30, 0
    %p348 = por %p346, %p347
    %p349 = scmp.ne.s32.totalorder %s338, %s341
    %p350 = scmp.eq.s32.totalorder %s35, 3
    %p351 = por %p349, %p350
    %p352 = scmp.ne.s32.totalorder %s341, %s342
    %p353 = scmp.eq.s32.totalorder %s35, 0
    %p354 = por %p352, %p353
    %p355 = scmp.ne.s32.totalorder %s341, %s342
    %p356 = scmp.eq.s32.totalorder %s36, 3
    %p357 = por %p355, %p356
    %p359 = scmp.ne.s32.totalorder %s342, %s358
    %p360 = scmp.eq.s32.totalorder %s36, 0
    %p361 = por %p359, %p360
    %s362 = ssub.s32 %s38, %s45
    %p363 = scmp.eq.s32.totalorder %s362, 0
    %s365 = sadd.s32 %s364, 1
    %s366 = scalar_select %p363, %s364, %s365
    %p369 = pneg %p363
    %p370 = scmp.eq.s32.totalorder %s30, 3
    %p371 = por %p369, %p370
    %p372 = scmp.ne.s32.totalorder %s364, %s367
    %p373 = scmp.eq.s32.totalorder %s30, 0
    %p374 = por %p372, %p373
    %p375 = scmp.ne.s32.totalorder %s364, %s367
    %p376 = scmp.eq.s32.totalorder %s35, 3
    %p377 = por %p375, %p376
    %p378 = scmp.ne.s32.totalorder %s367, %s368
    %p379 = scmp.eq.s32.totalorder %s35, 0
    %p380 = por %p378, %p379
    %p381 = scmp.ne.s32.totalorder %s367, %s368
    %p382 = scmp.eq.s32.totalorder %s36, 3
    %p383 = por %p381, %p382
    %p385 = scmp.ne.s32.totalorder %s368, %s384
    %p386 = scmp.eq.s32.totalorder %s36, 0
    %p387 = por %p385, %p386
    %s388 = ssub.s32 %s38, %s45
    %p389 = scmp.eq.s32.totalorder %s388, 0
    %s391 = sadd.s32 %s390, 1
    %s392 = scalar_select %p389, %s390, %s391
    %p395 = pneg %p389
    %p396 = scmp.eq.s32.totalorder %s30, 3
    %p397 = por %p395, %p396
    %p398 = scmp.ne.s32.totalorder %s390, %s393
    %p399 = scmp.eq.s32.totalorder %s30, 0
    %p400 = por %p398, %p399
    %p401 = scmp.ne.s32.totalorder %s390, %s393
    %p402 = scmp.eq.s32.totalorder %s35, 3
    %p403 = por %p401, %p402
    %p404 = scmp.ne.s32.totalorder %s393, %s394
    %p405 = scmp.eq.s32.totalorder %s35, 0
    %p406 = por %p404, %p405
    %p407 = scmp.ne.s32.totalorder %s393, %s394
    %p408 = scmp.eq.s32.totalorder %s36, 3
    %p409 = por %p407, %p408
    %p411 = scmp.ne.s32.totalorder %s394, %s410
    %p412 = scmp.eq.s32.totalorder %s36, 0
    %p413 = por %p411, %p412
    %s414 = ssub.s32 %s38, %s45
    %p415 = scmp.eq.s32.totalorder %s414, 0
    %s417 = sadd.s32 %s416, 1
    %s418 = scalar_select %p415, %s416, %s417
    %p421 = pneg %p415
    %p422 = scmp.eq.s32.totalorder %s30, 3
    %p423 = por %p421, %p422
    %p424 = scmp.ne.s32.totalorder %s416, %s419
    %p425 = scmp.eq.s32.totalorder %s30, 0
    %p426 = por %p424, %p425
    %p427 = scmp.ne.s32.totalorder %s416, %s419
    %p428 = scmp.eq.s32.totalorder %s35, 3
    %p429 = por %p427, %p428
    %p430 = scmp.ne.s32.totalorder %s419, %s420
    %p431 = scmp.eq.s32.totalorder %s35, 0
    %p432 = por %p430, %p431
    %p433 = scmp.ne.s32.totalorder %s419, %s420
    %p434 = scmp.eq.s32.totalorder %s36, 3
    %p435 = por %p433, %p434
    %p437 = scmp.ne.s32.totalorder %s420, %s436
    %p438 = scmp.eq.s32.totalorder %s36, 0
    %p439 = por %p437, %p438
    %s440 = ssub.s32 %s38, %s45
    %p441 = scmp.eq.s32.totalorder %s440, 0
    %s443 = sadd.s32 %s442, 1
    %s444 = scalar_select %p441, %s442, %s443
    %p447 = pneg %p441
    %p448 = scmp.eq.s32.totalorder %s30, 3
    %p449 = por %p447, %p448
    %p450 = scmp.ne.s32.totalorder %s442, %s445
    %p451 = scmp.eq.s32.totalorder %s30, 0
    %p452 = por %p450, %p451
    %p453 = scmp.ne.s32.totalorder %s442, %s445
    %p454 = scmp.eq.s32.totalorder %s35, 3
    %p455 = por %p453, %p454
    %p456 = scmp.ne.s32.totalorder %s445, %s446
    %p457 = scmp.eq.s32.totalorder %s35, 0
    %p458 = por %p456, %p457
    %p459 = scmp.ne.s32.totalorder %s445, %s446
    %p460 = scmp.eq.s32.totalorder %s36, 3
    %p461 = por %p459, %p460
    %p463 = scmp.ne.s32.totalorder %s446, %s462
    %p464 = scmp.eq.s32.totalorder %s36, 0
    %p465 = por %p463, %p464
    %s466 = ssub.s32 %s38, %s45
    %p467 = scmp.eq.s32.totalorder %s466, 0
    %s469 = sadd.s32 %s468, 1
    %s470 = scalar_select %p467, %s468, %s469
    %p473 = pneg %p467
    %p474 = scmp.eq.s32.totalorder %s30, 3
    %p475 = por %p473, %p474
    %p476 = scmp.ne.s32.totalorder %s468, %s471
    %p477 = scmp.eq.s32.totalorder %s30, 0
    %p478 = por %p476, %p477
    %p479 = scmp.ne.s32.totalorder %s468, %s471
    %p480 = scmp.eq.s32.totalorder %s35, 3
    %p481 = por %p479, %p480
    %p482 = scmp.ne.s32.totalorder %s471, %s472
    %p483 = scmp.eq.s32.totalorder %s35, 0
    %p484 = por %p482, %p483
    %p485 = scmp.ne.s32.totalorder %s471, %s472
    %p486 = scmp.eq.s32.totalorder %s36, 3
    %p487 = por %p485, %p486
    %p489 = scmp.ne.s32.totalorder %s472, %s488
    %p490 = scmp.eq.s32.totalorder %s36, 0
    %p491 = por %p489, %p490
    %s492 = ssub.s32 %s38, %s45
    %p493 = scmp.eq.s32.totalorder %s492, 0
    %s495 = sadd.s32 %s494, 1
    %s496 = scalar_select %p493, %s494, %s495
    %p499 = pneg %p493
    %p500 = scmp.eq.s32.totalorder %s30, 3
    %p501 = por %p499, %p500
    %p502 = scmp.ne.s32.totalorder %s494, %s497
    %p503 = scmp.eq.s32.totalorder %s30, 0
    %p504 = por %p502, %p503
    %p505 = scmp.ne.s32.totalorder %s494, %s497
    %p506 = scmp.eq.s32.totalorder %s35, 3
    %p507 = por %p505, %p506
    %p508 = scmp.ne.s32.totalorder %s497, %s498
    %p509 = scmp.eq.s32.totalorder %s35, 0
    %p510 = por %p508, %p509
    %p511 = scmp.ne.s32.totalorder %s497, %s498
    %p512 = scmp.eq.s32.totalorder %s36, 3
    %p513 = por %p511, %p512
    %p515 = scmp.ne.s32.totalorder %s498, %s514
    %p516 = scmp.eq.s32.totalorder %s36, 0
    %p517 = por %p515, %p516
    %s519 = sadd.s32 %s518, 1
    %p522 = scmp.eq.s32.totalorder %s30, 3
    %p523 = scmp.ne.s32.totalorder %s518, %s520
    %p524 = scmp.eq.s32.totalorder %s30, 0
    %p525 = por %p523, %p524
    %p526 = scmp.ne.s32.totalorder %s518, %s520
    %p527 = scmp.eq.s32.totalorder %s35, 3
    %p528 = por %p526, %p527
    %p529 = scmp.ne.s32.totalorder %s520, %s521
    %p530 = scmp.eq.s32.totalorder %s35, 0
    %p531 = por %p529, %p530
    %p532 = scmp.ne.s32.totalorder %s520, %s521
    %p533 = scmp.eq.s32.totalorder %s36, 3
    %p534 = por %p532, %p533
    %p536 = scmp.ne.s32.totalorder %s521, %s535
    %p537 = scmp.eq.s32.totalorder %s36, 0
    %p538 = por %p536, %p537
    %s540 = sadd.s32 %s539, 1
    %p543 = scmp.eq.s32.totalorder %s30, 3
    %p544 = scmp.ne.s32.totalorder %s539, %s541
    %p545 = scmp.eq.s32.totalorder %s30, 0
    %p546 = por %p544, %p545
    %p547 = scmp.ne.s32.totalorder %s539, %s541
    %p548 = scmp.eq.s32.totalorder %s35, 3
    %p549 = por %p547, %p548
    %p550 = scmp.ne.s32.totalorder %s541, %s542
    %p551 = scmp.eq.s32.totalorder %s35, 0
    %p552 = por %p550, %p551
    %p553 = scmp.ne.s32.totalorder %s541, %s542
    %p554 = scmp.eq.s32.totalorder %s36, 3
    %p555 = por %p553, %p554
    %p557 = scmp.ne.s32.totalorder %s542, %s556
    %p558 = scmp.eq.s32.totalorder %s36, 0
    %p559 = por %p557, %p558
    %s561 = sadd.s32 %s560, 1
    %p564 = scmp.eq.s32.totalorder %s30, 3
    %p565 = scmp.ne.s32.totalorder %s560, %s562
    %p566 = scmp.eq.s32.totalorder %s30, 0
    %p567 = por %p565, %p566
    %p568 = scmp.ne.s32.totalorder %s560, %s562
    %p569 = scmp.eq.s32.totalorder %s35, 3
    %p570 = por %p568, %p569
    %p571 = scmp.ne.s32.totalorder %s562, %s563
    %p572 = scmp.eq.s32.totalorder %s35, 0
    %p573 = por %p571, %p572
    %p574 = scmp.ne.s32.totalorder %s562, %s563
    %p575 = scmp.eq.s32.totalorder %s36, 3
    %p576 = por %p574, %p575
    %p578 = scmp.ne.s32.totalorder %s563, %s577
    %p579 = scmp.eq.s32.totalorder %s36, 0
    %p580 = por %p578, %p579
    %s582 = sadd.s32 %s581, 1
    %p585 = scmp.eq.s32.totalorder %s30, 3
    %p586 = scmp.ne.s32.totalorder %s581, %s583
    %p587 = scmp.eq.s32.totalorder %s30, 0
    %p588 = por %p586, %p587
    %p589 = scmp.ne.s32.totalorder %s581, %s583
    %p590 = scmp.eq.s32.totalorder %s35, 3
    %p591 = por %p589, %p590
    %p592 = scmp.ne.s32.totalorder %s583, %s584
    %p593 = scmp.eq.s32.totalorder %s35, 0
    %p594 = por %p592, %p593
    %p595 = scmp.ne.s32.totalorder %s583, %s584
    %p596 = scmp.eq.s32.totalorder %s36, 3
    %p597 = por %p595, %p596
    %p599 = scmp.ne.s32.totalorder %s584, %s598
    %p600 = scmp.eq.s32.totalorder %s36, 0
    %p601 = por %p599, %p600
    %s603 = sadd.s32 %s602, 1
    %p606 = scmp.eq.s32.totalorder %s30, 3
    %p607 = scmp.ne.s32.totalorder %s602, %s604
    %p608 = scmp.eq.s32.totalorder %s30, 0
    %p609 = por %p607, %p608
    %p610 = scmp.ne.s32.totalorder %s602, %s604
    %p611 = scmp.eq.s32.totalorder %s35, 3
    %p612 = por %p610, %p611
    %p613 = scmp.ne.s32.totalorder %s604, %s605
    %p614 = scmp.eq.s32.totalorder %s35, 0
    %p615 = por %p613, %p614
    %p616 = scmp.ne.s32.totalorder %s604, %s605
    %p617 = scmp.eq.s32.totalorder %s36, 3
    %p618 = por %p616, %p617
    %p620 = scmp.ne.s32.totalorder %s605, %s619
    %p621 = scmp.eq.s32.totalorder %s36, 0
    %p622 = por %p620, %p621
    %s624 = sadd.s32 %s623, 1
    %p627 = scmp.eq.s32.totalorder %s30, 3
    %p628 = scmp.ne.s32.totalorder %s623, %s625
    %p629 = scmp.eq.s32.totalorder %s30, 0
    %p630 = por %p628, %p629
    %p631 = scmp.ne.s32.totalorder %s623, %s625
    %p632 = scmp.eq.s32.totalorder %s35, 3
    %p633 = por %p631, %p632
    %p634 = scmp.ne.s32.totalorder %s625, %s626
    %p635 = scmp.eq.s32.totalorder %s35, 0
    %p636 = por %p634, %p635
    %p637 = scmp.ne.s32.totalorder %s625, %s626
    %p638 = scmp.eq.s32.totalorder %s36, 3
    %p639 = por %p637, %p638
    %p641 = scmp.ne.s32.totalorder %s626, %s640
    %p642 = scmp.eq.s32.totalorder %s36, 0
    %p643 = por %p641, %p642
    %s644 = ssub.s32 %s37, %s49
    %p645 = scmp.eq.s32.totalorder %s644, 0
    %s647 = sadd.s32 %s646, 1
    %s648 = scalar_select %p645, %s646, %s647
    %p651 = pneg %p645
    %p652 = scmp.eq.s32.totalorder %s30, 3
    %p653 = por %p651, %p652
    %p654 = scmp.ne.s32.totalorder %s646, %s649
    %p655 = scmp.eq.s32.totalorder %s30, 0
    %p656 = por %p654, %p655
    %p657 = scmp.ne.s32.totalorder %s646, %s649
    %p658 = scmp.eq.s32.totalorder %s35, 3
    %p659 = por %p657, %p658
    %p660 = scmp.ne.s32.totalorder %s649, %s650
    %p661 = scmp.eq.s32.totalorder %s35, 0
    %p662 = por %p660, %p661
    %p663 = scmp.ne.s32.totalorder %s649, %s650
    %p664 = scmp.eq.s32.totalorder %s36, 3
    %p665 = por %p663, %p664
    %p667 = scmp.ne.s32.totalorder %s650, %s666
    %p668 = scmp.eq.s32.totalorder %s36, 0
    %p669 = por %p667, %p668
    %p670 = scmp.le.s32.totalorder 1, %s30
    %p671 = scmp.lt.s32.totalorder %s30, 5
    %p672 = pnand %p670, %p671
    %p673 = pneg %p672
    // Predicated region
    $region9: #{model_forward.1} parent=5 // pred_check
      _
    $region10: #{model_forward.1} parent=5 // pred_check_branch
      %675 = sbr.rel (%p672) target = $region12
    $region11: #{model_forward.1} parent=5 // pred_region
      %s676 = ssub.s32 %s30, 1
      // Predicated region
      $region13: #{model_forward.1} parent=11 // pred_check
        %p677 = pneg %p531
      $region14: #{model_forward.1} parent=11 // pred_check_branch
        %679 = sbr.rel (%p677) target = $region16
      $region15: #{model_forward.1} parent=11 // pred_region
        _
      $region16: #{model_forward.1} parent=11 // pred_fallthru
        _
      // Predicated region
      $region17: #{model_forward.1} parent=11 // pred_check
        %p680 = pneg %p552
      $region18: #{model_forward.1} parent=11 // pred_check_branch
        %682 = sbr.rel (%p680) target = $region20
      $region19: #{model_forward.1} parent=11 // pred_region
        _
      $region20: #{model_forward.1} parent=11 // pred_fallthru
        _
      // Predicated region
      $region21: #{model_forward.1} parent=11 // pred_check
        %p683 = pneg %p573
      $region22: #{model_forward.1} parent=11 // pred_check_branch
        %685 = sbr.rel (%p683) target = $region24
      $region23: #{model_forward.1} parent=11 // pred_region
        _
      $region24: #{model_forward.1} parent=11 // pred_fallthru
        _
      // Predicated region
      $region25: #{model_forward.1} parent=11 // pred_check
        %p686 = pneg %p594
      $region26: #{model_forward.1} parent=11 // pred_check_branch
        %688 = sbr.rel (%p686) target = $region28
      $region27: #{model_forward.1} parent=11 // pred_region
        _
      $region28: #{model_forward.1} parent=11 // pred_fallthru
        _
      // Predicated region
      $region29: #{model_forward.1} parent=11 // pred_check
        %p689 = pneg %p615
      $region30: #{model_forward.1} parent=11 // pred_check_branch
        %691 = sbr.rel (%p689) target = $region32
      $region31: #{model_forward.1} parent=11 // pred_region
        _
      $region32: #{model_forward.1} parent=11 // pred_fallthru
        _
      // Predicated region
      $region33: #{model_forward.1} parent=11 // pred_check
        %p692 = pneg %p636
      $region34: #{model_forward.1} parent=11 // pred_check_branch
        %694 = sbr.rel (%p692) target = $region36
      $region35: #{model_forward.1} parent=11 // pred_region
        _
      $region36: #{model_forward.1} parent=11 // pred_fallthru
        _
    $region12: #{model_forward.1} parent=5 // pred_fallthru
      _
    %p695 = scmp.lt.s32.totalorder %s30, 4
    // Predicated region
    $region37: #{model_forward.1} parent=5 // pred_check
      %p696 = pneg %p695
    $region38: #{model_forward.1} parent=5 // pred_check_branch
      %698 = sbr.rel (%p696) target = $region40
    $region39: #{model_forward.1} parent=5 // pred_region
      // Predicated region
      $region41: #{model_forward.1} parent=39 // pred_check
        %p699 = pneg %p62
      $region42: #{model_forward.1} parent=39 // pred_check_branch
        %701 = sbr.rel (%p699) target = $region44
      $region43: #{model_forward.1} parent=39 // pred_region
        %p702 = scmp.lt.s32.totalorder %s37, 1
        %s703 = scalar_select %p702, %s37, 1
        %s704 = smul.addr %s703, 8
        %s705 = scalar_lea.vmem %s0, %s704
      $region44: #{model_forward.1} parent=39 // pred_fallthru
        _
      // Predicated region
      $region45: #{model_forward.1} parent=39 // pred_check
        %p706 = pneg %p88
      $region46: #{model_forward.1} parent=39 // pred_check_branch
        %708 = sbr.rel (%p706) target = $region48
      $region47: #{model_forward.1} parent=39 // pred_region
        %p709 = scmp.lt.s32.totalorder %s37, 1
        %s710 = scalar_select %p709, %s37, 1
        %s711 = scalar_lea.vmem %s1, %s710
      $region48: #{model_forward.1} parent=39 // pred_fallthru
        _
      // Predicated region
      $region49: #{model_forward.1} parent=39 // pred_check
        %p712 = pneg %p114
      $region50: #{model_forward.1} parent=39 // pred_check_branch
        %714 = sbr.rel (%p712) target = $region52
      $region51: #{model_forward.1} parent=39 // pred_region
        %p715 = scmp.lt.s32.totalorder %s38, 1
        %s716 = scalar_select %p715, %s38, 1
        %s717 = smul.addr %s716, 16
        %s718 = smul.addr %s717, 4
        %s719 = scalar_lea.vmem %s2, %s718
      $region52: #{model_forward.1} parent=39 // pred_fallthru
        _
      // Predicated region
      $region53: #{model_forward.1} parent=39 // pred_check
        %p720 = pneg %p140
      $region54: #{model_forward.1} parent=39 // pred_check_branch
        %722 = sbr.rel (%p720) target = $region56
      $region55: #{model_forward.1} parent=39 // pred_region
        %p723 = scmp.lt.s32.totalorder %s38, 1
        %s724 = scalar_select %p723, %s38, 1
        %s725 = smul.addr %s724, 4
        %s726 = scalar_lea.vmem %s3, %s725
      $region56: #{model_forward.1} parent=39 // pred_fallthru
        _
      // Predicated region
      $region57: #{model_forward.1} parent=39 // pred_check
        %p727 = pneg %p166
      $region58: #{model_forward.1} parent=39 // pred_check_branch
        %729 = sbr.rel (%p727) target = $region60
      $region59: #{model_forward.1} parent=39 // pred_region
        %p730 = scmp.lt.s32.totalorder %s38, 1
        %s731 = scalar_select %p730, %s38, 1
        %s732 = smul.addr %s731, 16
        %s733 = smul.addr %s732, 4
        %s734 = scalar_lea.vmem %s4, %s733
      $region60: #{model_forward.1} parent=39 // pred_fallthru
        _
      // Predicated region
      $region61: #{model_forward.1} parent=39 // pred_check
        %p735 = pneg %p192
      $region62: #{model_forward.1} parent=39 // pred_check_branch
        %737 = sbr.rel (%p735) target = $region64
      $region63: #{model_forward.1} parent=39 // pred_region
        %p738 = scmp.lt.s32.totalorder %s38, 1
        %s739 = scalar_select %p738, %s38, 1
        %s740 = smul.addr %s739, 4
        %s741 = scalar_lea.vmem %s5, %s740
      $region64: #{model_forward.1} parent=39 // pred_fallthru
        _
      // Predicated region
      $region65: #{model_forward.1} parent=39 // pred_check
        %p742 = pneg %p218
      $region66: #{model_forward.1} parent=39 // pred_check_branch
        %744 = sbr.rel (%p742) target = $region68
      $region67: #{model_forward.1} parent=39 // pred_region
        %p745 = scmp.lt.s32.totalorder %s38, 1
        %s746 = scalar_select %p745, %s38, 1
        %s747 = smul.addr %s746, 16
        %s748 = smul.addr %s747, 4
        %s749 = scalar_lea.vmem %s6, %s748
      $region68: #{model_forward.1} parent=39 // pred_fallthru
        _
      // Predicated region
      $region69: #{model_forward.1} parent=39 // pred_check
        %p750 = pneg %p244
      $region70: #{model_forward.1} parent=39 // pred_check_branch
        %752 = sbr.rel (%p750) target = $region72
      $region71: #{model_forward.1} parent=39 // pred_region
        %p753 = scmp.lt.s32.totalorder %s38, 1
        %s754 = scalar_select %p753, %s38, 1
        %s755 = smul.addr %s754, 4
        %s756 = scalar_lea.vmem %s7, %s755
      $region72: #{model_forward.1} parent=39 // pred_fallthru
        _
      // Predicated region
      $region73: #{model_forward.1} parent=39 // pred_check
        %p757 = pneg %p270
      $region74: #{model_forward.1} parent=39 // pred_check_branch
        %759 = sbr.rel (%p757) target = $region76
      $region75: #{model_forward.1} parent=39 // pred_region
        %p760 = scmp.lt.s32.totalorder %s38, 1
        %s761 = scalar_select %p760, %s38, 1
        %s762 = smul.addr %s761, 4
        %s763 = smul.addr %s762, 4
        %s764 = scalar_lea.vmem %s8, %s763
      $region76: #{model_forward.1} parent=39 // pred_fallthru
        _
      // Predicated region
      $region77: #{model_forward.1} parent=39 // pred_check
        %p765 = pneg %p296
      $region78: #{model_forward.1} parent=39 // pred_check_branch
        %767 = sbr.rel (%p765) target = $region80
      $region79: #{model_forward.1} parent=39 // pred_region
        %p768 = scmp.lt.s32.totalorder %s38, 1
        %s769 = scalar_select %p768, %s38, 1
        %s770 = scalar_lea.vmem %s9, %s769
      $region80: #{model_forward.1} parent=39 // pred_fallthru
        _
      // Predicated region
      $region81: #{model_forward.1} parent=39 // pred_check
        %p771 = pneg %p322
      $region82: #{model_forward.1} parent=39 // pred_check_branch
        %773 = sbr.rel (%p771) target = $region84
      $region83: #{model_forward.1} parent=39 // pred_region
        %p774 = scmp.lt.s32.totalorder %s38, 1
        %s775 = scalar_select %p774, %s38, 1
        %s776 = scalar_lea.vmem %s10, %s775
      $region84: #{model_forward.1} parent=39 // pred_fallthru
        _
      // Predicated region
      $region85: #{model_forward.1} parent=39 // pred_check
        %p777 = pneg %p348
      $region86: #{model_forward.1} parent=39 // pred_check_branch
        %779 = sbr.rel (%p777) target = $region88
      $region87: #{model_forward.1} parent=39 // pred_region
        %p780 = scmp.lt.s32.totalorder %s38, 1
        %s781 = scalar_select %p780, %s38, 1
        %s782 = scalar_lea.vmem %s11, %s781
      $region88: #{model_forward.1} parent=39 // pred_fallthru
        _
      // Predicated region
      $region89: #{model_forward.1} parent=39 // pred_check
        %p783 = pneg %p374
      $region90: #{model_forward.1} parent=39 // pred_check_branch
        %785 = sbr.rel (%p783) target = $region92
      $region91: #{model_forward.1} parent=39 // pred_region
        %p786 = scmp.lt.s32.totalorder %s38, 1
        %s787 = scalar_select %p786, %s38, 1
        %s788 = smul.addr %s787, 4
        %s789 = smul.addr %s788, 4
        %s790 = scalar_lea.vmem %s12, %s789
      $region92: #{model_forward.1} parent=39 // pred_fallthru
        _
      // Predicated region
      $region93: #{model_forward.1} parent=39 // pred_check
        %p791 = pneg %p400
      $region94: #{model_forward.1} parent=39 // pred_check_branch
        %793 = sbr.rel (%p791) target = $region96
      $region95: #{model_forward.1} parent=39 // pred_region
        %p794 = scmp.lt.s32.totalorder %s38, 1
        %s795 = scalar_select %p794, %s38, 1
        %s796 = scalar_lea.vmem %s13, %s795
      $region96: #{model_forward.1} parent=39 // pred_fallthru
        _
      // Predicated region
      $region97: #{model_forward.1} parent=39 // pred_check
        %p797 = pneg %p426
      $region98: #{model_forward.1} parent=39 // pred_check_branch
        %799 = sbr.rel (%p797) target = $region100
      $region99: #{model_forward.1} parent=39 // pred_region
        %p800 = scmp.lt.s32.totalorder %s38, 1
        %s801 = scalar_select %p800, %s38, 1
        %s802 = smul.addr %s801, 8
        %s803 = smul.addr %s802, 4
        %s804 = scalar_lea.vmem %s14, %s803
      $region100: #{model_forward.1} parent=39 // pred_fallthru
        _
      // Predicated region
      $region101: #{model_forward.1} parent=39 // pred_check
        %p805 = pneg %p452
      $region102: #{model_forward.1} parent=39 // pred_check_branch
        %807 = sbr.rel (%p805) target = $region104
      $region103: #{model_forward.1} parent=39 // pred_region
        %p808 = scmp.lt.s32.totalorder %s38, 1
        %s809 = scalar_select %p808, %s38, 1
        %s810 = scalar_lea.vmem %s15, %s809
      $region104: #{model_forward.1} parent=39 // pred_fallthru
        _
      // Predicated region
      $region105: #{model_forward.1} parent=39 // pred_check
        %p811 = pneg %p478
      $region106: #{model_forward.1} parent=39 // pred_check_branch
        %813 = sbr.rel (%p811) target = $region108
      $region107: #{model_forward.1} parent=39 // pred_region
        %p814 = scmp.lt.s32.totalorder %s38, 1
        %s815 = scalar_select %p814, %s38, 1
        %s816 = scalar_lea.vmem %s16, %s815
      $region108: #{model_forward.1} parent=39 // pred_fallthru
        _
      // Predicated region
      $region109: #{model_forward.1} parent=39 // pred_check
        %p817 = pneg %p504
      $region110: #{model_forward.1} parent=39 // pred_check_branch
        %819 = sbr.rel (%p817) target = $region112
      $region111: #{model_forward.1} parent=39 // pred_region
        %p820 = scmp.lt.s32.totalorder %s38, 1
        %s821 = scalar_select %p820, %s38, 1
        %s822 = scalar_lea.vmem %s17, %s821
      $region112: #{model_forward.1} parent=39 // pred_fallthru
        _
    $region40: #{model_forward.1} parent=5 // pred_fallthru
      _
    %p823 = scmp.le.s32.totalorder 1, %s30
    %p824 = scmp.lt.s32.totalorder %s30, 5
    %p825 = pnand %p823, %p824
    %p826 = pneg %p825
    // Predicated region
    $region113: #{model_forward.1} parent=5 // pred_check
      _
    $region114: #{model_forward.1} parent=5 // pred_check_branch
      %828 = sbr.rel (%p825) target = $region116
    $region115: #{model_forward.1} parent=5 // pred_region
      %s829 = ssub.s32 %s30, 1
      %p830 = scmp.lt.s32.totalorder %s39, 1
      %s831 = scalar_select %p830, %s39, 1
      %s832 = smul.addr %s831, 8
      %s833 = scalar_lea.vmem %s0, %s832
      %p834 = pneg %p68
      %p835 = pneg %p65
      %p836 = scmp.lt.s32.totalorder %s39, 1
      %s837 = scalar_select %p836, %s39, 1
      %s838 = scalar_lea.vmem %s1, %s837
      %p839 = pneg %p94
      %p840 = pneg %p91
      %p841 = scmp.lt.s32.totalorder %s40, 1
      %s842 = scalar_select %p841, %s40, 1
      %s843 = smul.addr %s842, 16
      %s844 = smul.addr %s843, 4
      %s845 = scalar_lea.vmem %s2, %s844
      %p846 = pneg %p120
      %p847 = pneg %p117
      %p848 = scmp.lt.s32.totalorder %s40, 1
      %s849 = scalar_select %p848, %s40, 1
      %s850 = smul.addr %s849, 4
      %s851 = scalar_lea.vmem %s3, %s850
      %p852 = pneg %p146
      %p853 = pneg %p143
      %p854 = scmp.lt.s32.totalorder %s40, 1
      %s855 = scalar_select %p854, %s40, 1
      %s856 = smul.addr %s855, 16
      %s857 = smul.addr %s856, 4
      %s858 = scalar_lea.vmem %s4, %s857
      %p859 = pneg %p172
      %p860 = pneg %p169
      %p861 = scmp.lt.s32.totalorder %s40, 1
      %s862 = scalar_select %p861, %s40, 1
      %s863 = smul.addr %s862, 4
      %s864 = scalar_lea.vmem %s5, %s863
      %p865 = pneg %p198
      %p866 = pneg %p195
      %p867 = scmp.lt.s32.totalorder %s40, 1
      %s868 = scalar_select %p867, %s40, 1
      %s869 = smul.addr %s868, 16
      %s870 = smul.addr %s869, 4
      %s871 = scalar_lea.vmem %s6, %s870
      %p872 = pneg %p224
      %p873 = pneg %p221
      %p874 = scmp.lt.s32.totalorder %s40, 1
      %s875 = scalar_select %p874, %s40, 1
      %s876 = smul.addr %s875, 4
      %s877 = scalar_lea.vmem %s7, %s876
      %p878 = pneg %p250
      %p879 = pneg %p247
      %p880 = scmp.lt.s32.totalorder %s40, 1
      %s881 = scalar_select %p880, %s40, 1
      %s882 = smul.addr %s881, 4
      %s883 = smul.addr %s882, 4
      %s884 = scalar_lea.vmem %s8, %s883
      %p885 = pneg %p276
      %p886 = pneg %p273
      %p887 = scmp.lt.s32.totalorder %s40, 1
      %s888 = scalar_select %p887, %s40, 1
      %s889 = scalar_lea.vmem %s9, %s888
      %p890 = pneg %p302
      %p891 = pneg %p299
      %p892 = scmp.lt.s32.totalorder %s40, 1
      %s893 = scalar_select %p892, %s40, 1
      %s894 = scalar_lea.vmem %s10, %s893
      %p895 = pneg %p328
      %p896 = pneg %p325
      %p897 = scmp.lt.s32.totalorder %s40, 1
      %s898 = scalar_select %p897, %s40, 1
      %s899 = scalar_lea.vmem %s11, %s898
      %p900 = pneg %p354
      %p901 = pneg %p351
      %p902 = scmp.lt.s32.totalorder %s40, 1
      %s903 = scalar_select %p902, %s40, 1
      %s904 = smul.addr %s903, 4
      %s905 = smul.addr %s904, 4
      %s906 = scalar_lea.vmem %s12, %s905
      %p907 = pneg %p380
      %p908 = pneg %p377
      %p909 = scmp.lt.s32.totalorder %s40, 1
      %s910 = scalar_select %p909, %s40, 1
      %s911 = scalar_lea.vmem %s13, %s910
      %p912 = pneg %p406
      %p913 = pneg %p403
      %p914 = scmp.lt.s32.totalorder %s40, 1
      %s915 = scalar_select %p914, %s40, 1
      %s916 = smul.addr %s915, 8
      %s917 = smul.addr %s916, 4
      %s918 = scalar_lea.vmem %s14, %s917
      %p919 = pneg %p432
      %p920 = pneg %p429
      %p921 = scmp.lt.s32.totalorder %s40, 1
      %s922 = scalar_select %p921, %s40, 1
      %s923 = scalar_lea.vmem %s15, %s922
      %p924 = pneg %p458
      %p925 = pneg %p455
      %p926 = scmp.lt.s32.totalorder %s40, 1
      %s927 = scalar_select %p926, %s40, 1
      %s928 = scalar_lea.vmem %s16, %s927
      %p929 = pneg %p484
      %p930 = pneg %p481
      %p931 = scmp.lt.s32.totalorder %s40, 1
      %s932 = scalar_select %p931, %s40, 1
      %s933 = scalar_lea.vmem %s17, %s932
      %p934 = pneg %p510
      %p935 = pneg %p507
      %p936 = pneg %p531
      %p937 = pneg %p528
      %p938 = pneg %p552
      %p939 = pneg %p549
      %p940 = pneg %p573
      %p941 = pneg %p570
      %p942 = pneg %p594
      %p943 = pneg %p591
      %p944 = pneg %p615
      %p945 = pneg %p612
      %p946 = pneg %p636
      %p947 = pneg %p633
      %p948 = pneg %p662
      %p949 = pneg %p659
      %p950 = scmp.lt.s32.totalorder %s39, 1
      %s951 = scalar_select %p950, %s39, 1
      %s952 = smul.addr %s951, 8
      %s953 = scalar_lea.vmem %s24, %s952
      %p954 = scmp.lt.s32.totalorder %s39, 1
      %s955 = scalar_select %p954, %s39, 1
      %s956 = smul.addr %s955, 8
      %s957 = scalar_lea.vmem %s0, %s956
      %p958 = scmp.lt.s32.totalorder %s39, 1
      %s959 = scalar_select %p958, %s39, 1
      %s960 = scalar_lea.vmem %s1, %s959
      %p961 = scmp.lt.s32.totalorder %s40, 1
      %s962 = scalar_select %p961, %s40, 1
      %s963 = smul.addr %s962, 16
      %s964 = smul.addr %s963, 4
      %s965 = scalar_lea.vmem %s2, %s964
      %p966 = scmp.lt.s32.totalorder %s40, 1
      %s967 = scalar_select %p966, %s40, 1
      %s968 = smul.addr %s967, 4
      %s969 = scalar_lea.vmem %s3, %s968
      %p970 = scmp.lt.s32.totalorder %s40, 1
      %s971 = scalar_select %p970, %s40, 1
      %s972 = smul.addr %s971, 16
      %s973 = smul.addr %s972, 4
      %s974 = scalar_lea.vmem %s4, %s973
      %p975 = scmp.lt.s32.totalorder %s40, 1
      %s976 = scalar_select %p975, %s40, 1
      %s977 = smul.addr %s976, 4
      %s978 = scalar_lea.vmem %s5, %s977
      %p979 = scmp.lt.s32.totalorder %s40, 1
      %s980 = scalar_select %p979, %s40, 1
      %s981 = smul.addr %s980, 16
      %s982 = smul.addr %s981, 4
      %s983 = scalar_lea.vmem %s6, %s982
      %p984 = scmp.lt.s32.totalorder %s40, 1
      %s985 = scalar_select %p984, %s40, 1
      %s986 = smul.addr %s985, 4
      %s987 = scalar_lea.vmem %s7, %s986
      %p988 = scmp.lt.s32.totalorder %s40, 1
      %s989 = scalar_select %p988, %s40, 1
      %s990 = smul.addr %s989, 4
      %s991 = smul.addr %s990, 4
      %s992 = scalar_lea.vmem %s8, %s991
      %p993 = scmp.lt.s32.totalorder %s40, 1
      %s994 = scalar_select %p993, %s40, 1
      %s995 = scalar_lea.vmem %s9, %s994
      %p996 = scmp.lt.s32.totalorder %s40, 1
      %s997 = scalar_select %p996, %s40, 1
      %s998 = scalar_lea.vmem %s10, %s997
      %p999 = scmp.lt.s32.totalorder %s40, 1
      %s1000 = scalar_select %p999, %s40, 1
      %s1001 = scalar_lea.vmem %s11, %s1000
      %p1002 = scmp.lt.s32.totalorder %s40, 1
      %s1003 = scalar_select %p1002, %s40, 1
      %s1004 = smul.addr %s1003, 4
      %s1005 = smul.addr %s1004, 4
      %s1006 = scalar_lea.vmem %s12, %s1005
      %p1007 = scmp.lt.s32.totalorder %s40, 1
      %s1008 = scalar_select %p1007, %s40, 1
      %s1009 = scalar_lea.vmem %s13, %s1008
      %p1010 = scmp.lt.s32.totalorder %s40, 1
      %s1011 = scalar_select %p1010, %s40, 1
      %s1012 = smul.addr %s1011, 8
      %s1013 = smul.addr %s1012, 4
      %s1014 = scalar_lea.vmem %s14, %s1013
      %p1015 = scmp.lt.s32.totalorder %s40, 1
      %s1016 = scalar_select %p1015, %s40, 1
      %s1017 = scalar_lea.vmem %s15, %s1016
      %p1018 = scmp.lt.s32.totalorder %s40, 1
      %s1019 = scalar_select %p1018, %s40, 1
      %s1020 = scalar_lea.vmem %s16, %s1019
      %p1021 = scmp.lt.s32.totalorder %s40, 1
      %s1022 = scalar_select %p1021, %s40, 1
      %s1023 = scalar_lea.vmem %s17, %s1022
      %p1024 = scmp.lt.s32.totalorder %s39, 1
      %s1025 = scalar_select %p1024, %s39, 1
      %s1026 = smul.addr %s1025, 8
      %s1027 = scalar_lea.vmem %s24, %s1026
      %p1029 = scmp.eq.s32.totalorder %s40, 0
      // Predicated region
      $region117: #{model_forward.1} parent=115 // pred_check
        %p1030 = pneg %p1029
      $region118: #{model_forward.1} parent=115 // pred_check_branch
        %1032 = sbr.rel (%p1030) target = $region120
      $region119: #{model_forward.1} parent=115 // pred_region
        %v1033 = vld [vmem:[%s957] sm:$0xff]
        %v1034 = vld [vmem:[%s18] sm:$0x1]
        %v1035 = vld [vmem:[%s19] sm:$0x1]
        %vm1036 = vcmask 261120
        %v1037 = vsel %vm1036, %v1033, 0.0
        %1038 = vadd.xlane.f32.xlu0 %v1037
        %v1039 = vpop.xlane.xlu0 %1038
        %v1040 = vrcp.pop 32.0
        %v1041 = vmul.f32 %v1039, %v1040
        %v1042 = vsub.f32 %v1033, %v1041
        %v1043 = vmul.f32 %v1042, %v1042
        %v1044 = vsel %vm1036, %v1043, 0.0
        %1045 = vadd.xlane.f32.xlu0 %v1044
        %v1046 = vpop.xlane.xlu0 %1045
        %v1047 = vmul.f32 %v1046, %v1040
        %v1048 = vadd.f32 %v1047, 1e-12
        %v1049 = vrsqrt.pop %v1048
        %v1050 = vmul.f32 %v1042, %v1049
        %v1052 = vlaneseq
        %v1053 = vshrl.u32 %v1052, 7
        %v1054 = vsub.s32 0, %v1053
        %v1055 = vrot.slane %v1034, %v1054
        %v1057 = vmul.f32 %v1050, %v1055
        %v1059 = vlaneseq
        %v1060 = vshrl.u32 %v1059, 7
        %v1061 = vsub.s32 0, %v1060
        %v1062 = vrot.slane %v1035, %v1061
        %v1064 = vadd.f32 %v1057, %v1062
        %1065 = vst.msk [vmem:[#allocation2] sm:$0xff] %vm1036, %v1064
      $region120: #{model_forward.1} parent=115 // pred_fallthru
        _
      %v1066 = vld [vmem:[#allocation2] sm:$0xff]
      %v1067 = vpack.c.bf16 %v1066, %v1066
      %v1068 = vld [vmem:[%s960] sm:$0x1]
      %v1069 = vld [vmem:[%s965] sm:$0xf]
      %v1070 = vld [vmem:[%s965 + $0x4] sm:$0xf]
      %v1071 = vld [vmem:[%s965 + $0x8] sm:$0xf]
      %v1072 = vld [vmem:[%s965 + $0xc] sm:$0xf]
      %v1073 = vld [vmem:[%s965 + $0x10] sm:$0xf]
      %v1074 = vld [vmem:[%s965 + $0x14] sm:$0xf]
      %v1075 = vld [vmem:[%s965 + $0x18] sm:$0xf]
      %v1076 = vld [vmem:[%s965 + $0x1c] sm:$0xf]
      %v1077 = vld [vmem:[%s965 + $0x20] sm:$0xf]
      %v1078 = vld [vmem:[%s965 + $0x24] sm:$0xf]
      %v1079 = vld [vmem:[%s965 + $0x28] sm:$0xf]
      %v1080 = vld [vmem:[%s965 + $0x2c] sm:$0xf]
      %v1081 = vld [vmem:[%s965 + $0x30] sm:$0xf]
      %v1082 = vld [vmem:[%s965 + $0x34] sm:$0xf]
      %v1083 = vld [vmem:[%s965 + $0x38] sm:$0xf]
      %v1084 = vld [vmem:[%s965 + $0x3c] sm:$0xf]
      %v1085 = vld [vmem:[%s969] sm:$0x1]
      %v1086 = vld [vmem:[%s969 + $0x1] sm:$0x1]
      %v1087 = vld [vmem:[%s969 + $0x2] sm:$0x1]
      %v1088 = vld [vmem:[%s969 + $0x3] sm:$0x1]
      %v1089 = vld [vmem:[%s974] sm:$0xf]
      %v1090 = vld [vmem:[%s974 + $0x4] sm:$0xf]
      %v1091 = vld [vmem:[%s974 + $0x8] sm:$0xf]
      %v1092 = vld [vmem:[%s974 + $0xc] sm:$0xf]
      %v1093 = vld [vmem:[%s974 + $0x10] sm:$0xf]
      %v1094 = vld [vmem:[%s974 + $0x14] sm:$0xf]
      %v1095 = vld [vmem:[%s974 + $0x18] sm:$0xf]
      %v1096 = vld [vmem:[%s974 + $0x1c] sm:$0xf]
      %v1097 = vld [vmem:[%s974 + $0x20] sm:$0xf]
      %v1098 = vld [vmem:[%s974 + $0x24] sm:$0xf]
      %v1099 = vld [vmem:[%s974 + $0x28] sm:$0xf]
      %v1100 = vld [vmem:[%s974 + $0x2c] sm:$0xf]
      %v1101 = vld [vmem:[%s974 + $0x30] sm:$0xf]
      %v1102 = vld [vmem:[%s974 + $0x34] sm:$0xf]
      %v1103 = vld [vmem:[%s974 + $0x38] sm:$0xf]
      %v1104 = vld [vmem:[%s974 + $0x3c] sm:$0xf]
      %v1105 = vld [vmem:[%s978] sm:$0x1]
      %v1106 = vld [vmem:[%s978 + $0x1] sm:$0x1]
      %v1107 = vld [vmem:[%s978 + $0x2] sm:$0x1]
      %v1108 = vld [vmem:[%s978 + $0x3] sm:$0x1]
      %v1109 = vld [vmem:[%s983] sm:$0xf]
      %v1110 = vld [vmem:[%s983 + $0x4] sm:$0xf]
      %v1111 = vld [vmem:[%s983 + $0x8] sm:$0xf]
      %v1112 = vld [vmem:[%s983 + $0xc] sm:$0xf]
      %v1113 = vld [vmem:[%s983 + $0x10] sm:$0xf]
      %v1114 = vld [vmem:[%s983 + $0x14] sm:$0xf]
      %v1115 = vld [vmem:[%s983 + $0x18] sm:$0xf]
      %v1116 = vld [vmem:[%s983 + $0x1c] sm:$0xf]
      %v1117 = vld [vmem:[%s983 + $0x20] sm:$0xf]
      %v1118 = vld [vmem:[%s983 + $0x24] sm:$0xf]
      %v1119 = vld [vmem:[%s983 + $0x28] sm:$0xf]
      %v1120 = vld [vmem:[%s983 + $0x2c] sm:$0xf]
      %v1121 = vld [vmem:[%s983 + $0x30] sm:$0xf]
      %v1122 = vld [vmem:[%s983 + $0x34] sm:$0xf]
      %v1123 = vld [vmem:[%s983 + $0x38] sm:$0xf]
      %v1124 = vld [vmem:[%s983 + $0x3c] sm:$0xf]
      %v1125 = vld [vmem:[%s987] sm:$0x1]
      %v1126 = vld [vmem:[%s987 + $0x1] sm:$0x1]
      %v1127 = vld [vmem:[%s987 + $0x2] sm:$0x1]
      %v1128 = vld [vmem:[%s987 + $0x3] sm:$0x1]
      %v1129 = vld [vmem:[%s992] sm:$0xf]
      %v1130 = vld [vmem:[%s992 + $0x4] sm:$0xf]
      %v1131 = vld [vmem:[%s992 + $0x8] sm:$0xf]
      %v1132 = vld [vmem:[%s992 + $0xc] sm:$0xf]
      %v1134 = vlaneseq
      %v1135 = vshrl.u32 %v1134, 7
      %v1136 = vsub.s32 0, %v1135
      %v1137 = vrot.slane %v1085, %v1136
      %v1143 = vunpack.c.l.b16 %v1069
      %v1144 = vunpack.c.l.b16 %v1070
      %v1145 = vunpack.c.l.b16 %v1071
      %v1146 = vunpack.c.l.b16 %v1072
      %v1147 = vpack.c.b16 %v1144, %v1143
      %v1148 = vpack.c.b16 %v1146, %v1145
      %vm1151 = vcmask 261120
      %v1153 = vsel %vm1151, %v1067, 0
      %1155 = vmatprep.subr.bf16.mxu0 0
      %1156 = vmatpush1.bf16.msra.mxu0 %v1147
      %1157 = vmatprep.subr.bf16.mxu0 0
      %1158 = vmatpush1.bf16.msra.mxu0 %v1148
      %1159 = vmatprep.subr.bf16.mxu0 0
      %1160 = vmatpush1.bf16.msra.mxu0 0
      %1161 = vmatprep.subr.bf16.mxu0 0
      %1162 = vmatpush1.bf16.msra.mxu0 0
      %1163 = vmatprep.subr.bf16.mxu0 0
      %1164 = vmatpush1.bf16.msra.mxu0 0
      %1165 = vmatprep.subr.bf16.mxu0 0
      %1166 = vmatpush1.bf16.msra.mxu0 0
      %1167 = vmatprep.subr.bf16.mxu0 0
      %1168 = vmatpush1.bf16.msra.mxu0 0
      %1169 = vmatprep.subr.bf16.mxu0 0
      %1170 = vmatpush1.bf16.msra.mxu0 0
      %1171 = vmatprep.subr.bf16.mxu0 0
      %1172 = vmatpush1.bf16.msra.mxu0 0
      %1173 = vmatprep.subr.bf16.mxu0 0
      %1174 = vmatpush1.bf16.msra.mxu0 0
      %1175 = vmatprep.subr.bf16.mxu0 0
      %1176 = vmatpush1.bf16.msra.mxu0 0
      %1177 = vmatprep.subr.bf16.mxu0 0
      %1178 = vmatpush1.bf16.msra.mxu0 0
      %1179 = vmatprep.subr.bf16.mxu0 0
      %1180 = vmatpush1.bf16.msra.mxu0 0
      %1181 = vmatprep.subr.bf16.mxu0 0
      %1182 = vmatpush1.bf16.msra.mxu0 0
      %1183 = vmatprep.subr.bf16.mxu0 0
      %1184 = vmatpush1.bf16.msra.mxu0 0
      %1185 = vmatprep.subr.bf16.mxu0 0
      %1186 = vmatpush1.bf16.msra.mxu0 0
      %1187 = vmatprep.mubr.bf16.mxu0 0
      %1188 = vmatmul.mubr.bf16.gmra.mrb[0].mxu0 %v1153
      %v1189 = vpop.f32.mrb[0].mxu0
      %v1190 = vadd.f32 %v1137, %v1189
      %v1191 = vpop.f32.mrb[0].mxu0
      %v1192 = vpop.f32.mrb[0].mxu0
      %v1193 = vpop.f32.mrb[0].mxu0
      %1194 = vdwg.mxu0
      %v1196 = vlaneseq
      %v1197 = vshrl.u32 %v1196, 7
      %v1198 = vsub.s32 0, %v1197
      %v1199 = vrot.slane %v1105, %v1198
      %v1205 = vunpack.c.l.b16 %v1089
      %v1206 = vunpack.c.l.b16 %v1090
      %v1207 = vunpack.c.l.b16 %v1091
      %v1208 = vunpack.c.l.b16 %v1092
      %v1209 = vpack.c.b16 %v1206, %v1205
      %v1210 = vpack.c.b16 %v1208, %v1207
      %1213 = vmatprep.subr.bf16.mxu0 0
      %1214 = vmatpush1.bf16.msra.mxu0 %v1209
      %1215 = vmatprep.subr.bf16.mxu0 0
      %1216 = vmatpush1.bf16.msra.mxu0 %v1210
      %1217 = vmatprep.subr.bf16.mxu0 0
      %1218 = vmatpush1.bf16.msra.mxu0 0
      %1219 = vmatprep.subr.bf16.mxu0 0
      %1220 = vmatpush1.bf16.msra.mxu0 0
      %1221 = vmatprep.subr.bf16.mxu0 0
      %1222 = vmatpush1.bf16.msra.mxu0 0
      %1223 = vmatprep.subr.bf16.mxu0 0
      %1224 = vmatpush1.bf16.msra.mxu0 0
      %1225 = vmatprep.subr.bf16.mxu0 0
      %1226 = vmatpush1.bf16.msra.mxu0 0
      %1227 = vmatprep.subr.bf16.mxu0 0
      %1228 = vmatpush1.bf16.msra.mxu0 0
      %1229 = vmatprep.subr.bf16.mxu0 0
      %1230 = vmatpush1.bf16.msra.mxu0 0
      %1231 = vmatprep.subr.bf16.mxu0 0
      %1232 = vmatpush1.bf16.msra.mxu0 0
      %1233 = vmatprep.subr.bf16.mxu0 0
      %1234 = vmatpush1.bf16.msra.mxu0 0
      %1235 = vmatprep.subr.bf16.mxu0 0
      %1236 = vmatpush1.bf16.msra.mxu0 0
      %1237 = vmatprep.subr.bf16.mxu0 0
      %1238 = vmatpush1.bf16.msra.mxu0 0
      %1239 = vmatprep.subr.bf16.mxu0 0
      %1240 = vmatpush1.bf16.msra.mxu0 0
      %1241 = vmatprep.subr.bf16.mxu0 0
      %1242 = vmatpush1.bf16.msra.mxu0 0
      %1243 = vmatprep.subr.bf16.mxu0 0
      %1244 = vmatpush1.bf16.msra.mxu0 0
      %1245 = vmatprep.mubr.bf16.mxu0 0
      %1246 = vmatmul.mubr.bf16.gmra.mrb[0].mxu0 %v1153
      %v1247 = vpop.f32.mrb[0].mxu0
      %v1248 = vadd.f32 %v1199, %v1247
      %v1249 = vpop.f32.mrb[0].mxu0
      %v1250 = vpop.f32.mrb[0].mxu0
      %v1251 = vpop.f32.mrb[0].mxu0
      %1252 = vdwg.mxu0
      %v1254 = vlaneseq
      %v1255 = vshrl.u32 %v1254, 7
      %v1256 = vsub.s32 0, %v1255
      %v1257 = vrot.slane %v1125, %v1256
      %v1263 = vunpack.c.l.b16 %v1109
      %v1264 = vunpack.c.l.b16 %v1110
      %v1265 = vunpack.c.l.b16 %v1111
      %v1266 = vunpack.c.l.b16 %v1112
      %v1267 = vpack.c.b16 %v1264, %v1263
      %v1268 = vpack.c.b16 %v1266, %v1265
      %1271 = vmatprep.subr.bf16.mxu0 0
      %1272 = vmatpush1.bf16.msra.mxu0 %v1267
      %1273 = vmatprep.subr.bf16.mxu0 0
      %1274 = vmatpush1.bf16.msra.mxu0 %v1268
      %1275 = vmatprep.subr.bf16.mxu0 0
      %1276 = vmatpush1.bf16.msra.mxu0 0
      %1277 = vmatprep.subr.bf16.mxu0 0
      %1278 = vmatpush1.bf16.msra.mxu0 0
      %1279 = vmatprep.subr.bf16.mxu0 0
      %1280 = vmatpush1.bf16.msra.mxu0 0
      %1281 = vmatprep.subr.bf16.mxu0 0
      %1282 = vmatpush1.bf16.msra.mxu0 0
      %1283 = vmatprep.subr.bf16.mxu0 0
      %1284 = vmatpush1.bf16.msra.mxu0 0
      %1285 = vmatprep.subr.bf16.mxu0 0
      %1286 = vmatpush1.bf16.msra.mxu0 0
      %1287 = vmatprep.subr.bf16.mxu0 0
      %1288 = vmatpush1.bf16.msra.mxu0 0
      %1289 = vmatprep.subr.bf16.mxu0 0
      %1290 = vmatpush1.bf16.msra.mxu0 0
      %1291 = vmatprep.subr.bf16.mxu0 0
      %1292 = vmatpush1.bf16.msra.mxu0 0
      %1293 = vmatprep.subr.bf16.mxu0 0
      %1294 = vmatpush1.bf16.msra.mxu0 0
      %1295 = vmatprep.subr.bf16.mxu0 0
      %1296 = vmatpush1.bf16.msra.mxu0 0
      %1297 = vmatprep.subr.bf16.mxu0 0
      %1298 = vmatpush1.bf16.msra.mxu0 0
      %1299 = vmatprep.subr.bf16.mxu0 0
      %1300 = vmatpush1.bf16.msra.mxu0 0
      %1301 = vmatprep.subr.bf16.mxu0 0
      %1302 = vmatpush1.bf16.msra.mxu0 0
      %1303 = vmatprep.mubr.bf16.mxu0 0
      %1304 = vmatmul.mubr.bf16.gmra.mrb[0].mxu0 %v1153
      %v1305 = vpop.f32.mrb[0].mxu0
      %v1306 = vadd.f32 %v1257, %v1305
      %v1307 = vpop.f32.mrb[0].mxu0
      %v1308 = vpop.f32.mrb[0].mxu0
      %v1309 = vpop.f32.mrb[0].mxu0
      %1310 = vdwg.mxu0
      %v1311 = vpack.c.bf16 %v1190, %v1190
      %v1312 = vpack.c.bf16 %v1248, %v1248
      %v1314 = vlaneseq
      %v1315 = vshrl.u32 %v1314, 7
      %v1316 = vsub.s32 0, %v1315
      %v1317 = vrot.slane %v1068, %v1316
      %vm1319 = vcmask 64512
      %v1321 = vsel %vm1319, %v1311, 0
      %v1324 = vsel %vm1319, %v1312, 0
      %1326 = vmatprep.subr.bf16.mxu0 0
      %1327 = vmatpush1.bf16.xpose.msra.mxu0 %v1324
      %1328 = vmatprep.subr.bf16.mxu0 0
      %1329 = vmatpush1.bf16.xpose.msra.mxu0 0
      %1330 = vmatprep.subr.bf16.mxu0 0
      %1331 = vmatpush1.bf16.xpose.msra.mxu0 0
      %1332 = vmatprep.subr.bf16.mxu0 0
      %1333 = vmatpush1.bf16.xpose.msra.mxu0 0
      %1334 = vmatprep.subr.bf16.mxu0 0
      %1335 = vmatpush1.bf16.xpose.msra.mxu0 0
      %1336 = vmatprep.subr.bf16.mxu0 0
      %1337 = vmatpush1.bf16.xpose.msra.mxu0 0
      %1338 = vmatprep.subr.bf16.mxu0 0
      %1339 = vmatpush1.bf16.xpose.msra.mxu0 0
      %1340 = vmatprep.subr.bf16.mxu0 0
      %1341 = vmatpush1.bf16.xpose.msra.mxu0 0
      %1342 = vmatprep.subr.bf16.mxu0 0
      %1343 = vmatpush1.bf16.xpose.msra.mxu0 0
      %1344 = vmatprep.subr.bf16.mxu0 0
      %1345 = vmatpush1.bf16.xpose.msra.mxu0 0
      %1346 = vmatprep.subr.bf16.mxu0 0
      %1347 = vmatpush1.bf16.xpose.msra.mxu0 0
      %1348 = vmatprep.subr.bf16.mxu0 0
      %1349 = vmatpush1.bf16.xpose.msra.mxu0 0
      %1350 = vmatprep.subr.bf16.mxu0 0
      %1351 = vmatpush1.bf16.xpose.msra.mxu0 0
      %1352 = vmatprep.subr.bf16.mxu0 0
      %1353 = vmatpush1.bf16.xpose.msra.mxu0 0
      %1354 = vmatprep.subr.bf16.mxu0 0
      %1355 = vmatpush1.bf16.xpose.msra.mxu0 0
      %1356 = vmatprep.subr.bf16.mxu0 0
      %1357 = vmatpush1.bf16.xpose.msra.mxu0 0
      %1358 = vmatprep.mubr.bf16.mxu0 0
      %1359 = vmatmul.mubr.bf16.gmra.mrb[0].mxu0 %v1321
      %v1360 = vpop.f32.mrb[0].mxu0
      %v1361 = vadd.f32 %v1317, %v1360
      %v1362 = vpop.f32.mrb[0].mxu0
      %v1363 = vpop.f32.mrb[0].mxu0
      %v1364 = vpop.f32.mrb[0].mxu0
      %1365 = vdwg.mxu0
      %v1366 = vsel %vm1319, %v1361, -inf
      %1367 = vmax.xlane.f32.xlu0 %v1366
      %v1368 = vpop.xlane.xlu0 %1367
      %v1369 = vsub.f32 %v1361, %v1368
      %v1370 = vmul.f32 %v1369, 1.442695
      %v1371 = vpow.pop %v1370
      %v1372 = vsel %vm1319, %v1371, 0.0
      %1373 = vadd.xlane.f32.xlu0 %v1372
      %v1374 = vpop.xlane.xlu0 %1373
      %v1375 = vrcp.pop %v1374
      %v1376 = vmul.f32 %v1371, %v1375
      %v1377 = vpack.c.bf16 %v1376, %v1376
      %v1378 = vpack.c.bf16 %v1306, %v1306
      %v1380 = vsel %vm1319, %v1377, 0
      %vm1382 = vcmask 1043456
      %v1384 = vsel %vm1382, %v1378, 0
      %1386 = vmatprep.subr.bf16.mxu0 0
      %1387 = vmatpush1.bf16.msra.mxu0 %v1384
      %1388 = vmatprep.subr.bf16.mxu0 0
      %1389 = vmatpush1.bf16.msra.mxu0 0
      %1390 = vmatprep.subr.bf16.mxu0 0
      %1391 = vmatpush1.bf16.msra.mxu0 0
      %1392 = vmatprep.subr.bf16.mxu0 0
      %1393 = vmatpush1.bf16.msra.mxu0 0
      %1394 = vmatprep.subr.bf16.mxu0 0
      %1395 = vmatpush1.bf16.msra.mxu0 0
      %1396 = vmatprep.subr.bf16.mxu0 0
      %1397 = vmatpush1.bf16.msra.mxu0 0
      %1398 = vmatprep.subr.bf16.mxu0 0
      %1399 = vmatpush1.bf16.msra.mxu0 0
      %1400 = vmatprep.subr.bf16.mxu0 0
      %1401 = vmatpush1.bf16.msra.mxu0 0
      %1402 = vmatprep.subr.bf16.mxu0 0
      %1403 = vmatpush1.bf16.msra.mxu0 0
      %1404 = vmatprep.subr.bf16.mxu0 0
      %1405 = vmatpush1.bf16.msra.mxu0 0
      %1406 = vmatprep.subr.bf16.mxu0 0
      %1407 = vmatpush1.bf16.msra.mxu0 0
      %1408 = vmatprep.subr.bf16.mxu0 0
      %1409 = vmatpush1.bf16.msra.mxu0 0
      %1410 = vmatprep.subr.bf16.mxu0 0
      %1411 = vmatpush1.bf16.msra.mxu0 0
      %1412 = vmatprep.subr.bf16.mxu0 0
      %1413 = vmatpush1.bf16.msra.mxu0 0
      %1414 = vmatprep.subr.bf16.mxu0 0
      %1415 = vmatpush1.bf16.msra.mxu0 0
      %1416 = vmatprep.subr.bf16.mxu0 0
      %1417 = vmatpush1.bf16.msra.mxu0 0
      %1418 = vmatprep.mubr.bf16.mxu0 0
      %1419 = vmatmul.mubr.bf16.gmra.mrb[0].mxu0 %v1380
      %v1420 = vpop.f32.mrb[0].mxu0
      %v1421 = vadd.f32 0.0, %v1420
      %v1422 = vpop.f32.mrb[0].mxu0
      %v1423 = vpop.f32.mrb[0].mxu0
      %v1424 = vpop.f32.mrb[0].mxu0
      %1425 = vdwg.mxu0
      %v1426 = vpack.c.bf16 %v1421, %v1421
      %v1428 = vlaneseq
      %v1429 = vshrl.u32 %v1428, 7
      %v1430 = vsub.s32 0, %v1429
      %v1431 = vrot.slane %v1086, %v1430
      %v1437 = vunpack.c.l.b16 %v1073
      %v1438 = vunpack.c.l.b16 %v1074
      %v1439 = vunpack.c.l.b16 %v1075
      %v1440 = vunpack.c.l.b16 %v1076
      %v1441 = vpack.c.b16 %v1438, %v1437
      %v1442 = vpack.c.b16 %v1440, %v1439
      %1445 = vmatprep.subr.bf16.mxu0 0
      %1446 = vmatpush1.bf16.msra.mxu0 %v1441
      %1447 = vmatprep.subr.bf16.mxu0 0
      %1448 = vmatpush1.bf16.msra.mxu0 %v1442
      %1449 = vmatprep.subr.bf16.mxu0 0
      %1450 = vmatpush1.bf16.msra.mxu0 0
      %1451 = vmatprep.subr.bf16.mxu0 0
      %1452 = vmatpush1.bf16.msra.mxu0 0
      %1453 = vmatprep.subr.bf16.mxu0 0
      %1454 = vmatpush1.bf16.msra.mxu0 0
      %1455 = vmatprep.subr.bf16.mxu0 0
      %1456 = vmatpush1.bf16.msra.mxu0 0
      %1457 = vmatprep.subr.bf16.mxu0 0
      %1458 = vmatpush1.bf16.msra.mxu0 0
      %1459 = vmatprep.subr.bf16.mxu0 0
      %1460 = vmatpush1.bf16.msra.mxu0 0
      %1461 = vmatprep.subr.bf16.mxu0 0
      %1462 = vmatpush1.bf16.msra.mxu0 0
      %1463 = vmatprep.subr.bf16.mxu0 0
      %1464 = vmatpush1.bf16.msra.mxu0 0
      %1465 = vmatprep.subr.bf16.mxu0 0
      %1466 = vmatpush1.bf16.msra.mxu0 0
      %1467 = vmatprep.subr.bf16.mxu0 0
      %1468 = vmatpush1.bf16.msra.mxu0 0
      %1469 = vmatprep.subr.bf16.mxu0 0
      %1470 = vmatpush1.bf16.msra.mxu0 0
      %1471 = vmatprep.subr.bf16.mxu0 0
      %1472 = vmatpush1.bf16.msra.mxu0 0
      %1473 = vmatprep.subr.bf16.mxu0 0
      %1474 = vmatpush1.bf16.msra.mxu0 0
      %1475 = vmatprep.subr.bf16.mxu0 0
      %1476 = vmatpush1.bf16.msra.mxu0 0
      %1477 = vmatprep.mubr.bf16.mxu0 0
      %1478 = vmatmul.mubr.bf16.gmra.mrb[0].mxu0 %v1153
      %v1479 = vpop.f32.mrb[0].mxu0
      %v1480 = vadd.f32 %v1431, %v1479
      %v1481 = vpop.f32.mrb[0].mxu0
      %v1482 = vpop.f32.mrb[0].mxu0
      %v1483 = vpop.f32.mrb[0].mxu0
      %1484 = vdwg.mxu0
      %v1486 = vlaneseq
      %v1487 = vshrl.u32 %v1486, 7
      %v1488 = vsub.s32 0, %v1487
      %v1489 = vrot.slane %v1106, %v1488
      %v1495 = vunpack.c.l.b16 %v1093
      %v1496 = vunpack.c.l.b16 %v1094
      %v1497 = vunpack.c.l.b16 %v1095
      %v1498 = vunpack.c.l.b16 %v1096
      %v1499 = vpack.c.b16 %v1496, %v1495
      %v1500 = vpack.c.b16 %v1498, %v1497
      %1503 = vmatprep.subr.bf16.mxu0 0
      %1504 = vmatpush1.bf16.msra.mxu0 %v1499
      %1505 = vmatprep.subr.bf16.mxu0 0
      %1506 = vmatpush1.bf16.msra.mxu0 %v1500
      %1507 = vmatprep.subr.bf16.mxu0 0
      %1508 = vmatpush1.bf16.msra.mxu0 0
      %1509 = vmatprep.subr.bf16.mxu0 0
      %1510 = vmatpush1.bf16.msra.mxu0 0
      %1511 = vmatprep.subr.bf16.mxu0 0
      %1512 = vmatpush1.bf16.msra.mxu0 0
      %1513 = vmatprep.subr.bf16.mxu0 0
      %1514 = vmatpush1.bf16.msra.mxu0 0
      %1515 = vmatprep.subr.bf16.mxu0 0
      %1516 = vmatpush1.bf16.msra.mxu0 0
      %1517 = vmatprep.subr.bf16.mxu0 0
      %1518 = vmatpush1.bf16.msra.mxu0 0
      %1519 = vmatprep.subr.bf16.mxu0 0
      %1520 = vmatpush1.bf16.msra.mxu0 0
      %1521 = vmatprep.subr.bf16.mxu0 0
      %1522 = vmatpush1.bf16.msra.mxu0 0
      %1523 = vmatprep.subr.bf16.mxu0 0
      %1524 = vmatpush1.bf16.msra.mxu0 0
      %1525 = vmatprep.subr.bf16.mxu0 0
      %1526 = vmatpush1.bf16.msra.mxu0 0
      %1527 = vmatprep.subr.bf16.mxu0 0
      %1528 = vmatpush1.bf16.msra.mxu0 0
      %1529 = vmatprep.subr.bf16.mxu0 0
      %1530 = vmatpush1.bf16.msra.mxu0 0
      %1531 = vmatprep.subr.bf16.mxu0 0
      %1532 = vmatpush1.bf16.msra.mxu0 0
      %1533 = vmatprep.subr.bf16.mxu0 0
      %1534 = vmatpush1.bf16.msra.mxu0 0
      %1535 = vmatprep.mubr.bf16.mxu0 0
      %1536 = vmatmul.mubr.bf16.gmra.mrb[0].mxu0 %v1153
      %v1537 = vpop.f32.mrb[0].mxu0
      %v1538 = vadd.f32 %v1489, %v1537
      %v1539 = vpop.f32.mrb[0].mxu0
      %v1540 = vpop.f32.mrb[0].mxu0
      %v1541 = vpop.f32.mrb[0].mxu0
      %1542 = vdwg.mxu0
      %v1544 = vlaneseq
      %v1545 = vshrl.u32 %v1544, 7
      %v1546 = vsub.s32 0, %v1545
      %v1547 = vrot.slane %v1126, %v1546
      %v1553 = vunpack.c.l.b16 %v1113
      %v1554 = vunpack.c.l.b16 %v1114
      %v1555 = vunpack.c.l.b16 %v1115
      %v1556 = vunpack.c.l.b16 %v1116
      %v1557 = vpack.c.b16 %v1554, %v1553
      %v1558 = vpack.c.b16 %v1556, %v1555
      %1561 = vmatprep.subr.bf16.mxu0 0
      %1562 = vmatpush1.bf16.msra.mxu0 %v1557
      %1563 = vmatprep.subr.bf16.mxu0 0
      %1564 = vmatpush1.bf16.msra.mxu0 %v1558
      %1565 = vmatprep.subr.bf16.mxu0 0
      %1566 = vmatpush1.bf16.msra.mxu0 0
      %1567 = vmatprep.subr.bf16.mxu0 0
      %1568 = vmatpush1.bf16.msra.mxu0 0
      %1569 = vmatprep.subr.bf16.mxu0 0
      %1570 = vmatpush1.bf16.msra.mxu0 0
      %1571 = vmatprep.subr.bf16.mxu0 0
      %1572 = vmatpush1.bf16.msra.mxu0 0
      %1573 = vmatprep.subr.bf16.mxu0 0
      %1574 = vmatpush1.bf16.msra.mxu0 0
      %1575 = vmatprep.subr.bf16.mxu0 0
      %1576 = vmatpush1.bf16.msra.mxu0 0
      %1577 = vmatprep.subr.bf16.mxu0 0
      %1578 = vmatpush1.bf16.msra.mxu0 0
      %1579 = vmatprep.subr.bf16.mxu0 0
      %1580 = vmatpush1.bf16.msra.mxu0 0
      %1581 = vmatprep.subr.bf16.mxu0 0
      %1582 = vmatpush1.bf16.msra.mxu0 0
      %1583 = vmatprep.subr.bf16.mxu0 0
      %1584 = vmatpush1.bf16.msra.mxu0 0
      %1585 = vmatprep.subr.bf16.mxu0 0
      %1586 = vmatpush1.bf16.msra.mxu0 0
      %1587 = vmatprep.subr.bf16.mxu0 0
      %1588 = vmatpush1.bf16.msra.mxu0 0
      %1589 = vmatprep.subr.bf16.mxu0 0
      %1590 = vmatpush1.bf16.msra.mxu0 0
      %1591 = vmatprep.subr.bf16.mxu0 0
      %1592 = vmatpush1.bf16.msra.mxu0 0
      %1593 = vmatprep.mubr.bf16.mxu0 0
      %1594 = vmatmul.mubr.bf16.gmra.mrb[0].mxu0 %v1153
      %v1595 = vpop.f32.mrb[0].mxu0
      %v1596 = vadd.f32 %v1547, %v1595
      %v1597 = vpop.f32.mrb[0].mxu0
      %v1598 = vpop.f32.mrb[0].mxu0
      %v1599 = vpop.f32.mrb[0].mxu0
      %1600 = vdwg.mxu0
      %v1601 = vpack.c.bf16 %v1480, %v1480
      %v1602 = vpack.c.bf16 %v1538, %v1538
      %v1604 = vsel %vm1319, %v1601, 0
      %v1607 = vsel %vm1319, %v1602, 0
      %1609 = vmatprep.subr.bf16.mxu0 0
      %1610 = vmatpush1.bf16.xpose.msra.mxu0 %v1607
      %1611 = vmatprep.subr.bf16.mxu0 0
      %1612 = vmatpush1.bf16.xpose.msra.mxu0 0
      %1613 = vmatprep.subr.bf16.mxu0 0
      %1614 = vmatpush1.bf16.xpose.msra.mxu0 0
      %1615 = vmatprep.subr.bf16.mxu0 0
      %1616 = vmatpush1.bf16.xpose.msra.mxu0 0
      %1617 = vmatprep.subr.bf16.mxu0 0
      %1618 = vmatpush1.bf16.xpose.msra.mxu0 0
      %1619 = vmatprep.subr.bf16.mxu0 0
      %1620 = vmatpush1.bf16.xpose.msra.mxu0 0
      %1621 = vmatprep.subr.bf16.mxu0 0
      %1622 = vmatpush1.bf16.xpose.msra.mxu0 0
      %1623 = vmatprep.subr.bf16.mxu0 0
      %1624 = vmatpush1.bf16.xpose.msra.mxu0 0
      %1625 = vmatprep.subr.bf16.mxu0 0
      %1626 = vmatpush1.bf16.xpose.msra.mxu0 0
      %1627 = vmatprep.subr.bf16.mxu0 0
      %1628 = vmatpush1.bf16.xpose.msra.mxu0 0
      %1629 = vmatprep.subr.bf16.mxu0 0
      %1630 = vmatpush1.bf16.xpose.msra.mxu0 0
      %1631 = vmatprep.subr.bf16.mxu0 0
      %1632 = vmatpush1.bf16.xpose.msra.mxu0 0
      %1633 = vmatprep.subr.bf16.mxu0 0
      %1634 = vmatpush1.bf16.xpose.msra.mxu0 0
      %1635 = vmatprep.subr.bf16.mxu0 0
      %1636 = vmatpush1.bf16.xpose.msra.mxu0 0
      %1637 = vmatprep.subr.bf16.mxu0 0
      %1638 = vmatpush1.bf16.xpose.msra.mxu0 0
      %1639 = vmatprep.subr.bf16.mxu0 0
      %1640 = vmatpush1.bf16.xpose.msra.mxu0 0
      %1641 = vmatprep.mubr.bf16.mxu0 0
      %1642 = vmatmul.mubr.bf16.gmra.mrb[0].mxu0 %v1604
      %v1643 = vpop.f32.mrb[0].mxu0
      %v1644 = vadd.f32 %v1317, %v1643
      %v1645 = vpop.f32.mrb[0].mxu0
      %v1646 = vpop.f32.mrb[0].mxu0
      %v1647 = vpop.f32.mrb[0].mxu0
      %1648 = vdwg.mxu0
      %v1649 = vsel %vm1319, %v1644, -inf
      %1650 = vmax.xlane.f32.xlu0 %v1649
      %v1651 = vpop.xlane.xlu0 %1650
      %v1652 = vsub.f32 %v1644, %v1651
      %v1653 = vmul.f32 %v1652, 1.442695
      %v1654 = vpow.pop %v1653
      %v1655 = vsel %vm1319, %v1654, 0.0
      %1656 = vadd.xlane.f32.xlu0 %v1655
      %v1657 = vpop.xlane.xlu0 %1656
      %v1658 = vrcp.pop %v1657
      %v1659 = vmul.f32 %v1654, %v1658
      %v1660 = vpack.c.bf16 %v1659, %v1659
      %v1661 = vpack.c.bf16 %v1596, %v1596
      %v1663 = vsel %vm1319, %v1660, 0
      %v1666 = vsel %vm1382, %v1661, 0
      %1668 = vmatprep.subr.bf16.mxu0 0
      %1669 = vmatpush1.bf16.msra.mxu0 %v1666
      %1670 = vmatprep.subr.bf16.mxu0 0
      %1671 = vmatpush1.bf16.msra.mxu0 0
      %1672 = vmatprep.subr.bf16.mxu0 0
      %1673 = vmatpush1.bf16.msra.mxu0 0
      %1674 = vmatprep.subr.bf16.mxu0 0
      %1675 = vmatpush1.bf16.msra.mxu0 0
      %1676 = vmatprep.subr.bf16.mxu0 0
      %1677 = vmatpush1.bf16.msra.mxu0 0
      %1678 = vmatprep.subr.bf16.mxu0 0
      %1679 = vmatpush1.bf16.msra.mxu0 0
      %1680 = vmatprep.subr.bf16.mxu0 0
      %1681 = vmatpush1.bf16.msra.mxu0 0
      %1682 = vmatprep.subr.bf16.mxu0 0
      %1683 = vmatpush1.bf16.msra.mxu0 0
      %1684 = vmatprep.subr.bf16.mxu0 0
      %1685 = vmatpush1.bf16.msra.mxu0 0
      %1686 = vmatprep.subr.bf16.mxu0 0
      %1687 = vmatpush1.bf16.msra.mxu0 0
      %1688 = vmatprep.subr.bf16.mxu0 0
      %1689 = vmatpush1.bf16.msra.mxu0 0
      %1690 = vmatprep.subr.bf16.mxu0 0
      %1691 = vmatpush1.bf16.msra.mxu0 0
      %1692 = vmatprep.subr.bf16.mxu0 0
      %1693 = vmatpush1.bf16.msra.mxu0 0
      %1694 = vmatprep.subr.bf16.mxu0 0
      %1695 = vmatpush1.bf16.msra.mxu0 0
      %1696 = vmatprep.subr.bf16.mxu0 0
      %1697 = vmatpush1.bf16.msra.mxu0 0
      %1698 = vmatprep.subr.bf16.mxu0 0
      %1699 = vmatpush1.bf16.msra.mxu0 0
      %1700 = vmatprep.mubr.bf16.mxu0 0
      %1701 = vmatmul.mubr.bf16.gmra.mrb[0].mxu0 %v1663
      %v1702 = vpop.f32.mrb[0].mxu0
      %v1703 = vadd.f32 0.0, %v1702
      %v1704 = vpop.f32.mrb[0].mxu0
      %v1705 = vpop.f32.mrb[0].mxu0
      %v1706 = vpop.f32.mrb[0].mxu0
      %1707 = vdwg.mxu0
      %v1708 = vpack.c.bf16 %v1703, %v1703
      %v1710 = vsel %vm1319, %v1708, 0
      %v1713 = vsel %vm1382, %v1130, 0
      %1715 = vmatprep.subr.bf16.mxu0 0
      %1716 = vmatpush1.bf16.msra.mxu0 %v1713
      %1717 = vmatprep.subr.bf16.mxu0 0
      %1718 = vmatpush1.bf16.msra.mxu0 0
      %1719 = vmatprep.subr.bf16.mxu0 0
      %1720 = vmatpush1.bf16.msra.mxu0 0
      %1721 = vmatprep.subr.bf16.mxu0 0
      %1722 = vmatpush1.bf16.msra.mxu0 0
      %1723 = vmatprep.subr.bf16.mxu0 0
      %1724 = vmatpush1.bf16.msra.mxu0 0
      %1725 = vmatprep.subr.bf16.mxu0 0
      %1726 = vmatpush1.bf16.msra.mxu0 0
      %1727 = vmatprep.subr.bf16.mxu0 0
      %1728 = vmatpush1.bf16.msra.mxu0 0
      %1729 = vmatprep.subr.bf16.mxu0 0
      %1730 = vmatpush1.bf16.msra.mxu0 0
      %1731 = vmatprep.subr.bf16.mxu0 0
      %1732 = vmatpush1.bf16.msra.mxu0 0
      %1733 = vmatprep.subr.bf16.mxu0 0
      %1734 = vmatpush1.bf16.msra.mxu0 0
      %1735 = vmatprep.subr.bf16.mxu0 0
      %1736 = vmatpush1.bf16.msra.mxu0 0
      %1737 = vmatprep.subr.bf16.mxu0 0
      %1738 = vmatpush1.bf16.msra.mxu0 0
      %1739 = vmatprep.subr.bf16.mxu0 0
      %1740 = vmatpush1.bf16.msra.mxu0 0
      %1741 = vmatprep.subr.bf16.mxu0 0
      %1742 = vmatpush1.bf16.msra.mxu0 0
      %1743 = vmatprep.subr.bf16.mxu0 0
      %1744 = vmatpush1.bf16.msra.mxu0 0
      %1745 = vmatprep.subr.bf16.mxu0 0
      %1746 = vmatpush1.bf16.msra.mxu0 0
      %1747 = vmatprep.mubr.bf16.mxu0 0
      %1748 = vmatmul.mubr.bf16.gmra.mrb[0].mxu0 %v1710
      %v1749 = vpop.f32.mrb[0].mxu0
      %v1750 = vadd.f32 0.0, %v1749
      %v1751 = vpop.f32.mrb[0].mxu0
      %v1752 = vpop.f32.mrb[0].mxu0
      %v1753 = vpop.f32.mrb[0].mxu0
      %1754 = vdwg.mxu0
      %v1756 = vsel %vm1319, %v1426, 0
      %v1759 = vsel %vm1382, %v1129, 0
      %1761 = vmatprep.subr.bf16.mxu0 0
      %1762 = vmatpush1.bf16.msra.mxu0 %v1759
      %1763 = vmatprep.subr.bf16.mxu0 0
      %1764 = vmatpush1.bf16.msra.mxu0 0
      %1765 = vmatprep.subr.bf16.mxu0 0
      %1766 = vmatpush1.bf16.msra.mxu0 0
      %1767 = vmatprep.subr.bf16.mxu0 0
      %1768 = vmatpush1.bf16.msra.mxu0 0
      %1769 = vmatprep.subr.bf16.mxu0 0
      %1770 = vmatpush1.bf16.msra.mxu0 0
      %1771 = vmatprep.subr.bf16.mxu0 0
      %1772 = vmatpush1.bf16.msra.mxu0 0
      %1773 = vmatprep.subr.bf16.mxu0 0
      %1774 = vmatpush1.bf16.msra.mxu0 0
      %1775 = vmatprep.subr.bf16.mxu0 0
      %1776 = vmatpush1.bf16.msra.mxu0 0
      %1777 = vmatprep.subr.bf16.mxu0 0
      %1778 = vmatpush1.bf16.msra.mxu0 0
      %1779 = vmatprep.subr.bf16.mxu0 0
      %1780 = vmatpush1.bf16.msra.mxu0 0
      %1781 = vmatprep.subr.bf16.mxu0 0
      %1782 = vmatpush1.bf16.msra.mxu0 0
      %1783 = vmatprep.subr.bf16.mxu0 0
      %1784 = vmatpush1.bf16.msra.mxu0 0
      %1785 = vmatprep.subr.bf16.mxu0 0
      %1786 = vmatpush1.bf16.msra.mxu0 0
      %1787 = vmatprep.subr.bf16.mxu0 0
      %1788 = vmatpush1.bf16.msra.mxu0 0
      %1789 = vmatprep.subr.bf16.mxu0 0
      %1790 = vmatpush1.bf16.msra.mxu0 0
      %1791 = vmatprep.subr.bf16.mxu0 0
      %1792 = vmatpush1.bf16.msra.mxu0 0
      %1793 = vmatprep.mubr.bf16.mxu0 0
      %1794 = vmatmul.mubr.bf16.gmra.mrb[0].mxu0 %v1756
      %v1795 = vpop.f32.mrb[0].mxu0
      %v1796 = vadd.f32 %v1750, %v1795
      %v1797 = vpop.f32.mrb[0].mxu0
      %v1798 = vpop.f32.mrb[0].mxu0
      %v1799 = vpop.f32.mrb[0].mxu0
      %1800 = vdwg.mxu0
      %v1802 = vlaneseq
      %v1803 = vshrl.u32 %v1802, 7
      %v1804 = vsub.s32 0, %v1803
      %v1805 = vrot.slane %v1087, %v1804
      %v1811 = vunpack.c.l.b16 %v1077
      %v1812 = vunpack.c.l.b16 %v1078
      %v1813 = vunpack.c.l.b16 %v1079
      %v1814 = vunpack.c.l.b16 %v1080
      %v1815 = vpack.c.b16 %v1812, %v1811
      %v1816 = vpack.c.b16 %v1814, %v1813
      %1819 = vmatprep.subr.bf16.mxu0 0
      %1820 = vmatpush1.bf16.msra.mxu0 %v1815
      %1821 = vmatprep.subr.bf16.mxu0 0
      %1822 = vmatpush1.bf16.msra.mxu0 %v1816
      %1823 = vmatprep.subr.bf16.mxu0 0
      %1824 = vmatpush1.bf16.msra.mxu0 0
      %1825 = vmatprep.subr.bf16.mxu0 0
      %1826 = vmatpush1.bf16.msra.mxu0 0
      %1827 = vmatprep.subr.bf16.mxu0 0
      %1828 = vmatpush1.bf16.msra.mxu0 0
      %1829 = vmatprep.subr.bf16.mxu0 0
      %1830 = vmatpush1.bf16.msra.mxu0 0
      %1831 = vmatprep.subr.bf16.mxu0 0
      %1832 = vmatpush1.bf16.msra.mxu0 0
      %1833 = vmatprep.subr.bf16.mxu0 0
      %1834 = vmatpush1.bf16.msra.mxu0 0
      %1835 = vmatprep.subr.bf16.mxu0 0
      %1836 = vmatpush1.bf16.msra.mxu0 0
      %1837 = vmatprep.subr.bf16.mxu0 0
      %1838 = vmatpush1.bf16.msra.mxu0 0
      %1839 = vmatprep.subr.bf16.mxu0 0
      %1840 = vmatpush1.bf16.msra.mxu0 0
      %1841 = vmatprep.subr.bf16.mxu0 0
      %1842 = vmatpush1.bf16.msra.mxu0 0
      %1843 = vmatprep.subr.bf16.mxu0 0
      %1844 = vmatpush1.bf16.msra.mxu0 0
      %1845 = vmatprep.subr.bf16.mxu0 0
      %1846 = vmatpush1.bf16.msra.mxu0 0
      %1847 = vmatprep.subr.bf16.mxu0 0
      %1848 = vmatpush1.bf16.msra.mxu0 0
      %1849 = vmatprep.subr.bf16.mxu0 0
      %1850 = vmatpush1.bf16.msra.mxu0 0
      %1851 = vmatprep.mubr.bf16.mxu0 0
      %1852 = vmatmul.mubr.bf16.gmra.mrb[0].mxu0 %v1153
      %v1853 = vpop.f32.mrb[0].mxu0
      %v1854 = vadd.f32 %v1805, %v1853
      %v1855 = vpop.f32.mrb[0].mxu0
      %v1856 = vpop.f32.mrb[0].mxu0
      %v1857 = vpop.f32.mrb[0].mxu0
      %1858 = vdwg.mxu0
      %v1860 = vlaneseq
      %v1861 = vshrl.u32 %v1860, 7
      %v1862 = vsub.s32 0, %v1861
      %v1863 = vrot.slane %v1107, %v1862
      %v1869 = vunpack.c.l.b16 %v1097
      %v1870 = vunpack.c.l.b16 %v1098
      %v1871 = vunpack.c.l.b16 %v1099
      %v1872 = vunpack.c.l.b16 %v1100
      %v1873 = vpack.c.b16 %v1870, %v1869
      %v1874 = vpack.c.b16 %v1872, %v1871
      %1877 = vmatprep.subr.bf16.mxu0 0
      %1878 = vmatpush1.bf16.msra.mxu0 %v1873
      %1879 = vmatprep.subr.bf16.mxu0 0
      %1880 = vmatpush1.bf16.msra.mxu0 %v1874
      %1881 = vmatprep.subr.bf16.mxu0 0
      %1882 = vmatpush1.bf16.msra.mxu0 0
      %1883 = vmatprep.subr.bf16.mxu0 0
      %1884 = vmatpush1.bf16.msra.mxu0 0
      %1885 = vmatprep.subr.bf16.mxu0 0
      %1886 = vmatpush1.bf16.msra.mxu0 0
      %1887 = vmatprep.subr.bf16.mxu0 0
      %1888 = vmatpush1.bf16.msra.mxu0 0
      %1889 = vmatprep.subr.bf16.mxu0 0
      %1890 = vmatpush1.bf16.msra.mxu0 0
      %1891 = vmatprep.subr.bf16.mxu0 0
      %1892 = vmatpush1.bf16.msra.mxu0 0
      %1893 = vmatprep.subr.bf16.mxu0 0
      %1894 = vmatpush1.bf16.msra.mxu0 0
      %1895 = vmatprep.subr.bf16.mxu0 0
      %1896 = vmatpush1.bf16.msra.mxu0 0
      %1897 = vmatprep.subr.bf16.mxu0 0
      %1898 = vmatpush1.bf16.msra.mxu0 0
      %1899 = vmatprep.subr.bf16.mxu0 0
      %1900 = vmatpush1.bf16.msra.mxu0 0
      %1901 = vmatprep.subr.bf16.mxu0 0
      %1902 = vmatpush1.bf16.msra.mxu0 0
      %1903 = vmatprep.subr.bf16.mxu0 0
      %1904 = vmatpush1.bf16.msra.mxu0 0
      %1905 = vmatprep.subr.bf16.mxu0 0
      %1906 = vmatpush1.bf16.msra.mxu0 0
      %1907 = vmatprep.subr.bf16.mxu0 0
      %1908 = vmatpush1.bf16.msra.mxu0 0
      %1909 = vmatprep.mubr.bf16.mxu0 0
      %1910 = vmatmul.mubr.bf16.gmra.mrb[0].mxu0 %v1153
      %v1911 = vpop.f32.mrb[0].mxu0
      %v1912 = vadd.f32 %v1863, %v1911
      %v1913 = vpop.f32.mrb[0].mxu0
      %v1914 = vpop.f32.mrb[0].mxu0
      %v1915 = vpop.f32.mrb[0].mxu0
      %1916 = vdwg.mxu0
      %v1918 = vlaneseq
      %v1919 = vshrl.u32 %v1918, 7
      %v1920 = vsub.s32 0, %v1919
      %v1921 = vrot.slane %v1127, %v1920
      %v1927 = vunpack.c.l.b16 %v1117
      %v1928 = vunpack.c.l.b16 %v1118
      %v1929 = vunpack.c.l.b16 %v1119
      %v1930 = vunpack.c.l.b16 %v1120
      %v1931 = vpack.c.b16 %v1928, %v1927
      %v1932 = vpack.c.b16 %v1930, %v1929
      %1935 = vmatprep.subr.bf16.mxu0 0
      %1936 = vmatpush1.bf16.msra.mxu0 %v1931
      %1937 = vmatprep.subr.bf16.mxu0 0
      %1938 = vmatpush1.bf16.msra.mxu0 %v1932
      %1939 = vmatprep.subr.bf16.mxu0 0
      %1940 = vmatpush1.bf16.msra.mxu0 0
      %1941 = vmatprep.subr.bf16.mxu0 0
      %1942 = vmatpush1.bf16.msra.mxu0 0
      %1943 = vmatprep.subr.bf16.mxu0 0
      %1944 = vmatpush1.bf16.msra.mxu0 0
      %1945 = vmatprep.subr.bf16.mxu0 0
      %1946 = vmatpush1.bf16.msra.mxu0 0
      %1947 = vmatprep.subr.bf16.mxu0 0
      %1948 = vmatpush1.bf16.msra.mxu0 0
      %1949 = vmatprep.subr.bf16.mxu0 0
      %1950 = vmatpush1.bf16.msra.mxu0 0
      %1951 = vmatprep.subr.bf16.mxu0 0
      %1952 = vmatpush1.bf16.msra.mxu0 0
      %1953 = vmatprep.subr.bf16.mxu0 0
      %1954 = vmatpush1.bf16.msra.mxu0 0
      %1955 = vmatprep.subr.bf16.mxu0 0
      %1956 = vmatpush1.bf16.msra.mxu0 0
      %1957 = vmatprep.subr.bf16.mxu0 0
      %1958 = vmatpush1.bf16.msra.mxu0 0
      %1959 = vmatprep.subr.bf16.mxu0 0
      %1960 = vmatpush1.bf16.msra.mxu0 0
      %1961 = vmatprep.subr.bf16.mxu0 0
      %1962 = vmatpush1.bf16.msra.mxu0 0
      %1963 = vmatprep.subr.bf16.mxu0 0
      %1964 = vmatpush1.bf16.msra.mxu0 0
      %1965 = vmatprep.subr.bf16.mxu0 0
      %1966 = vmatpush1.bf16.msra.mxu0 0
      %1967 = vmatprep.mubr.bf16.mxu0 0
      %1968 = vmatmul.mubr.bf16.gmra.mrb[0].mxu0 %v1153
      %v1969 = vpop.f32.mrb[0].mxu0
      %v1970 = vadd.f32 %v1921, %v1969
      %v1971 = vpop.f32.mrb[0].mxu0
      %v1972 = vpop.f32.mrb[0].mxu0
      %v1973 = vpop.f32.mrb[0].mxu0
      %1974 = vdwg.mxu0
      %v1975 = vpack.c.bf16 %v1854, %v1854
      %v1976 = vpack.c.bf16 %v1912, %v1912
      %v1978 = vsel %vm1319, %v1975, 0
      %v1981 = vsel %vm1319, %v1976, 0
      %1983 = vmatprep.subr.bf16.mxu0 0
      %1984 = vmatpush1.bf16.xpose.msra.mxu0 %v1981
      %1985 = vmatprep.subr.bf16.mxu0 0
      %1986 = vmatpush1.bf16.xpose.msra.mxu0 0
      %1987 = vmatprep.subr.bf16.mxu0 0
      %1988 = vmatpush1.bf16.xpose.msra.mxu0 0
      %1989 = vmatprep.subr.bf16.mxu0 0
      %1990 = vmatpush1.bf16.xpose.msra.mxu0 0
      %1991 = vmatprep.subr.bf16.mxu0 0
      %1992 = vmatpush1.bf16.xpose.msra.mxu0 0
      %1993 = vmatprep.subr.bf16.mxu0 0
      %1994 = vmatpush1.bf16.xpose.msra.mxu0 0
      %1995 = vmatprep.subr.bf16.mxu0 0
      %1996 = vmatpush1.bf16.xpose.msra.mxu0 0
      %1997 = vmatprep.subr.bf16.mxu0 0
      %1998 = vmatpush1.bf16.xpose.msra.mxu0 0
      %1999 = vmatprep.subr.bf16.mxu0 0
      %2000 = vmatpush1.bf16.xpose.msra.mxu0 0
      %2001 = vmatprep.subr.bf16.mxu0 0
      %2002 = vmatpush1.bf16.xpose.msra.mxu0 0
      %2003 = vmatprep.subr.bf16.mxu0 0
      %2004 = vmatpush1.bf16.xpose.msra.mxu0 0
      %2005 = vmatprep.subr.bf16.mxu0 0
      %2006 = vmatpush1.bf16.xpose.msra.mxu0 0
      %2007 = vmatprep.subr.bf16.mxu0 0
      %2008 = vmatpush1.bf16.xpose.msra.mxu0 0
      %2009 = vmatprep.subr.bf16.mxu0 0
      %2010 = vmatpush1.bf16.xpose.msra.mxu0 0
      %2011 = vmatprep.subr.bf16.mxu0 0
      %2012 = vmatpush1.bf16.xpose.msra.mxu0 0
      %2013 = vmatprep.subr.bf16.mxu0 0
      %2014 = vmatpush1.bf16.xpose.msra.mxu0 0
      %2015 = vmatprep.mubr.bf16.mxu0 0
      %2016 = vmatmul.mubr.bf16.gmra.mrb[0].mxu0 %v1978
      %v2017 = vpop.f32.mrb[0].mxu0
      %v2018 = vadd.f32 %v1317, %v2017
      %v2019 = vpop.f32.mrb[0].mxu0
      %v2020 = vpop.f32.mrb[0].mxu0
      %v2021 = vpop.f32.mrb[0].mxu0
      %2022 = vdwg.mxu0
      %v2023 = vsel %vm1319, %v2018, -inf
      %2024 = vmax.xlane.f32.xlu0 %v2023
      %v2025 = vpop.xlane.xlu0 %2024
      %v2026 = vsub.f32 %v2018, %v2025
      %v2027 = vmul.f32 %v2026, 1.442695
      %v2028 = vpow.pop %v2027
      %v2029 = vsel %vm1319, %v2028, 0.0
      %2030 = vadd.xlane.f32.xlu0 %v2029
      %v2031 = vpop.xlane.xlu0 %2030
      %v2032 = vrcp.pop %v2031
      %v2033 = vmul.f32 %v2028, %v2032
      %v2034 = vpack.c.bf16 %v2033, %v2033
      %v2035 = vpack.c.bf16 %v1970, %v1970
      %v2037 = vsel %vm1319, %v2034, 0
      %v2040 = vsel %vm1382, %v2035, 0
      %2042 = vmatprep.subr.bf16.mxu0 0
      %2043 = vmatpush1.bf16.msra.mxu0 %v2040
      %2044 = vmatprep.subr.bf16.mxu0 0
      %2045 = vmatpush1.bf16.msra.mxu0 0
      %2046 = vmatprep.subr.bf16.mxu0 0
      %2047 = vmatpush1.bf16.msra.mxu0 0
      %2048 = vmatprep.subr.bf16.mxu0 0
      %2049 = vmatpush1.bf16.msra.mxu0 0
      %2050 = vmatprep.subr.bf16.mxu0 0
      %2051 = vmatpush1.bf16.msra.mxu0 0
      %2052 = vmatprep.subr.bf16.mxu0 0
      %2053 = vmatpush1.bf16.msra.mxu0 0
      %2054 = vmatprep.subr.bf16.mxu0 0
      %2055 = vmatpush1.bf16.msra.mxu0 0
      %2056 = vmatprep.subr.bf16.mxu0 0
      %2057 = vmatpush1.bf16.msra.mxu0 0
      %2058 = vmatprep.subr.bf16.mxu0 0
      %2059 = vmatpush1.bf16.msra.mxu0 0
      %2060 = vmatprep.subr.bf16.mxu0 0
      %2061 = vmatpush1.bf16.msra.mxu0 0
      %2062 = vmatprep.subr.bf16.mxu0 0
      %2063 = vmatpush1.bf16.msra.mxu0 0
      %2064 = vmatprep.subr.bf16.mxu0 0
      %2065 = vmatpush1.bf16.msra.mxu0 0
      %2066 = vmatprep.subr.bf16.mxu0 0
      %2067 = vmatpush1.bf16.msra.mxu0 0
      %2068 = vmatprep.subr.bf16.mxu0 0
      %2069 = vmatpush1.bf16.msra.mxu0 0
      %2070 = vmatprep.subr.bf16.mxu0 0
      %2071 = vmatpush1.bf16.msra.mxu0 0
      %2072 = vmatprep.subr.bf16.mxu0 0
      %2073 = vmatpush1.bf16.msra.mxu0 0
      %2074 = vmatprep.mubr.bf16.mxu0 0
      %2075 = vmatmul.mubr.bf16.gmra.mrb[0].mxu0 %v2037
      %v2076 = vpop.f32.mrb[0].mxu0
      %v2077 = vadd.f32 0.0, %v2076
      %v2078 = vpop.f32.mrb[0].mxu0
      %v2079 = vpop.f32.mrb[0].mxu0
      %v2080 = vpop.f32.mrb[0].mxu0
      %2081 = vdwg.mxu0
      %v2082 = vpack.c.bf16 %v2077, %v2077
      %v2084 = vsel %vm1319, %v2082, 0
      %v2087 = vsel %vm1382, %v1131, 0
      %2089 = vmatprep.subr.bf16.mxu0 0
      %2090 = vmatpush1.bf16.msra.mxu0 %v2087
      %2091 = vmatprep.subr.bf16.mxu0 0
      %2092 = vmatpush1.bf16.msra.mxu0 0
      %2093 = vmatprep.subr.bf16.mxu0 0
      %2094 = vmatpush1.bf16.msra.mxu0 0
      %2095 = vmatprep.subr.bf16.mxu0 0
      %2096 = vmatpush1.bf16.msra.mxu0 0
      %2097 = vmatprep.subr.bf16.mxu0 0
      %2098 = vmatpush1.bf16.msra.mxu0 0
      %2099 = vmatprep.subr.bf16.mxu0 0
      %2100 = vmatpush1.bf16.msra.mxu0 0
      %2101 = vmatprep.subr.bf16.mxu0 0
      %2102 = vmatpush1.bf16.msra.mxu0 0
      %2103 = vmatprep.subr.bf16.mxu0 0
      %2104 = vmatpush1.bf16.msra.mxu0 0
      %2105 = vmatprep.subr.bf16.mxu0 0
      %2106 = vmatpush1.bf16.msra.mxu0 0
      %2107 = vmatprep.subr.bf16.mxu0 0
      %2108 = vmatpush1.bf16.msra.mxu0 0
      %2109 = vmatprep.subr.bf16.mxu0 0
      %2110 = vmatpush1.bf16.msra.mxu0 0
      %2111 = vmatprep.subr.bf16.mxu0 0
      %2112 = vmatpush1.bf16.msra.mxu0 0
      %2113 = vmatprep.subr.bf16.mxu0 0
      %2114 = vmatpush1.bf16.msra.mxu0 0
      %2115 = vmatprep.subr.bf16.mxu0 0
      %2116 = vmatpush1.bf16.msra.mxu0 0
      %2117 = vmatprep.subr.bf16.mxu0 0
      %2118 = vmatpush1.bf16.msra.mxu0 0
      %2119 = vmatprep.subr.bf16.mxu0 0
      %2120 = vmatpush1.bf16.msra.mxu0 0
      %2121 = vmatprep.mubr.bf16.mxu0 0
      %2122 = vmatmul.mubr.bf16.gmra.mrb[0].mxu0 %v2084
      %v2123 = vpop.f32.mrb[0].mxu0
      %v2124 = vadd.f32 0.0, %v2123
      %v2125 = vpop.f32.mrb[0].mxu0
      %v2126 = vpop.f32.mrb[0].mxu0
      %v2127 = vpop.f32.mrb[0].mxu0
      %2128 = vdwg.mxu0
      %v2129 = vadd.f32 %v1796, %v2124
      %v2131 = vlaneseq
      %v2132 = vshrl.u32 %v2131, 7
      %v2133 = vsub.s32 0, %v2132
      %v2134 = vrot.slane %v1088, %v2133
      %v2140 = vunpack.c.l.b16 %v1081
      %v2141 = vunpack.c.l.b16 %v1082
      %v2142 = vunpack.c.l.b16 %v1083
      %v2143 = vunpack.c.l.b16 %v1084
      %v2144 = vpack.c.b16 %v2141, %v2140
      %v2145 = vpack.c.b16 %v2143, %v2142
      %2148 = vmatprep.subr.bf16.mxu0 0
      %2149 = vmatpush1.bf16.msra.mxu0 %v2144
      %2150 = vmatprep.subr.bf16.mxu0 0
      %2151 = vmatpush1.bf16.msra.mxu0 %v2145
      %2152 = vmatprep.subr.bf16.mxu0 0
      %2153 = vmatpush1.bf16.msra.mxu0 0
      %2154 = vmatprep.subr.bf16.mxu0 0
      %2155 = vmatpush1.bf16.msra.mxu0 0
      %2156 = vmatprep.subr.bf16.mxu0 0
      %2157 = vmatpush1.bf16.msra.mxu0 0
      %2158 = vmatprep.subr.bf16.mxu0 0
      %2159 = vmatpush1.bf16.msra.mxu0 0
      %2160 = vmatprep.subr.bf16.mxu0 0
      %2161 = vmatpush1.bf16.msra.mxu0 0
      %2162 = vmatprep.subr.bf16.mxu0 0
      %2163 = vmatpush1.bf16.msra.mxu0 0
      %2164 = vmatprep.subr.bf16.mxu0 0
      %2165 = vmatpush1.bf16.msra.mxu0 0
      %2166 = vmatprep.subr.bf16.mxu0 0
      %2167 = vmatpush1.bf16.msra.mxu0 0
      %2168 = vmatprep.subr.bf16.mxu0 0
      %2169 = vmatpush1.bf16.msra.mxu0 0
      %2170 = vmatprep.subr.bf16.mxu0 0
      %2171 = vmatpush1.bf16.msra.mxu0 0
      %2172 = vmatprep.subr.bf16.mxu0 0
      %2173 = vmatpush1.bf16.msra.mxu0 0
      %2174 = vmatprep.subr.bf16.mxu0 0
      %2175 = vmatpush1.bf16.msra.mxu0 0
      %2176 = vmatprep.subr.bf16.mxu0 0
      %2177 = vmatpush1.bf16.msra.mxu0 0
      %2178 = vmatprep.subr.bf16.mxu0 0
      %2179 = vmatpush1.bf16.msra.mxu0 0
      %2180 = vmatprep.mubr.bf16.mxu0 0
      %2181 = vmatmul.mubr.bf16.gmra.mrb[0].mxu0 %v1153
      %v2182 = vpop.f32.mrb[0].mxu0
      %v2183 = vadd.f32 %v2134, %v2182
      %v2184 = vpop.f32.mrb[0].mxu0
      %v2185 = vpop.f32.mrb[0].mxu0
      %v2186 = vpop.f32.mrb[0].mxu0
      %2187 = vdwg.mxu0
      %v2189 = vlaneseq
      %v2190 = vshrl.u32 %v2189, 7
      %v2191 = vsub.s32 0, %v2190
      %v2192 = vrot.slane %v1108, %v2191
      %v2198 = vunpack.c.l.b16 %v1101
      %v2199 = vunpack.c.l.b16 %v1102
      %v2200 = vunpack.c.l.b16 %v1103
      %v2201 = vunpack.c.l.b16 %v1104
      %v2202 = vpack.c.b16 %v2199, %v2198
      %v2203 = vpack.c.b16 %v2201, %v2200
      %2206 = vmatprep.subr.bf16.mxu0 0
      %2207 = vmatpush1.bf16.msra.mxu0 %v2202
      %2208 = vmatprep.subr.bf16.mxu0 0
      %2209 = vmatpush1.bf16.msra.mxu0 %v2203
      %2210 = vmatprep.subr.bf16.mxu0 0
      %2211 = vmatpush1.bf16.msra.mxu0 0
      %2212 = vmatprep.subr.bf16.mxu0 0
      %2213 = vmatpush1.bf16.msra.mxu0 0
      %2214 = vmatprep.subr.bf16.mxu0 0
      %2215 = vmatpush1.bf16.msra.mxu0 0
      %2216 = vmatprep.subr.bf16.mxu0 0
      %2217 = vmatpush1.bf16.msra.mxu0 0
      %2218 = vmatprep.subr.bf16.mxu0 0
      %2219 = vmatpush1.bf16.msra.mxu0 0
      %2220 = vmatprep.subr.bf16.mxu0 0
      %2221 = vmatpush1.bf16.msra.mxu0 0
      %2222 = vmatprep.subr.bf16.mxu0 0
      %2223 = vmatpush1.bf16.msra.mxu0 0
      %2224 = vmatprep.subr.bf16.mxu0 0
      %2225 = vmatpush1.bf16.msra.mxu0 0
      %2226 = vmatprep.subr.bf16.mxu0 0
      %2227 = vmatpush1.bf16.msra.mxu0 0
      %2228 = vmatprep.subr.bf16.mxu0 0
      %2229 = vmatpush1.bf16.msra.mxu0 0
      %2230 = vmatprep.subr.bf16.mxu0 0
      %2231 = vmatpush1.bf16.msra.mxu0 0
      %2232 = vmatprep.subr.bf16.mxu0 0
      %2233 = vmatpush1.bf16.msra.mxu0 0
      %2234 = vmatprep.subr.bf16.mxu0 0
      %2235 = vmatpush1.bf16.msra.mxu0 0
      %2236 = vmatprep.subr.bf16.mxu0 0
      %2237 = vmatpush1.bf16.msra.mxu0 0
      %2238 = vmatprep.mubr.bf16.mxu0 0
      %2239 = vmatmul.mubr.bf16.gmra.mrb[0].mxu0 %v1153
      %v2240 = vpop.f32.mrb[0].mxu0
      %v2241 = vadd.f32 %v2192, %v2240
      %v2242 = vpop.f32.mrb[0].mxu0
      %v2243 = vpop.f32.mrb[0].mxu0
      %v2244 = vpop.f32.mrb[0].mxu0
      %2245 = vdwg.mxu0
      %v2247 = vlaneseq
      %v2248 = vshrl.u32 %v2247, 7
      %v2249 = vsub.s32 0, %v2248
      %v2250 = vrot.slane %v1128, %v2249
      %v2256 = vunpack.c.l.b16 %v1121
      %v2257 = vunpack.c.l.b16 %v1122
      %v2258 = vunpack.c.l.b16 %v1123
      %v2259 = vunpack.c.l.b16 %v1124
      %v2260 = vpack.c.b16 %v2257, %v2256
      %v2261 = vpack.c.b16 %v2259, %v2258
      %2264 = vmatprep.subr.bf16.mxu0 0
      %2265 = vmatpush1.bf16.msra.mxu0 %v2260
      %2266 = vmatprep.subr.bf16.mxu0 0
      %2267 = vmatpush1.bf16.msra.mxu0 %v2261
      %2268 = vmatprep.subr.bf16.mxu0 0
      %2269 = vmatpush1.bf16.msra.mxu0 0
      %2270 = vmatprep.subr.bf16.mxu0 0
      %2271 = vmatpush1.bf16.msra.mxu0 0
      %2272 = vmatprep.subr.bf16.mxu0 0
      %2273 = vmatpush1.bf16.msra.mxu0 0
      %2274 = vmatprep.subr.bf16.mxu0 0
      %2275 = vmatpush1.bf16.msra.mxu0 0
      %2276 = vmatprep.subr.bf16.mxu0 0
      %2277 = vmatpush1.bf16.msra.mxu0 0
      %2278 = vmatprep.subr.bf16.mxu0 0
      %2279 = vmatpush1.bf16.msra.mxu0 0
      %2280 = vmatprep.subr.bf16.mxu0 0
      %2281 = vmatpush1.bf16.msra.mxu0 0
      %2282 = vmatprep.subr.bf16.mxu0 0
      %2283 = vmatpush1.bf16.msra.mxu0 0
      %2284 = vmatprep.subr.bf16.mxu0 0
      %2285 = vmatpush1.bf16.msra.mxu0 0
      %2286 = vmatprep.subr.bf16.mxu0 0
      %2287 = vmatpush1.bf16.msra.mxu0 0
      %2288 = vmatprep.subr.bf16.mxu0 0
      %2289 = vmatpush1.bf16.msra.mxu0 0
      %2290 = vmatprep.subr.bf16.mxu0 0
      %2291 = vmatpush1.bf16.msra.mxu0 0
      %2292 = vmatprep.subr.bf16.mxu0 0
      %2293 = vmatpush1.bf16.msra.mxu0 0
      %2294 = vmatprep.subr.bf16.mxu0 0
      %2295 = vmatpush1.bf16.msra.mxu0 0
      %2296 = vmatprep.mubr.bf16.mxu0 0
      %2297 = vmatmul.mubr.bf16.gmra.mrb[0].mxu0 %v1153
      %v2298 = vpop.f32.mrb[0].mxu0
      %v2299 = vadd.f32 %v2250, %v2298
      %v2300 = vpop.f32.mrb[0].mxu0
      %v2301 = vpop.f32.mrb[0].mxu0
      %v2302 = vpop.f32.mrb[0].mxu0
      %2303 = vdwg.mxu0
      %v2304 = vpack.c.bf16 %v2183, %v2183
      %v2305 = vpack.c.bf16 %v2241, %v2241
      %v2307 = vsel %vm1319, %v2304, 0
      %v2310 = vsel %vm1319, %v2305, 0
      %2312 = vmatprep.subr.bf16.mxu0 0
      %2313 = vmatpush1.bf16.xpose.msra.mxu0 %v2310
      %2314 = vmatprep.subr.bf16.mxu0 0
      %2315 = vmatpush1.bf16.xpose.msra.mxu0 0
      %2316 = vmatprep.subr.bf16.mxu0 0
      %2317 = vmatpush1.bf16.xpose.msra.mxu0 0
      %2318 = vmatprep.subr.bf16.mxu0 0
      %2319 = vmatpush1.bf16.xpose.msra.mxu0 0
      %2320 = vmatprep.subr.bf16.mxu0 0
      %2321 = vmatpush1.bf16.xpose.msra.mxu0 0
      %2322 = vmatprep.subr.bf16.mxu0 0
      %2323 = vmatpush1.bf16.xpose.msra.mxu0 0
      %2324 = vmatprep.subr.bf16.mxu0 0
      %2325 = vmatpush1.bf16.xpose.msra.mxu0 0
      %2326 = vmatprep.subr.bf16.mxu0 0
      %2327 = vmatpush1.bf16.xpose.msra.mxu0 0
      %2328 = vmatprep.subr.bf16.mxu0 0
      %2329 = vmatpush1.bf16.xpose.msra.mxu0 0
      %2330 = vmatprep.subr.bf16.mxu0 0
      %2331 = vmatpush1.bf16.xpose.msra.mxu0 0
      %2332 = vmatprep.subr.bf16.mxu0 0
      %2333 = vmatpush1.bf16.xpose.msra.mxu0 0
      %2334 = vmatprep.subr.bf16.mxu0 0
      %2335 = vmatpush1.bf16.xpose.msra.mxu0 0
      %2336 = vmatprep.subr.bf16.mxu0 0
      %2337 = vmatpush1.bf16.xpose.msra.mxu0 0
      %2338 = vmatprep.subr.bf16.mxu0 0
      %2339 = vmatpush1.bf16.xpose.msra.mxu0 0
      %2340 = vmatprep.subr.bf16.mxu0 0
      %2341 = vmatpush1.bf16.xpose.msra.mxu0 0
      %2342 = vmatprep.subr.bf16.mxu0 0
      %2343 = vmatpush1.bf16.xpose.msra.mxu0 0
      %2344 = vmatprep.mubr.bf16.mxu0 0
      %2345 = vmatmul.mubr.bf16.gmra.mrb[0].mxu0 %v2307
      %v2346 = vpop.f32.mrb[0].mxu0
      %v2347 = vadd.f32 %v1317, %v2346
      %v2348 = vpop.f32.mrb[0].mxu0
      %v2349 = vpop.f32.mrb[0].mxu0
      %v2350 = vpop.f32.mrb[0].mxu0
      %2351 = vdwg.mxu0
      %v2352 = vsel %vm1319, %v2347, -inf
      %2353 = vmax.xlane.f32.xlu0 %v2352
      %v2354 = vpop.xlane.xlu0 %2353
      %v2355 = vsub.f32 %v2347, %v2354
      %v2356 = vmul.f32 %v2355, 1.442695
      %v2357 = vpow.pop %v2356
      %v2358 = vsel %vm1319, %v2357, 0.0
      %2359 = vadd.xlane.f32.xlu0 %v2358
      %v2360 = vpop.xlane.xlu0 %2359
      %v2361 = vrcp.pop %v2360
      %v2362 = vmul.f32 %v2357, %v2361
      %v2363 = vpack.c.bf16 %v2362, %v2362
      %v2364 = vpack.c.bf16 %v2299, %v2299
      %v2366 = vsel %vm1319, %v2363, 0
      %v2369 = vsel %vm1382, %v2364, 0
      %2371 = vmatprep.subr.bf16.mxu0 0
      %2372 = vmatpush1.bf16.msra.mxu0 %v2369
      %2373 = vmatprep.subr.bf16.mxu0 0
      %2374 = vmatpush1.bf16.msra.mxu0 0
      %2375 = vmatprep.subr.bf16.mxu0 0
      %2376 = vmatpush1.bf16.msra.mxu0 0
      %2377 = vmatprep.subr.bf16.mxu0 0
      %2378 = vmatpush1.bf16.msra.mxu0 0
      %2379 = vmatprep.subr.bf16.mxu0 0
      %2380 = vmatpush1.bf16.msra.mxu0 0
      %2381 = vmatprep.subr.bf16.mxu0 0
      %2382 = vmatpush1.bf16.msra.mxu0 0
      %2383 = vmatprep.subr.bf16.mxu0 0
      %2384 = vmatpush1.bf16.msra.mxu0 0
      %2385 = vmatprep.subr.bf16.mxu0 0
      %2386 = vmatpush1.bf16.msra.mxu0 0
      %2387 = vmatprep.subr.bf16.mxu0 0
      %2388 = vmatpush1.bf16.msra.mxu0 0
      %2389 = vmatprep.subr.bf16.mxu0 0
      %2390 = vmatpush1.bf16.msra.mxu0 0
      %2391 = vmatprep.subr.bf16.mxu0 0
      %2392 = vmatpush1.bf16.msra.mxu0 0
      %2393 = vmatprep.subr.bf16.mxu0 0
      %2394 = vmatpush1.bf16.msra.mxu0 0
      %2395 = vmatprep.subr.bf16.mxu0 0
      %2396 = vmatpush1.bf16.msra.mxu0 0
      %2397 = vmatprep.subr.bf16.mxu0 0
      %2398 = vmatpush1.bf16.msra.mxu0 0
      %2399 = vmatprep.subr.bf16.mxu0 0
      %2400 = vmatpush1.bf16.msra.mxu0 0
      %2401 = vmatprep.subr.bf16.mxu0 0
      %2402 = vmatpush1.bf16.msra.mxu0 0
      %2403 = vmatprep.mubr.bf16.mxu0 0
      %2404 = vmatmul.mubr.bf16.gmra.mrb[0].mxu0 %v2366
      %v2405 = vpop.f32.mrb[0].mxu0
      %v2406 = vadd.f32 0.0, %v2405
      %v2407 = vpop.f32.mrb[0].mxu0
      %v2408 = vpop.f32.mrb[0].mxu0
      %v2409 = vpop.f32.mrb[0].mxu0
      %2410 = vdwg.mxu0
      %v2411 = vpack.c.bf16 %v2406, %v2406
      %v2413 = vsel %vm1319, %v2411, 0
      %v2416 = vsel %vm1382, %v1132, 0
      %2418 = vmatprep.subr.bf16.mxu0 0
      %2419 = vmatpush1.bf16.msra.mxu0 %v2416
      %2420 = vmatprep.subr.bf16.mxu0 0
      %2421 = vmatpush1.bf16.msra.mxu0 0
      %2422 = vmatprep.subr.bf16.mxu0 0
      %2423 = vmatpush1.bf16.msra.mxu0 0
      %2424 = vmatprep.subr.bf16.mxu0 0
      %2425 = vmatpush1.bf16.msra.mxu0 0
      %2426 = vmatprep.subr.bf16.mxu0 0
      %2427 = vmatpush1.bf16.msra.mxu0 0
      %2428 = vmatprep.subr.bf16.mxu0 0
      %2429 = vmatpush1.bf16.msra.mxu0 0
      %2430 = vmatprep.subr.bf16.mxu0 0
      %2431 = vmatpush1.bf16.msra.mxu0 0
      %2432 = vmatprep.subr.bf16.mxu0 0
      %2433 = vmatpush1.bf16.msra.mxu0 0
      %2434 = vmatprep.subr.bf16.mxu0 0
      %2435 = vmatpush1.bf16.msra.mxu0 0
      %2436 = vmatprep.subr.bf16.mxu0 0
      %2437 = vmatpush1.bf16.msra.mxu0 0
      %2438 = vmatprep.subr.bf16.mxu0 0
      %2439 = vmatpush1.bf16.msra.mxu0 0
      %2440 = vmatprep.subr.bf16.mxu0 0
      %2441 = vmatpush1.bf16.msra.mxu0 0
      %2442 = vmatprep.subr.bf16.mxu0 0
      %2443 = vmatpush1.bf16.msra.mxu0 0
      %2444 = vmatprep.subr.bf16.mxu0 0
      %2445 = vmatpush1.bf16.msra.mxu0 0
      %2446 = vmatprep.subr.bf16.mxu0 0
      %2447 = vmatpush1.bf16.msra.mxu0 0
      %2448 = vmatprep.subr.bf16.mxu0 0
      %2449 = vmatpush1.bf16.msra.mxu0 0
      %2450 = vmatprep.mubr.bf16.mxu0 0
      %2451 = vmatmul.mubr.bf16.gmra.mrb[0].mxu0 %v2413
      %v2452 = vpop.f32.mrb[0].mxu0
      %v2453 = vadd.f32 0.0, %v2452
      %v2454 = vpop.f32.mrb[0].mxu0
      %v2455 = vpop.f32.mrb[0].mxu0
      %v2456 = vpop.f32.mrb[0].mxu0
      %2457 = vdwg.mxu0
      %v2458 = vadd.f32 %v2129, %v2453
      %v2459 = vld [vmem:[%s995] sm:$0x1]
      %v2461 = vlaneseq
      %v2462 = vshrl.u32 %v2461, 7
      %v2463 = vsub.s32 0, %v2462
      %v2464 = vrot.slane %v2459, %v2463
      %v2466 = vadd.f32 %v2458, %v2464
      %v2467 = vadd.f32 %v2466, %v1066
      %v2468 = vld [vmem:[%s998] sm:$0x1]
      %v2469 = vld [vmem:[%s1001] sm:$0x1]
      %v2470 = vsel %vm1151, %v2467, 0.0
      %2471 = vadd.xlane.f32.xlu0 %v2470
      %v2472 = vpop.xlane.xlu0 %2471
      %v2473 = vrcp.pop 32.0
      %v2474 = vmul.f32 %v2472, %v2473
      %v2475 = vsub.f32 %v2467, %v2474
      %v2476 = vmul.f32 %v2475, %v2475
      %v2477 = vsel %vm1151, %v2476, 0.0
      %2478 = vadd.xlane.f32.xlu0 %v2477
      %v2479 = vpop.xlane.xlu0 %2478
      %v2480 = vmul.f32 %v2479, %v2473
      %v2481 = vadd.f32 %v2480, 1e-12
      %v2482 = vrsqrt.pop %v2481
      %v2483 = vmul.f32 %v2475, %v2482
      %v2485 = vlaneseq
      %v2486 = vshrl.u32 %v2485, 7
      %v2487 = vsub.s32 0, %v2486
      %v2488 = vrot.slane %v2468, %v2487
      %v2490 = vmul.f32 %v2483, %v2488
      %v2492 = vlaneseq
      %v2493 = vshrl.u32 %v2492, 7
      %v2494 = vsub.s32 0, %v2493
      %v2495 = vrot.slane %v2469, %v2494
      %v2497 = vadd.f32 %v2490, %v2495
      %v2498 = vpack.c.bf16 %v2497, %v2497
      %v2499 = vld [vmem:[%s1006] sm:$0xf]
      %v2500 = vld [vmem:[%s1006 + $0x4] sm:$0xf]
      %v2501 = vld [vmem:[%s1006 + $0x8] sm:$0xf]
      %v2502 = vld [vmem:[%s1006 + $0xc] sm:$0xf]
      %v2503 = vld [vmem:[%s1009] sm:$0x1]
      %v2505 = vlaneseq
      %v2506 = vshrl.u32 %v2505, 7
      %v2507 = vsub.s32 0, %v2506
      %v2508 = vrot.slane %v2503, %v2507
      %v2514 = vunpack.c.l.b16 %v2499
      %v2515 = vunpack.c.l.b16 %v2500
      %v2516 = vunpack.c.l.b16 %v2501
      %v2517 = vunpack.c.l.b16 %v2502
      %v2518 = vpack.c.b16 %v2515, %v2514
      %v2519 = vpack.c.b16 %v2517, %v2516
      %v2523 = vsel %vm1151, %v2498, 0
      %2525 = vmatprep.subr.bf16.mxu0 0
      %2526 = vmatpush1.bf16.msra.mxu0 %v2518
      %2527 = vmatprep.subr.bf16.mxu0 0
      %2528 = vmatpush1.bf16.msra.mxu0 %v2519
      %2529 = vmatprep.subr.bf16.mxu0 0
      %2530 = vmatpush1.bf16.msra.mxu0 0
      %2531 = vmatprep.subr.bf16.mxu0 0
      %2532 = vmatpush1.bf16.msra.mxu0 0
      %2533 = vmatprep.subr.bf16.mxu0 0
      %2534 = vmatpush1.bf16.msra.mxu0 0
      %2535 = vmatprep.subr.bf16.mxu0 0
      %2536 = vmatpush1.bf16.msra.mxu0 0
      %2537 = vmatprep.subr.bf16.mxu0 0
      %2538 = vmatpush1.bf16.msra.mxu0 0
      %2539 = vmatprep.subr.bf16.mxu0 0
      %2540 = vmatpush1.bf16.msra.mxu0 0
      %2541 = vmatprep.subr.bf16.mxu0 0
      %2542 = vmatpush1.bf16.msra.mxu0 0
      %2543 = vmatprep.subr.bf16.mxu0 0
      %2544 = vmatpush1.bf16.msra.mxu0 0
      %2545 = vmatprep.subr.bf16.mxu0 0
      %2546 = vmatpush1.bf16.msra.mxu0 0
      %2547 = vmatprep.subr.bf16.mxu0 0
      %2548 = vmatpush1.bf16.msra.mxu0 0
      %2549 = vmatprep.subr.bf16.mxu0 0
      %2550 = vmatpush1.bf16.msra.mxu0 0
      %2551 = vmatprep.subr.bf16.mxu0 0
      %2552 = vmatpush1.bf16.msra.mxu0 0
      %2553 = vmatprep.subr.bf16.mxu0 0
      %2554 = vmatpush1.bf16.msra.mxu0 0
      %2555 = vmatprep.subr.bf16.mxu0 0
      %2556 = vmatpush1.bf16.msra.mxu0 0
      %2557 = vmatprep.mubr.bf16.mxu0 0
      %2558 = vmatmul.mubr.bf16.gmra.mrb[0].mxu0 %v2523
      %v2559 = vpop.f32.mrb[0].mxu0
      %v2560 = vadd.f32 %v2508, %v2559
      %v2561 = vpop.f32.mrb[0].mxu0
      %v2562 = vpop.f32.mrb[0].mxu0
      %v2563 = vpop.f32.mrb[0].mxu0
      %2564 = vdwg.mxu0
      %v2565 = vmul.f32 %v2560, 0.5
      %v2566 = vmul.f32 %v2560, 0.044715
      %v2567 = vmul.f32 %v2566, %v2560
      %v2568 = vmul.f32 %v2567, %v2560
      %v2569 = vadd.f32 %v2560, %v2568
      %v2570 = vmul.f32 %v2569, 0.7978846
      %v2571 = vtanh.pop %v2570
      %v2572 = vadd.f32 %v2571, 1.0
      %v2573 = vmul.f32 %v2565, %v2572
      %v2574 = vpack.c.bf16 %v2573, %v2573
      %v2575 = vld [vmem:[%s1014] sm:$0xf]
      %v2576 = vld [vmem:[%s1014 + $0x4] sm:$0xf]
      %v2577 = vld [vmem:[%s1014 + $0x8] sm:$0xf]
      %v2578 = vld [vmem:[%s1014 + $0xc] sm:$0xf]
      %v2579 = vld [vmem:[%s1014 + $0x10] sm:$0xf]
      %v2580 = vld [vmem:[%s1014 + $0x14] sm:$0xf]
      %v2581 = vld [vmem:[%s1014 + $0x18] sm:$0xf]
      %v2582 = vld [vmem:[%s1014 + $0x1c] sm:$0xf]
      %v2583 = vld [vmem:[%s1017] sm:$0x1]
      %v2585 = vlaneseq
      %v2586 = vshrl.u32 %v2585, 7
      %v2587 = vsub.s32 0, %v2586
      %v2588 = vrot.slane %v2583, %v2587
      %v2598 = vunpack.c.l.b16 %v2575
      %v2599 = vunpack.c.l.b16 %v2576
      %v2600 = vunpack.c.l.b16 %v2577
      %v2601 = vunpack.c.l.b16 %v2578
      %v2602 = vunpack.c.l.b16 %v2579
      %v2603 = vunpack.c.l.b16 %v2580
      %v2604 = vunpack.c.l.b16 %v2581
      %v2605 = vunpack.c.l.b16 %v2582
      %v2606 = vpack.c.b16 %v2599, %v2598
      %v2607 = vpack.c.b16 %v2601, %v2600
      %v2608 = vpack.c.b16 %v2603, %v2602
      %v2609 = vpack.c.b16 %v2605, %v2604
      %vm2614 = vcmask 523264
      %v2616 = vsel %vm2614, %v2574, 0
      %2618 = vmatprep.subr.bf16.mxu0 0
      %2619 = vmatpush1.bf16.msra.mxu0 %v2606
      %2620 = vmatprep.subr.bf16.mxu0 0
      %2621 = vmatpush1.bf16.msra.mxu0 %v2607
      %2622 = vmatprep.subr.bf16.mxu0 0
      %2623 = vmatpush1.bf16.msra.mxu0 %v2608
      %2624 = vmatprep.subr.bf16.mxu0 0
      %2625 = vmatpush1.bf16.msra.mxu0 %v2609
      %2626 = vmatprep.subr.bf16.mxu0 0
      %2627 = vmatpush1.bf16.msra.mxu0 0
      %2628 = vmatprep.subr.bf16.mxu0 0
      %2629 = vmatpush1.bf16.msra.mxu0 0
      %2630 = vmatprep.subr.bf16.mxu0 0
      %2631 = vmatpush1.bf16.msra.mxu0 0
      %2632 = vmatprep.subr.bf16.mxu0 0
      %2633 = vmatpush1.bf16.msra.mxu0 0
      %2634 = vmatprep.subr.bf16.mxu0 0
      %2635 = vmatpush1.bf16.msra.mxu0 0
      %2636 = vmatprep.subr.bf16.mxu0 0
      %2637 = vmatpush1.bf16.msra.mxu0 0
      %2638 = vmatprep.subr.bf16.mxu0 0
      %2639 = vmatpush1.bf16.msra.mxu0 0
      %2640 = vmatprep.subr.bf16.mxu0 0
      %2641 = vmatpush1.bf16.msra.mxu0 0
      %2642 = vmatprep.subr.bf16.mxu0 0
      %2643 = vmatpush1.bf16.msra.mxu0 0
      %2644 = vmatprep.subr.bf16.mxu0 0
      %2645 = vmatpush1.bf16.msra.mxu0 0
      %2646 = vmatprep.subr.bf16.mxu0 0
      %2647 = vmatpush1.bf16.msra.mxu0 0
      %2648 = vmatprep.subr.bf16.mxu0 0
      %2649 = vmatpush1.bf16.msra.mxu0 0
      %2650 = vmatprep.mubr.bf16.mxu0 0
      %2651 = vmatmul.mubr.bf16.gmra.mrb[0].mxu0 %v2616
      %v2652 = vpop.f32.mrb[0].mxu0
      %v2653 = vadd.f32 %v2588, %v2652
      %v2654 = vpop.f32.mrb[0].mxu0
      %v2655 = vpop.f32.mrb[0].mxu0
      %v2656 = vpop.f32.mrb[0].mxu0
      %2657 = vdwg.mxu0
      %v2658 = vadd.f32 %v2653, %v2497
      %v2659 = vld [vmem:[%s1020] sm:$0x1]
      %v2660 = vld [vmem:[%s1023] sm:$0x1]
      %v2661 = vsel %vm1151, %v2658, 0.0
      %2662 = vadd.xlane.f32.xlu0 %v2661
      %v2663 = vpop.xlane.xlu0 %2662
      %v2664 = vmul.f32 %v2663, %v2473
      %v2665 = vsub.f32 %v2658, %v2664
      %v2666 = vmul.f32 %v2665, %v2665
      %v2667 = vsel %vm1151, %v2666, 0.0
      %2668 = vadd.xlane.f32.xlu0 %v2667
      %v2669 = vpop.xlane.xlu0 %2668
      %v2670 = vmul.f32 %v2669, %v2473
      %v2671 = vadd.f32 %v2670, 1e-12
      %v2672 = vrsqrt.pop %v2671
      %v2673 = vmul.f32 %v2665, %v2672
      %v2675 = vlaneseq
      %v2676 = vshrl.u32 %v2675, 7
      %v2677 = vsub.s32 0, %v2676
      %v2678 = vrot.slane %v2659, %v2677
      %v2680 = vmul.f32 %v2673, %v2678
      %v2682 = vlaneseq
      %v2683 = vshrl.u32 %v2682, 7
      %v2684 = vsub.s32 0, %v2683
      %v2685 = vrot.slane %v2660, %v2684
      %v2687 = vadd.f32 %v2680, %v2685
      %2688 = vst.msk [vmem:[#allocation2] sm:$0xff] %vm1151, %v2687
      %p2689 = scmp.eq.s32.totalorder %s40, 1
      // Predicated region
      $region121: #{model_forward.1} parent=115 // pred_check
        %p2690 = pneg %p2689
      $region122: #{model_forward.1} parent=115 // pred_check_branch
        %2692 = sbr.rel (%p2690) target = $region124
      $region123: #{model_forward.1} parent=115 // pred_region
        %v2693 = vpack.c.bf16 %v2687, %v2687
        %v2694 = vld [vmem:[%s20] sm:$0xf]
        %v2695 = vld [vmem:[%s20 + $0x4] sm:$0xf]
        %v2696 = vld [vmem:[%s20 + $0x8] sm:$0xf]
        %v2697 = vld [vmem:[%s20 + $0xc] sm:$0xf]
        %v2698 = vld [vmem:[%s21] sm:$0x1]
        %v2703 = vunpack.c.l.b16 %v2694
        %v2704 = vunpack.c.l.b16 %v2695
        %v2705 = vunpack.c.l.b16 %v2696
        %v2706 = vunpack.c.l.b16 %v2697
        %v2707 = vpack.c.b16 %v2704, %v2703
        %v2708 = vpack.c.b16 %v2706, %v2705
        %v2712 = vsel %vm1151, %v2693, 0
        %2714 = vmatprep.subr.bf16.mxu0 0
        %2715 = vmatpush1.bf16.msra.mxu0 %v2707
        %2716 = vmatprep.subr.bf16.mxu0 0
        %2717 = vmatpush1.bf16.msra.mxu0 %v2708
        %2718 = vmatprep.subr.bf16.mxu0 0
        %2719 = vmatpush1.bf16.msra.mxu0 0
        %2720 = vmatprep.subr.bf16.mxu0 0
        %2721 = vmatpush1.bf16.msra.mxu0 0
        %2722 = vmatprep.subr.bf16.mxu0 0
        %2723 = vmatpush1.bf16.msra.mxu0 0
        %2724 = vmatprep.subr.bf16.mxu0 0
        %2725 = vmatpush1.bf16.msra.mxu0 0
        %2726 = vmatprep.subr.bf16.mxu0 0
        %2727 = vmatpush1.bf16.msra.mxu0 0
        %2728 = vmatprep.subr.bf16.mxu0 0
        %2729 = vmatpush1.bf16.msra.mxu0 0
        %2730 = vmatprep.subr.bf16.mxu0 0
        %2731 = vmatpush1.bf16.msra.mxu0 0
        %2732 = vmatprep.subr.bf16.mxu0 0
        %2733 = vmatpush1.bf16.msra.mxu0 0
        %2734 = vmatprep.subr.bf16.mxu0 0
        %2735 = vmatpush1.bf16.msra.mxu0 0
        %2736 = vmatprep.subr.bf16.mxu0 0
        %2737 = vmatpush1.bf16.msra.mxu0 0
        %2738 = vmatprep.subr.bf16.mxu0 0
        %2739 = vmatpush1.bf16.msra.mxu0 0
        %2740 = vmatprep.subr.bf16.mxu0 0
        %2741 = vmatpush1.bf16.msra.mxu0 0
        %2742 = vmatprep.subr.bf16.mxu0 0
        %2743 = vmatpush1.bf16.msra.mxu0 0
        %2744 = vmatprep.subr.bf16.mxu0 0
        %2745 = vmatpush1.bf16.msra.mxu0 0
        %2746 = vmatprep.mubr.bf16.mxu0 0
        %2747 = vmatmul.mubr.bf16.gmra.mrb[0].mxu0 %v2712
        %v2748 = vpop.f32.mrb[0].mxu0
        %v2749 = vadd.f32 %v2698, %v2748
        %v2750 = vpop.f32.mrb[0].mxu0
        %v2751 = vpop.f32.mrb[0].mxu0
        %v2752 = vpop.f32.mrb[0].mxu0
        %2753 = vdwg.mxu0
        %v2754 = vtanh.pop %v2749
        %v2755 = vpack.c.bf16 %v2754, %v2754
        %v2756 = vld [vmem:[%s22] sm:$0xf]
        %v2757 = vld [vmem:[%s22 + $0x4] sm:$0xf]
        %v2758 = vld [vmem:[%s22 + $0x8] sm:$0xf]
        %v2759 = vld [vmem:[%s22 + $0xc] sm:$0xf]
        %v2760 = vld [vmem:[%s23] sm:$0x1]
        %v2765 = vunpack.c.l.b16 %v2756
        %v2766 = vunpack.c.l.b16 %v2757
        %v2767 = vunpack.c.l.b16 %v2758
        %v2768 = vunpack.c.l.b16 %v2759
        %v2769 = vpack.c.b16 %v2766, %v2765
        %v2770 = vpack.c.b16 %v2768, %v2767
        %v2774 = vsel %vm1151, %v2755, 0
        %2776 = vmatprep.subr.bf16.mxu0 0
        %2777 = vmatpush1.bf16.msra.mxu0 %v2769
        %2778 = vmatprep.subr.bf16.mxu0 0
        %2779 = vmatpush1.bf16.msra.mxu0 %v2770
        %2780 = vmatprep.subr.bf16.mxu0 0
        %2781 = vmatpush1.bf16.msra.mxu0 0
        %2782 = vmatprep.subr.bf16.mxu0 0
        %2783 = vmatpush1.bf16.msra.mxu0 0
        %2784 = vmatprep.subr.bf16.mxu0 0
        %2785 = vmatpush1.bf16.msra.mxu0 0
        %2786 = vmatprep.subr.bf16.mxu0 0
        %2787 = vmatpush1.bf16.msra.mxu0 0
        %2788 = vmatprep.subr.bf16.mxu0 0
        %2789 = vmatpush1.bf16.msra.mxu0 0
        %2790 = vmatprep.subr.bf16.mxu0 0
        %2791 = vmatpush1.bf16.msra.mxu0 0
        %2792 = vmatprep.subr.bf16.mxu0 0
        %2793 = vmatpush1.bf16.msra.mxu0 0
        %2794 = vmatprep.subr.bf16.mxu0 0
        %2795 = vmatpush1.bf16.msra.mxu0 0
        %2796 = vmatprep.subr.bf16.mxu0 0
        %2797 = vmatpush1.bf16.msra.mxu0 0
        %2798 = vmatprep.subr.bf16.mxu0 0
        %2799 = vmatpush1.bf16.msra.mxu0 0
        %2800 = vmatprep.subr.bf16.mxu0 0
        %2801 = vmatpush1.bf16.msra.mxu0 0
        %2802 = vmatprep.subr.bf16.mxu0 0
        %2803 = vmatpush1.bf16.msra.mxu0 0
        %2804 = vmatprep.subr.bf16.mxu0 0
        %2805 = vmatpush1.bf16.msra.mxu0 0
        %2806 = vmatprep.subr.bf16.mxu0 0
        %2807 = vmatpush1.bf16.msra.mxu0 0
        %2808 = vmatprep.mubr.bf16.mxu0 0
        %2809 = vmatmul.mubr.bf16.gmra.mrb[0].mxu0 %v2774
        %v2810 = vpop.f32.mrb[0].mxu0
        %v2811 = vadd.f32 %v2760, %v2810
        %v2812 = vpop.f32.mrb[0].mxu0
        %v2813 = vpop.f32.mrb[0].mxu0
        %v2814 = vpop.f32.mrb[0].mxu0
        %2815 = vdwg.mxu0
        %v2816 = vlaneseq
        %v2817 = vshrl.u32 %v2816, 7
        %v2818 = vsub.s32 0, %v2817
        %v2819 = vrot.slane %v2811, %v2818
        %2820 = vst [vmem:[%s1027] sm:$0xff] %v2819
      $region124: #{model_forward.1} parent=115 // pred_fallthru
        _
      %p2821 = scmp.lt.s32.totalorder %s39, 1
      %s2822 = scalar_select %p2821, %s39, 1
      %s2823 = smul.addr %s2822, 8
      %s2824 = scalar_lea.vmem %s24, %s2823
      // Predicated region
      $region125: #{model_forward.1} parent=115 // pred_check
        %p2825 = pneg %p659
      $region126: #{model_forward.1} parent=115 // pred_check_branch
        %2827 = sbr.rel (%p2825) target = $region128
      $region127: #{model_forward.1} parent=115 // pred_region
        _
      $region128: #{model_forward.1} parent=115 // pred_fallthru
        _
    $region116: #{model_forward.1} parent=5 // pred_fallthru
      _
    %p2828 = scmp.le.s32.totalorder 2, %s30
    // Predicated region
    $region129: #{model_forward.1} parent=5 // pred_check
      %p2829 = pneg %p2828
    $region130: #{model_forward.1} parent=5 // pred_check_branch
      %2831 = sbr.rel (%p2829) target = $region132
    $region131: #{model_forward.1} parent=5 // pred_region
      %s2832 = ssub.s32 %s30, 2
      // Predicated region
      $region133: #{model_forward.1} parent=131 // pred_check
        %p2833 = pneg %p665
      $region134: #{model_forward.1} parent=131 // pred_check_branch
        %2835 = sbr.rel (%p2833) target = $region136
      $region135: #{model_forward.1} parent=131 // pred_region
        %p2836 = scmp.lt.s32.totalorder %s41, 1
        %s2837 = scalar_select %p2836, %s41, 1
        %s2838 = smul.addr %s2837, 8
        %s2839 = scalar_lea.vmem %s24, %s2838
      $region136: #{model_forward.1} parent=131 // pred_fallthru
        _
    $region132: #{model_forward.1} parent=5 // pred_fallthru
      _
  $region6: #{model_forward.1} parent=0 // loop_footer
    %s34 = sadd.s32 1, %s30
  $region7: #{model_forward.1} parent=0 // loop_footer_branch
    %29 = sbr.rel target = $region3
  $region8: #{model_forward.1} parent=0 // loop_exit
    _

</llo_original>
